<compile_context>
chip_gen: v5e
topology: v5e:2x2
jax: 0.10.0
libtpu: 0.0.40
codegen_flags: <defaults>
</compile_context>

<pallas_src>
import functools
import math

import jax
import jax.numpy as jnp
from jax.experimental import pallas as pl
from jax.experimental.pallas import tpu as pltpu

_LANE = 128        # lane (last-dim) tile
_SUBLANE = 8       # sublane (second-minor) tile
_TILE_V_TARGET = 2048   # v5e-safe: 2 bufs x H_pad*2048*2B fits 16 MiB scoped VMEM
_NEG_BIG = -3.0e38      # init for the online-softmax running max (finite, no inf)
_MASK_VAL = -1e30       # baked into padded b_out lanes


def _rup(n, m):
    return ((n + m - 1) // m) * m


def _pad_to(x, shape):
    return jnp.pad(x, [(0, t - s) for s, t in zip(x.shape, shape)])


def _pick_tile_v(v_pad, target=_TILE_V_TARGET):
    """Largest multiple-of-128 divisor of v_pad that is <= target."""
    for cand in range(min(v_pad, target) // _LANE, 0, -1):
        t = cand * _LANE
        if v_pad % t == 0:
            return t
    return _LANE


def _buf_bytes(shape, itemsize):
    """Conservative VMEM bytes for one pipeline buffer of a block."""
    s = list(shape)
    s[-1] = _rup(s[-1], _LANE)
    if len(s) >= 2:
        s[-2] = _rup(s[-2], 2 * _SUBLANE)    # covers bf16 sublane packing too
    return math.prod(s) * itemsize


# ----------------------------------------------------------------------------
# Fused decode-step kernel
# ----------------------------------------------------------------------------

def _make_kernel(*, H_pad, L, init_from_image):
    f32, bf16 = jnp.float32, jnp.bfloat16

    def kernel(*refs):
        idx = 0
        x_emb_ref = refs[idx]; idx += 1
        if init_from_image:
            img_ref, w_i2h_ref, b_i2h_ref = refs[idx:idx + 3]; idx += 3
            hid_in_ref = None
        else:
            hid_in_ref = refs[idx]; idx += 1
        layer_refs = []
        for _ in range(L):
            layer_refs.append(refs[idx:idx + 6]); idx += 6
        w_out_ref, b_out_ref = refs[idx:idx + 2]; idx += 2
        logits_ref, lse_ref, hid_ref = refs[idx:idx + 3]; idx += 3
        x_sc, m_sc, l_sc = refs[idx:idx + 3]

        j = pl.program_id(0)

        # ---- recurrent part: runs once, on the first vocab tile -------------
        @pl.when(j == 0)
        def _():
            if init_from_image:
                z = jnp.dot(img_ref[...], w_i2h_ref[...],
                            preferred_element_type=f32) + b_i2h_ref[...]
                # ELU(alpha=1): exp only on the non-positive branch
                i2h = jnp.where(z > 0.0, z, jnp.exp(jnp.minimum(z, 0.0)) - 1.0)
                h_prev_layers = [i2h] * L
            else:
                # Load every previous layer state BEFORE any hid_ref write so
                # the in-place HBM aliasing of the hidden buffer stays safe.
                h_prev_layers = [hid_in_ref[l] for l in range(L)]

            x_cur = x_emb_ref[...]                           # (B_pad, E_pad) bf16
            for l in range(L):
                (w_rz_ref, b_rz_ref, w_nih_ref, w_nhh_ref,
                 b_nih_ref, b_nhh_ref) = layer_refs[l]
                h_prev = h_prev_layers[l]                    # (B_pad, H_pad) f32
                h_bf = h_prev.astype(bf16)
                # Fused r|z gates: K = in_pad + H_pad (fills the 256-deep MXU
                # on v6e/v7x); gate blocks are 128-lane aligned.
                xh = jnp.concatenate([x_cur, h_bf], axis=-1)
                g_rz = jnp.dot(xh, w_rz_ref[...],
                               preferred_element_type=f32) + b_rz_ref[...]
                r = jax.nn.sigmoid(g_rz[:, :H_pad])
                u = jax.nn.sigmoid(g_rz[:, H_pad:])
                i_n = jnp.dot(x_cur, w_nih_ref[...],
                              preferred_element_type=f32) + b_nih_ref[...]
                h_n = jnp.dot(h_bf, w_nhh_ref[...],
                              preferred_element_type=f32) + b_nhh_ref[...]
                n = jnp.tanh(i_n + r * h_n)
                h_new = (1.0 - u) * n + u * h_prev           # f32
                hid_ref[l] = h_new                           # new hidden, layer l
                x_cur = h_new.astype(bf16)
            x_sc[...] = x_cur                                # last-layer output
            m_sc[...] = jnp.full(m_sc.shape, _NEG_BIG, f32)
            l_sc[...] = jnp.zeros(l_sc.shape, f32)

        # ---- output-projection vocab tile + online logsumexp (every tile) ---
        logits = jnp.dot(x_sc[...], w_out_ref[...],
                         preferred_element_type=f32) + b_out_ref[...]
        logits_ref[...] = logits
        m_prev = m_sc[...]
        m_new = jnp.maximum(m_prev, jnp.max(logits, axis=-1, keepdims=True))
        l_sc[...] = (l_sc[...] * jnp.exp(m_prev - m_new)
                     + jnp.sum(jnp.exp(logits - m_new), axis=-1, keepdims=True))
        m_sc[...] = m_new

        @pl.when(j == pl.num_programs(0) - 1)
        def _():
            lse_ref[...] = m_sc[...] + jnp.log(l_sc[...])

    return kernel


@functools.lru_cache(maxsize=None)
def _build_decode_fn(B_pad, IMG_pad, E_pad, H_pad, V_pad, L, init_from_image):
    tile_v = _pick_tile_v(V_pad)
    n_tiles = V_pad // tile_v
    f32, bf16 = jnp.float32, jnp.bfloat16

    def full_spec(shape):
        nd = len(shape)
        return pl.BlockSpec(shape, lambda j, _nd=nd: (0,) * _nd)

    in_specs = [full_spec((B_pad, E_pad))]
    in_blocks = [((B_pad, E_pad), 2)]
    if init_from_image:
        for shp, isz in (((B_pad, IMG_pad), 2), ((IMG_pad, H_pad), 2),
                         ((1, H_pad), 4)):
            in_specs.append(full_spec(shp)); in_blocks.append((shp, isz))
    else:
        shp = (L, B_pad, H_pad)
        in_specs.append(full_spec(shp)); in_blocks.append((shp, 4))
    for l in range(L):
        in_pad = E_pad if l == 0 else H_pad
        for shp, isz in (((in_pad + H_pad, 2 * H_pad), 2),   # fused r|z weight
                         ((1, 2 * H_pad), 4),                 # pre-summed r|z bias
                         ((in_pad, H_pad), 2),                # n-gate (input)
                         ((H_pad, H_pad), 2),                 # n-gate (hidden)
                         ((1, H_pad), 4),
                         ((1, H_pad), 4)):
            in_specs.append(full_spec(shp)); in_blocks.append((shp, isz))
    in_specs.append(pl.BlockSpec((H_pad, tile_v), lambda j: (0, j)))   # w_out
    in_blocks.append(((H_pad, tile_v), 2))
    in_specs.append(pl.BlockSpec((1, tile_v), lambda j: (0, j)))       # b_out
    in_blocks.append(((1, tile_v), 4))

    out_specs = (pl.BlockSpec((B_pad, tile_v), lambda j: (0, j)),      # logits
                 pl.BlockSpec((B_pad, 1), lambda j: (0, 0)),           # lse
                 pl.BlockSpec((L, B_pad, H_pad), lambda j: (0, 0, 0)))  # hidden
    out_blocks = [((B_pad, tile_v), 4), ((B_pad, 1), 4), ((L, B_pad, H_pad), 4)]
    out_shape = (jax.ShapeDtypeStruct((B_pad, V_pad), f32),
                 jax.ShapeDtypeStruct((B_pad, 1), f32),
                 jax.ShapeDtypeStruct((L, B_pad, H_pad), f32))

    scratch = [pltpu.VMEM((B_pad, H_pad), bf16),   # last-layer output (bf16)
               pltpu.VMEM((B_pad, 1), f32),        # running max
               pltpu.VMEM((B_pad, 1), f32)]        # running sum
    scratch_bytes = B_pad * H_pad * 2 + 2 * B_pad * _LANE * 4

    # Explicit VMEM budget (double-buffer every block + scratch + headroom),
    # capped at the v7x 64 MiB physical ceiling.
    resident = sum(2 * _buf_bytes(s, isz) for s, isz in in_blocks + out_blocks)
    vmem_limit = min(int(resident * 1.5) + scratch_bytes + (2 << 20), 64 << 20)

    # Cost hint so XLA schedules surrounding ops (sampling/argmax, hidden
    # copies) sensibly around the custom call.
    flops = 2 * B_pad * H_pad * V_pad
    transcend = B_pad * V_pad + B_pad
    bytes_accessed = (sum(math.prod(s) * isz for s, isz in in_blocks[:-2])
                      + H_pad * V_pad * 2 + V_pad * 4
                      + B_pad * V_pad * 4 + B_pad * 4 + L * B_pad * H_pad * 4)
    for l in range(L):
        in_pad = E_pad if l == 0 else H_pad
        flops += 2 * B_pad * ((in_pad + H_pad) * 2 * H_pad
                              + in_pad * H_pad + H_pad * H_pad)
        transcend += 3 * B_pad * H_pad
    if init_from_image:
        flops += 2 * B_pad * IMG_pad * H_pad
        transcend += B_pad * H_pad

    kernel = _make_kernel(H_pad=H_pad, L=L, init_from_image=init_from_image)
    call = pl.pallas_call(
        kernel,
        out_shape=out_shape,
        grid_spec=pltpu.PrefetchScalarGridSpec(
            num_scalar_prefetch=0,
            grid=(n_tiles,),
            in_specs=in_specs,
            out_specs=out_specs,
            scratch_shapes=scratch),
        compiler_params=pltpu.CompilerParams(
            # The vocab axis carries the online-LSE accumulator -> "arbitrary".
            dimension_semantics=("arbitrary",),
            vmem_limit_bytes=vmem_limit),
        cost_estimate=pl.CostEstimate(flops=flops, transcendentals=transcend,
                                      bytes_accessed=bytes_accessed),
        input_output_aliases={} if init_from_image else {1: 2},
    )
    if init_from_image:
        return jax.jit(call)
    return jax.jit(call, donate_argnums=(1,))    # makes the hidden aliasing real


# ----------------------------------------------------------------------------
# Parameters: logical init (mirrors the PyTorch module) + packed/padded form
# ----------------------------------------------------------------------------

def init_params(key, img_emb_size, n_tokens, embedding_dim, hidden_size,
                num_layers, padding_idx=1):
    """Logical (PyTorch-shaped, pre-transposed) f32 parameters."""
    ks = jax.random.split(key, 6 + 4 * num_layers)
    params = {}

    std = (2.0 / (img_emb_size + hidden_size)) ** 0.5           # Xavier normal
    params["w_i2h"] = std * jax.random.normal(
        ks[0], (img_emb_size, hidden_size), jnp.float32)
    params["b_i2h"] = jnp.zeros((1, hidden_size), jnp.float32)

    emb = jax.random.normal(ks[1], (n_tokens, embedding_dim), jnp.float32)
    params["embedding"] = emb.at[padding_idx].set(0.0)

    bound = 1.0 / (hidden_size ** 0.5)
    gru = []
    for l in range(num_layers):
        in_dim = embedding_dim if l == 0 else hidden_size
        k0, k1, k2, k3 = ks[2 + 4 * l: 6 + 4 * l]
        w_ih = jax.random.uniform(k0, (in_dim, 3 * hidden_size), jnp.float32,
                                  -bound, bound)
        w_hh = jax.random.uniform(k1, (hidden_size, 3 * hidden_size),
                                  jnp.float32, -bound, bound)
        b_ih = jax.random.uniform(k2, (1, 3 * hidden_size), jnp.float32,
                                  -bound, bound)
        b_hh = jax.random.uniform(k3, (1, 3 * hidden_size), jnp.float32,
                                  -bound, bound)
        gru.append((w_ih, w_hh, b_ih, b_hh))
    params["gru"] = gru

    std = (2.0 / (hidden_size + n_tokens)) ** 0.5                # Xavier normal
    params["w_out"] = std * jax.random.normal(
        ks[-1], (hidden_size, n_tokens), jnp.float32)
    params["b_out"] = jnp.zeros((1, n_tokens), jnp.float32)
    return params


def pack_params(params, *, img_emb_size, n_tokens, embedding_dim, hidden_size,
                num_layers):
    """(8,128)-padded, gate-aligned, bf16 weights for the fused kernel."""
    IMG_pad = _rup(img_emb_size, _LANE)
    E_pad = _rup(embedding_dim, _LANE)
    H_pad = _rup(hidden_size, _LANE)
    V_pad = _rup(n_tokens, _LANE)
    H = hidden_size
    bf16, f32 = jnp.bfloat16, jnp.float32

    layers = []
    for l in range(num_layers):
        w_ih, w_hh, b_ih, b_hh = params["gru"][l]
        in_pad = E_pad if l == 0 else H_pad
        wih = [w_ih[:, g * H:(g + 1) * H] for g in range(3)]    # r, z, n
        whh = [w_hh[:, g * H:(g + 1) * H] for g in range(3)]
        bih = [b_ih[:, g * H:(g + 1) * H] for g in range(3)]
        bhh = [b_hh[:, g * H:(g + 1) * H] for g in range(3)]
        # Fused r|z weight: rows = [x ; h], cols = [r | z] (each gate padded to
        # H_pad so in-kernel slices fall on 128-lane boundaries).
        w_rz = jnp.concatenate([
            jnp.concatenate([_pad_to(wih[0], (in_pad, H_pad)),
                             _pad_to(wih[1], (in_pad, H_pad))], axis=1),
            jnp.concatenate([_pad_to(whh[0], (H_pad, H_pad)),
                             _pad_to(whh[1], (H_pad, H_pad))], axis=1),
        ], axis=0).astype(bf16)
        b_rz = jnp.concatenate([_pad_to(bih[0] + bhh[0], (1, H_pad)),
                                _pad_to(bih[1] + bhh[1], (1, H_pad))],
                               axis=1).astype(f32)
        layers.append(dict(
            w_rz=w_rz,
            b_rz=b_rz,
            w_n_ih=_pad_to(wih[2], (in_pad, H_pad)).astype(bf16),
            w_n_hh=_pad_to(whh[2], (H_pad, H_pad)).astype(bf16),
            b_n_ih=_pad_to(bih[2], (1, H_pad)).astype(f32),
            b_n_hh=_pad_to(bhh[2], (1, H_pad)).astype(f32),
        ))

    # Vocab-padding mask baked into b_out; padded w_out columns are zero so the
    # padded logits equal exactly the masked bias (-1e30 -> exp underflows to 0).
    b_out = _pad_to(params["b_out"], (1, V_pad)).astype(f32)
    if V_pad > n_tokens:
        col = jnp.arange(V_pad)[None, :]
        b_out = jnp.where(col < n_tokens, b_out, _MASK_VAL)

    return {
        "dims": dict(IMG=img_emb_size, IMG_pad=IMG_pad, E=embedding_dim,
                     E_pad=E_pad, H=hidden_size, H_pad=H_pad,
                     V=n_tokens, V_pad=V_pad, L=num_layers),
        "w_i2h": _pad_to(params["w_i2h"], (IMG_pad, H_pad)).astype(bf16),
        "b_i2h": _pad_to(params["b_i2h"], (1, H_pad)).astype(f32),
        # bf16 (V, E_pad) table: rows gathered with plain XLA in the wrapper so
        # the table never sits in VMEM and is not re-DMA'd per decode step.
        "embedding": _pad_to(params["embedding"], (n_tokens, E_pad)).astype(bf16),
        "layers": layers,
        "w_out": _pad_to(params["w_out"], (H_pad, V_pad)).astype(bf16),
        "b_out": b_out,
    }


# ----------------------------------------------------------------------------
# Descriptor forward (eval mode: dropout layers are identity)
# ----------------------------------------------------------------------------

def descriptor_forward(packed, token_idx, hidden=None, image_embeddings=None):
    d = packed["dims"]
    B = token_idx.shape[0]
    # NOTE: per-step cost is nearly flat in B up to the MXU M tile; callers
    # should pack beams / concurrent sequences up to 64-128 rows per call.
    B_pad = _rup(max(B, _SUBLANE), _SUBLANE)
    tok = jnp.zeros((B_pad,), jnp.int32).at[:B].set(token_idx.astype(jnp.int32))
    x_emb = jnp.take(packed["embedding"], tok, axis=0)    # XLA gather, bf16

    init_from_image = image_embeddings is not None and hidden is None
    fn = _build_decode_fn(B_pad, d["IMG_pad"], d["E_pad"], d["H_pad"],
                          d["V_pad"], d["L"], init_from_image)

    layer_args = []
    for lw in packed["layers"]:
        layer_args += [lw["w_rz"], lw["b_rz"], lw["w_n_ih"], lw["w_n_hh"],
                       lw["b_n_ih"], lw["b_n_hh"]]

    if init_from_image:
        img_pad = _pad_to(image_embeddings.astype(jnp.float32),
                          (B_pad, d["IMG_pad"])).astype(jnp.bfloat16)
        logits_p, lse_p, hid_p = fn(x_emb, img_pad,
                                    packed["w_i2h"], packed["b_i2h"],
                                    *layer_args,
                                    packed["w_out"], packed["b_out"])
    else:
        hid_pad = _pad_to(hidden.astype(jnp.float32),
                          (d["L"], B_pad, d["H_pad"]))
        logits_p, lse_p, hid_p = fn(x_emb, hid_pad, *layer_args,
                                    packed["w_out"], packed["b_out"])
    out = logits_p[:B, :d["V"]] - lse_p[:B]               # log-softmax finalize
    return out, hid_p[:, :B, :d["H"]]


# ----------------------------------------------------------------------------
# Pure-JAX reference (same bf16-operand / f32-accumulate numerics)
# ----------------------------------------------------------------------------

def _bf(w):
    return w.astype(jnp.bfloat16).astype(jnp.float32)


def descriptor_forward_ref(params, token_idx, hidden=None,
                           image_embeddings=None, num_layers=2):
    H = params["gru"][0][1].shape[0]
    if image_embeddings is not None and hidden is None:
        z = _bf(image_embeddings) @ _bf(params["w_i2h"]) + params["b_i2h"]
        i2h = jnp.where(z > 0.0, z, jnp.exp(jnp.minimum(z, 0.0)) - 1.0)
        hidden = jnp.broadcast_to(i2h[None], (num_layers,) + i2h.shape)
    x = params["embedding"][token_idx]
    new_hidden = []
    for l in range(num_layers):
        w_ih, w_hh, b_ih, b_hh = params["gru"][l]
        gi = _bf(x) @ _bf(w_ih) + b_ih
        gh = _bf(hidden[l]) @ _bf(w_hh) + b_hh
        i_r, i_z, i_n = gi[:, :H], gi[:, H:2 * H], gi[:, 2 * H:]
        h_r, h_z, h_n = gh[:, :H], gh[:, H:2 * H], gh[:, 2 * H:]
        r = jax.nn.sigmoid(i_r + h_r)
        u = jax.nn.sigmoid(i_z + h_z)
        n = jnp.tanh(i_n + r * h_n)
        h_new = (1.0 - u) * n + u * hidden[l]
        new_hidden.append(h_new)
        x = h_new
    new_hidden = jnp.stack(new_hidden)
    logits = _bf(x) @ _bf(params["w_out"]) + params["b_out"]
    return jax.nn.log_softmax(logits, axis=-1), new_hidden


# ----------------------------------------------------------------------------
# Demo
# ----------------------------------------------------------------------------

if __name__ == "__main__":
    batch = 4
    img_emb_size = 80
    n_tokens = 5000         # V_pad = 5120 -> 4 vocab tiles of 1280 (exercises
                            # the online-LSE grid and the baked b_out mask)
    embedding_dim = 64
    hidden_size = 32
    num_layers = 2

    key = jax.random.PRNGKey(0)
    k_params, k_tok1, k_tok2, k_img = jax.random.split(key, 4)

    params = init_params(k_params, img_emb_size, n_tokens, embedding_dim,
                         hidden_size, num_layers)
    packed = pack_params(params, img_emb_size=img_emb_size, n_tokens=n_tokens,
                         embedding_dim=embedding_dim, hidden_size=hidden_size,
                         num_layers=num_layers)

    tok1 = jax.random.randint(k_tok1, (batch,), 0, n_tokens, jnp.int32)
    tok2 = jax.random.randint(k_tok2, (batch,), 0, n_tokens, jnp.int32)
    image_embeddings = jax.random.normal(k_img, (batch, img_emb_size),
                                         jnp.float32)

    # step 1: first decode step, hidden initialized from the image embedding
    out1, hid1 = descriptor_forward(packed, tok1, hidden=None,
                                    image_embeddings=image_embeddings)
    # step 2: autoregressive continuation carrying the hidden state
    out2, hid2 = descriptor_forward(packed, tok2, hidden=hid1)
    jax.block_until_ready((out1, hid1, out2, hid2))

    assert out1.shape == (batch, n_tokens)
    assert hid1.shape == (num_layers, batch, hidden_size)
    assert out2.shape == (batch, n_tokens)
    assert hid2.shape == (num_layers, batch, hidden_size)

    # log-softmax rows must sum to 1 in prob space
    assert jnp.allclose(jnp.sum(jnp.exp(out1), axis=-1), 1.0, atol=1e-3)
    assert jnp.allclose(jnp.sum(jnp.exp(out2), axis=-1), 1.0, atol=1e-3)

    # match the pure-JAX reference
    ref_out1, ref_hid1 = descriptor_forward_ref(params, tok1, None,
                                                image_embeddings, num_layers)
    ref_out2, ref_hid2 = descriptor_forward_ref(params, tok2, hid1, None,
                                                num_layers)
    assert jnp.allclose(hid1, ref_hid1, atol=2e-2, rtol=2e-2), "hidden-1 mismatch"
    assert jnp.allclose(out1, ref_out1, atol=2e-2, rtol=2e-2), "out-1 mismatch"
    assert jnp.allclose(hid2, ref_hid2, atol=2e-2, rtol=2e-2), "hidden-2 mismatch"
    assert jnp.allclose(out2, ref_out2, atol=2e-2, rtol=2e-2), "out-2 mismatch"

    print("KERNEL_OK")
</pallas_src>

<mosaic_0001>
module attributes {stable_mosaic.version = 11 : i64} {
  func.func @kernel(%arg0: i32, %arg1: memref<8x128xbf16, #tpu.memory_space<vmem>>, %arg2: memref<8x128xbf16, #tpu.memory_space<vmem>>, %arg3: memref<128x128xbf16, #tpu.memory_space<vmem>>, %arg4: memref<1x128xf32, #tpu.memory_space<vmem>>, %arg5: memref<256x256xbf16, #tpu.memory_space<vmem>>, %arg6: memref<1x256xf32, #tpu.memory_space<vmem>>, %arg7: memref<128x128xbf16, #tpu.memory_space<vmem>>, %arg8: memref<128x128xbf16, #tpu.memory_space<vmem>>, %arg9: memref<1x128xf32, #tpu.memory_space<vmem>>, %arg10: memref<1x128xf32, #tpu.memory_space<vmem>>, %arg11: memref<256x256xbf16, #tpu.memory_space<vmem>>, %arg12: memref<1x256xf32, #tpu.memory_space<vmem>>, %arg13: memref<128x128xbf16, #tpu.memory_space<vmem>>, %arg14: memref<128x128xbf16, #tpu.memory_space<vmem>>, %arg15: memref<1x128xf32, #tpu.memory_space<vmem>>, %arg16: memref<1x128xf32, #tpu.memory_space<vmem>>, %arg17: memref<128x1280xbf16, #tpu.memory_space<vmem>>, %arg18: memref<1x1280xf32, #tpu.memory_space<vmem>>, %arg19: memref<8x1280xf32, #tpu.memory_space<vmem>>, %arg20: memref<8x1xf32, #tpu.memory_space<vmem>>, %arg21: memref<2x8x128xf32, #tpu.memory_space<vmem>>, %arg22: memref<8x128xbf16, #tpu.memory_space<vmem>>, %arg23: memref<8x1xf32, #tpu.memory_space<vmem>>, %arg24: memref<8x1xf32, #tpu.memory_space<vmem>>) attributes {dimension_semantics = [#tpu.dimension_semantics<arbitrary>], iteration_bounds = array<i64: 4>, scalar_prefetch = 0 : i64, scratch_operands = 3 : i64, tpu.core_type = #tpu.core_type<tc>, window_params = [{pipeline_mode = #tpu.pipeline_mode<synchronous>, transform_indices = @transform_0, window_bounds = array<i64: 8, 128>}, {pipeline_mode = #tpu.pipeline_mode<synchronous>, transform_indices = @transform_1, window_bounds = array<i64: 8, 128>}, {pipeline_mode = #tpu.pipeline_mode<synchronous>, transform_indices = @transform_2, window_bounds = array<i64: 128, 128>}, {pipeline_mode = #tpu.pipeline_mode<synchronous>, transform_indices = @transform_3, window_bounds = array<i64: 1, 128>}, {pipeline_mode = #tpu.pipeline_mode<synchronous>, transform_indices = @transform_4, window_bounds = array<i64: 256, 256>}, {pipeline_mode = #tpu.pipeline_mode<synchronous>, transform_indices = @transform_5, window_bounds = array<i64: 1, 256>}, {pipeline_mode = #tpu.pipeline_mode<synchronous>, transform_indices = @transform_6, window_bounds = array<i64: 128, 128>}, {pipeline_mode = #tpu.pipeline_mode<synchronous>, transform_indices = @transform_7, window_bounds = array<i64: 128, 128>}, {pipeline_mode = #tpu.pipeline_mode<synchronous>, transform_indices = @transform_8, window_bounds = array<i64: 1, 128>}, {pipeline_mode = #tpu.pipeline_mode<synchronous>, transform_indices = @transform_9, window_bounds = array<i64: 1, 128>}, {pipeline_mode = #tpu.pipeline_mode<synchronous>, transform_indices = @transform_10, window_bounds = array<i64: 256, 256>}, {pipeline_mode = #tpu.pipeline_mode<synchronous>, transform_indices = @transform_11, window_bounds = array<i64: 1, 256>}, {pipeline_mode = #tpu.pipeline_mode<synchronous>, transform_indices = @transform_12, window_bounds = array<i64: 128, 128>}, {pipeline_mode = #tpu.pipeline_mode<synchronous>, transform_indices = @transform_13, window_bounds = array<i64: 128, 128>}, {pipeline_mode = #tpu.pipeline_mode<synchronous>, transform_indices = @transform_14, window_bounds = array<i64: 1, 128>}, {pipeline_mode = #tpu.pipeline_mode<synchronous>, transform_indices = @transform_15, window_bounds = array<i64: 1, 128>}, {transform_indices = @transform_16, window_bounds = array<i64: 128, 1280>}, {transform_indices = @transform_17, window_bounds = array<i64: 1, 1280>}, {transform_indices = @transform_18, window_bounds = array<i64: 8, 1280>}, {pipeline_mode = #tpu.pipeline_mode<synchronous>, transform_indices = @transform_19, window_bounds = array<i64: 8, 1>}, {pipeline_mode = #tpu.pipeline_mode<synchronous>, transform_indices = @transform_20, window_bounds = array<i64: 2, 8, 128>}]} {
    %c0_i32 = arith.constant 0 : i32
    %0 = arith.cmpi eq, %arg0, %c0_i32 : i32
    %1 = arith.extui %0 : i1 to i32
    %c0_i32_0 = arith.constant 0 : i32
    %2 = arith.cmpi ne, %1, %c0_i32_0 : i32
    scf.if %2 {
      %c0_19 = arith.constant 0 : index
      %c0_20 = arith.constant 0 : index
      %29 = vector.load %arg2[%c0_19, %c0_20] : memref<8x128xbf16, #tpu.memory_space<vmem>>, vector<8x128xbf16>
      %c0_21 = arith.constant 0 : index
      %c0_22 = arith.constant 0 : index
      %30 = vector.load %arg3[%c0_21, %c0_22] : memref<128x128xbf16, #tpu.memory_space<vmem>>, vector<128x128xbf16>
      %cst_23 = arith.constant dense<0.000000e+00> : vector<8x128xf32>
      %31 = tpu.matmul %29, %30, %cst_23 {dimension_numbers = #tpu.dot_dimension_numbers<[1], [0], [0], [1], [0, 0, 1, 1], [], []>} : vector<8x128xbf16>, vector<128x128xbf16>, vector<8x128xf32> -> vector<8x128xf32>
      %c0_24 = arith.constant 0 : index
      %c0_25 = arith.constant 0 : index
      %32 = vector.load %arg4[%c0_24, %c0_25] : memref<1x128xf32, #tpu.memory_space<vmem>>, vector<1x128xf32>
      %33 = vector.broadcast %32 : vector<1x128xf32> to vector<8x128xf32>
      %34 = arith.addf %31, %33 : vector<8x128xf32>
      %cst_26 = arith.constant 0.000000e+00 : f32
      %35 = vector.broadcast %cst_26 : f32 to vector<8x128xf32>
      %36 = arith.cmpf ogt, %34, %35 : vector<8x128xf32>
      %cst_27 = arith.constant 0.000000e+00 : f32
      %37 = vector.broadcast %cst_27 : f32 to vector<8x128xf32>
      %38 = arith.minimumf %34, %37 : vector<8x128xf32>
      %39 = math.exp %38 : vector<8x128xf32>
      %cst_28 = arith.constant 1.000000e+00 : f32
      %40 = vector.broadcast %cst_28 : f32 to vector<8x128xf32>
      %41 = arith.subf %39, %40 : vector<8x128xf32>
      %42 = arith.select %36, %34, %41 : vector<8x128xi1>, vector<8x128xf32>
      %c0_29 = arith.constant 0 : index
      %c0_30 = arith.constant 0 : index
      %43 = vector.load %arg1[%c0_29, %c0_30] : memref<8x128xbf16, #tpu.memory_space<vmem>>, vector<8x128xbf16>
      %44 = arith.truncf %42 : vector<8x128xf32> to vector<8x128xbf16>
      %45 = tpu.concatenate %43, %44 in 1 : vector<8x128xbf16>, vector<8x128xbf16> -> vector<8x256xbf16>
      %c0_31 = arith.constant 0 : index
      %c0_32 = arith.constant 0 : index
      %46 = vector.load %arg5[%c0_31, %c0_32] : memref<256x256xbf16, #tpu.memory_space<vmem>>, vector<256x256xbf16>
      %cst_33 = arith.constant dense<0.000000e+00> : vector<8x256xf32>
      %47 = tpu.matmul %45, %46, %cst_33 {dimension_numbers = #tpu.dot_dimension_numbers<[1], [0], [0], [1], [0, 0, 1, 1], [], []>} : vector<8x256xbf16>, vector<256x256xbf16>, vector<8x256xf32> -> vector<8x256xf32>
      %c0_34 = arith.constant 0 : index
      %c0_35 = arith.constant 0 : index
      %48 = vector.load %arg6[%c0_34, %c0_35] : memref<1x256xf32, #tpu.memory_space<vmem>>, vector<1x256xf32>
      %49 = vector.broadcast %48 : vector<1x256xf32> to vector<8x256xf32>
      %50 = arith.addf %47, %49 : vector<8x256xf32>
      %51 = vector.extract_strided_slice %50 {offsets = [0, 0], sizes = [8, 128], strides = [1, 1]} : vector<8x256xf32> to vector<8x128xf32>
      %52 = arith.negf %51 : vector<8x128xf32>
      %53 = math.exp %52 : vector<8x128xf32>
      %cst_36 = arith.constant 1.000000e+00 : f32
      %54 = vector.broadcast %cst_36 : f32 to vector<8x128xf32>
      %55 = arith.addf %54, %53 : vector<8x128xf32>
      %56 = arith.divf %54, %55 : vector<8x128xf32>
      %57 = vector.extract_strided_slice %50 {offsets = [0, 128], sizes = [8, 128], strides = [1, 1]} : vector<8x256xf32> to vector<8x128xf32>
      %58 = arith.negf %57 : vector<8x128xf32>
      %59 = math.exp %58 : vector<8x128xf32>
      %cst_37 = arith.constant 1.000000e+00 : f32
      %60 = vector.broadcast %cst_37 : f32 to vector<8x128xf32>
      %61 = arith.addf %60, %59 : vector<8x128xf32>
      %62 = arith.divf %60, %61 : vector<8x128xf32>
      %c0_38 = arith.constant 0 : index
      %c0_39 = arith.constant 0 : index
      %63 = vector.load %arg7[%c0_38, %c0_39] : memref<128x128xbf16, #tpu.memory_space<vmem>>, vector<128x128xbf16>
      %cst_40 = arith.constant dense<0.000000e+00> : vector<8x128xf32>
      %64 = tpu.matmul %43, %63, %cst_40 {dimension_numbers = #tpu.dot_dimension_numbers<[1], [0], [0], [1], [0, 0, 1, 1], [], []>} : vector<8x128xbf16>, vector<128x128xbf16>, vector<8x128xf32> -> vector<8x128xf32>
      %c0_41 = arith.constant 0 : index
      %c0_42 = arith.constant 0 : index
      %65 = vector.load %arg9[%c0_41, %c0_42] : memref<1x128xf32, #tpu.memory_space<vmem>>, vector<1x128xf32>
      %66 = vector.broadcast %65 : vector<1x128xf32> to vector<8x128xf32>
      %67 = arith.addf %64, %66 : vector<8x128xf32>
      %c0_43 = arith.constant 0 : index
      %c0_44 = arith.constant 0 : index
      %68 = vector.load %arg8[%c0_43, %c0_44] : memref<128x128xbf16, #tpu.memory_space<vmem>>, vector<128x128xbf16>
      %cst_45 = arith.constant dense<0.000000e+00> : vector<8x128xf32>
      %69 = tpu.matmul %44, %68, %cst_45 {dimension_numbers = #tpu.dot_dimension_numbers<[1], [0], [0], [1], [0, 0, 1, 1], [], []>} : vector<8x128xbf16>, vector<128x128xbf16>, vector<8x128xf32> -> vector<8x128xf32>
      %c0_46 = arith.constant 0 : index
      %c0_47 = arith.constant 0 : index
      %70 = vector.load %arg10[%c0_46, %c0_47] : memref<1x128xf32, #tpu.memory_space<vmem>>, vector<1x128xf32>
      %71 = vector.broadcast %70 : vector<1x128xf32> to vector<8x128xf32>
      %72 = arith.addf %69, %71 : vector<8x128xf32>
      %73 = arith.mulf %56, %72 : vector<8x128xf32>
      %74 = arith.addf %67, %73 : vector<8x128xf32>
      %75 = math.tanh %74 : vector<8x128xf32>
      %cst_48 = arith.constant 1.000000e+00 : f32
      %76 = vector.broadcast %cst_48 : f32 to vector<8x128xf32>
      %77 = arith.subf %76, %62 : vector<8x128xf32>
      %78 = arith.mulf %77, %75 : vector<8x128xf32>
      %79 = arith.mulf %62, %42 : vector<8x128xf32>
      %80 = arith.addf %78, %79 : vector<8x128xf32>
      %c0_49 = arith.constant 0 : index
      %c0_50 = arith.constant 0 : index
      %c0_51 = arith.constant 0 : index
      %81 = vector.load %arg21[%c0_49, %c0_50, %c0_51] : memref<2x8x128xf32, #tpu.memory_space<vmem>>, vector<1x8x128xf32>
      %82 = vector.shape_cast %81 : vector<1x8x128xf32> to vector<8x128xf32>
      %83 = vector.shape_cast %80 : vector<8x128xf32> to vector<1x8x128xf32>
      tpu.vector_store %arg21[%c0_49, %c0_50, %c0_51], %83 {strides = array<i32>} : memref<2x8x128xf32, #tpu.memory_space<vmem>>, vector<1x8x128xf32>,
      %84 = arith.truncf %80 : vector<8x128xf32> to vector<8x128xbf16>
      %85 = arith.truncf %42 : vector<8x128xf32> to vector<8x128xbf16>
      %86 = tpu.concatenate %84, %85 in 1 : vector<8x128xbf16>, vector<8x128xbf16> -> vector<8x256xbf16>
      %c0_52 = arith.constant 0 : index
      %c0_53 = arith.constant 0 : index
      %87 = vector.load %arg11[%c0_52, %c0_53] : memref<256x256xbf16, #tpu.memory_space<vmem>>, vector<256x256xbf16>
      %cst_54 = arith.constant dense<0.000000e+00> : vector<8x256xf32>
      %88 = tpu.matmul %86, %87, %cst_54 {dimension_numbers = #tpu.dot_dimension_numbers<[1], [0], [0], [1], [0, 0, 1, 1], [], []>} : vector<8x256xbf16>, vector<256x256xbf16>, vector<8x256xf32> -> vector<8x256xf32>
      %c0_55 = arith.constant 0 : index
      %c0_56 = arith.constant 0 : index
      %89 = vector.load %arg12[%c0_55, %c0_56] : memref<1x256xf32, #tpu.memory_space<vmem>>, vector<1x256xf32>
      %90 = vector.broadcast %89 : vector<1x256xf32> to vector<8x256xf32>
      %91 = arith.addf %88, %90 : vector<8x256xf32>
      %92 = vector.extract_strided_slice %91 {offsets = [0, 0], sizes = [8, 128], strides = [1, 1]} : vector<8x256xf32> to vector<8x128xf32>
      %93 = arith.negf %92 : vector<8x128xf32>
      %94 = math.exp %93 : vector<8x128xf32>
      %cst_57 = arith.constant 1.000000e+00 : f32
      %95 = vector.broadcast %cst_57 : f32 to vector<8x128xf32>
      %96 = arith.addf %95, %94 : vector<8x128xf32>
      %97 = arith.divf %95, %96 : vector<8x128xf32>
      %98 = vector.extract_strided_slice %91 {offsets = [0, 128], sizes = [8, 128], strides = [1, 1]} : vector<8x256xf32> to vector<8x128xf32>
      %99 = arith.negf %98 : vector<8x128xf32>
      %100 = math.exp %99 : vector<8x128xf32>
      %cst_58 = arith.constant 1.000000e+00 : f32
      %101 = vector.broadcast %cst_58 : f32 to vector<8x128xf32>
      %102 = arith.addf %101, %100 : vector<8x128xf32>
      %103 = arith.divf %101, %102 : vector<8x128xf32>
      %c0_59 = arith.constant 0 : index
      %c0_60 = arith.constant 0 : index
      %104 = vector.load %arg13[%c0_59, %c0_60] : memref<128x128xbf16, #tpu.memory_space<vmem>>, vector<128x128xbf16>
      %cst_61 = arith.constant dense<0.000000e+00> : vector<8x128xf32>
      %105 = tpu.matmul %84, %104, %cst_61 {dimension_numbers = #tpu.dot_dimension_numbers<[1], [0], [0], [1], [0, 0, 1, 1], [], []>} : vector<8x128xbf16>, vector<128x128xbf16>, vector<8x128xf32> -> vector<8x128xf32>
      %c0_62 = arith.constant 0 : index
      %c0_63 = arith.constant 0 : index
      %106 = vector.load %arg15[%c0_62, %c0_63] : memref<1x128xf32, #tpu.memory_space<vmem>>, vector<1x128xf32>
      %107 = vector.broadcast %106 : vector<1x128xf32> to vector<8x128xf32>
      %108 = arith.addf %105, %107 : vector<8x128xf32>
      %c0_64 = arith.constant 0 : index
      %c0_65 = arith.constant 0 : index
      %109 = vector.load %arg14[%c0_64, %c0_65] : memref<128x128xbf16, #tpu.memory_space<vmem>>, vector<128x128xbf16>
      %cst_66 = arith.constant dense<0.000000e+00> : vector<8x128xf32>
      %110 = tpu.matmul %85, %109, %cst_66 {dimension_numbers = #tpu.dot_dimension_numbers<[1], [0], [0], [1], [0, 0, 1, 1], [], []>} : vector<8x128xbf16>, vector<128x128xbf16>, vector<8x128xf32> -> vector<8x128xf32>
      %c0_67 = arith.constant 0 : index
      %c0_68 = arith.constant 0 : index
      %111 = vector.load %arg16[%c0_67, %c0_68] : memref<1x128xf32, #tpu.memory_space<vmem>>, vector<1x128xf32>
      %112 = vector.broadcast %111 : vector<1x128xf32> to vector<8x128xf32>
      %113 = arith.addf %110, %112 : vector<8x128xf32>
      %114 = arith.mulf %97, %113 : vector<8x128xf32>
      %115 = arith.addf %108, %114 : vector<8x128xf32>
      %116 = math.tanh %115 : vector<8x128xf32>
      %cst_69 = arith.constant 1.000000e+00 : f32
      %117 = vector.broadcast %cst_69 : f32 to vector<8x128xf32>
      %118 = arith.subf %117, %103 : vector<8x128xf32>
      %119 = arith.mulf %118, %116 : vector<8x128xf32>
      %120 = arith.mulf %103, %42 : vector<8x128xf32>
      %121 = arith.addf %119, %120 : vector<8x128xf32>
      %c1 = arith.constant 1 : index
      %c0_70 = arith.constant 0 : index
      %c0_71 = arith.constant 0 : index
      %122 = vector.load %arg21[%c1, %c0_70, %c0_71] : memref<2x8x128xf32, #tpu.memory_space<vmem>>, vector<1x8x128xf32>
      %123 = vector.shape_cast %122 : vector<1x8x128xf32> to vector<8x128xf32>
      %124 = vector.shape_cast %121 : vector<8x128xf32> to vector<1x8x128xf32>
      tpu.vector_store %arg21[%c1, %c0_70, %c0_71], %124 {strides = array<i32>} : memref<2x8x128xf32, #tpu.memory_space<vmem>>, vector<1x8x128xf32>,
      %125 = arith.truncf %121 : vector<8x128xf32> to vector<8x128xbf16>
      %c0_72 = arith.constant 0 : index
      %c0_73 = arith.constant 0 : index
      %126 = vector.load %arg22[%c0_72, %c0_73] : memref<8x128xbf16, #tpu.memory_space<vmem>>, vector<8x128xbf16>
      tpu.vector_store %arg22[%c0_72, %c0_73], %125 {strides = array<i32>} : memref<8x128xbf16, #tpu.memory_space<vmem>>, vector<8x128xbf16>,
      %cst_74 = arith.constant -3.000000e+38 : f32
      %127 = vector.broadcast %cst_74 : f32 to vector<8x1xf32>
      %c0_75 = arith.constant 0 : index
      %c0_76 = arith.constant 0 : index
      %128 = vector.load %arg23[%c0_75, %c0_76] : memref<8x1xf32, #tpu.memory_space<vmem>>, vector<8x1xf32>
      tpu.vector_store %arg23[%c0_75, %c0_76], %127 {strides = array<i32>} : memref<8x1xf32, #tpu.memory_space<vmem>>, vector<8x1xf32>,
      %cst_77 = arith.constant 0.000000e+00 : f32
      %129 = vector.broadcast %cst_77 : f32 to vector<8x1xf32>
      %c0_78 = arith.constant 0 : index
      %c0_79 = arith.constant 0 : index
      %130 = vector.load %arg24[%c0_78, %c0_79] : memref<8x1xf32, #tpu.memory_space<vmem>>, vector<8x1xf32>
      tpu.vector_store %arg24[%c0_78, %c0_79], %129 {strides = array<i32>} : memref<8x1xf32, #tpu.memory_space<vmem>>, vector<8x1xf32>,
    } else {
    }
    %c0 = arith.constant 0 : index
    %c0_1 = arith.constant 0 : index
    %3 = vector.load %arg22[%c0, %c0_1] : memref<8x128xbf16, #tpu.memory_space<vmem>>, vector<8x128xbf16>
    %c0_2 = arith.constant 0 : index
    %c0_3 = arith.constant 0 : index
    %4 = vector.load %arg17[%c0_2, %c0_3] : memref<128x1280xbf16, #tpu.memory_space<vmem>>, vector<128x1280xbf16>
    %cst = arith.constant dense<0.000000e+00> : vector<8x1280xf32>
    %5 = tpu.matmul %3, %4, %cst {dimension_numbers = #tpu.dot_dimension_numbers<[1], [0], [0], [1], [0, 0, 1, 1], [], []>} : vector<8x128xbf16>, vector<128x1280xbf16>, vector<8x1280xf32> -> vector<8x1280xf32>
    %c0_4 = arith.constant 0 : index
    %c0_5 = arith.constant 0 : index
    %6 = vector.load %arg18[%c0_4, %c0_5] : memref<1x1280xf32, #tpu.memory_space<vmem>>, vector<1x1280xf32>
    %7 = vector.broadcast %6 : vector<1x1280xf32> to vector<8x1280xf32>
    %8 = arith.addf %5, %7 : vector<8x1280xf32>
    %c0_6 = arith.constant 0 : index
    %c0_7 = arith.constant 0 : index
    %9 = vector.load %arg19[%c0_6, %c0_7] : memref<8x1280xf32, #tpu.memory_space<vmem>>, vector<8x1280xf32>
    tpu.vector_store %arg19[%c0_6, %c0_7], %8 {strides = array<i32>} : memref<8x1280xf32, #tpu.memory_space<vmem>>, vector<8x1280xf32>,
    %c0_8 = arith.constant 0 : index
    %c0_9 = arith.constant 0 : index
    %10 = vector.load %arg23[%c0_8, %c0_9] : memref<8x1xf32, #tpu.memory_space<vmem>>, vector<8x1xf32>
    %cst_10 = arith.constant dense<0xFF800000> : vector<8xf32>
    %11 = vector.multi_reduction <maximumf>, %8, %cst_10 [1] : vector<8x1280xf32> to vector<8xf32>
    %12 = vector.shape_cast %11 : vector<8xf32> to vector<8x1xf32>
    %13 = arith.maximumf %10, %12 : vector<8x1xf32>
    %c0_11 = arith.constant 0 : index
    %c0_12 = arith.constant 0 : index
    %14 = vector.load %arg24[%c0_11, %c0_12] : memref<8x1xf32, #tpu.memory_space<vmem>>, vector<8x1xf32>
    %15 = arith.subf %10, %13 : vector<8x1xf32>
    %16 = math.exp %15 : vector<8x1xf32>
    %17 = arith.mulf %14, %16 : vector<8x1xf32>
    %18 = vector.broadcast %13 : vector<8x1xf32> to vector<8x1280xf32>
    %19 = arith.subf %8, %18 : vector<8x1280xf32>
    %20 = math.exp %19 : vector<8x1280xf32>
    %cst_13 = arith.constant dense<0.000000e+00> : vector<8xf32>
    %21 = vector.multi_reduction <add>, %20, %cst_13 [1] : vector<8x1280xf32> to vector<8xf32>
    %22 = vector.shape_cast %21 : vector<8xf32> to vector<8x1xf32>
    %23 = arith.addf %17, %22 : vector<8x1xf32>
    %c0_14 = arith.constant 0 : index
    %c0_15 = arith.constant 0 : index
    %24 = vector.load %arg24[%c0_14, %c0_15] : memref<8x1xf32, #tpu.memory_space<vmem>>, vector<8x1xf32>
    tpu.vector_store %arg24[%c0_14, %c0_15], %23 {strides = array<i32>} : memref<8x1xf32, #tpu.memory_space<vmem>>, vector<8x1xf32>,
    %c0_16 = arith.constant 0 : index
    %c0_17 = arith.constant 0 : index
    %25 = vector.load %arg23[%c0_16, %c0_17] : memref<8x1xf32, #tpu.memory_space<vmem>>, vector<8x1xf32>
    tpu.vector_store %arg23[%c0_16, %c0_17], %13 {strides = array<i32>} : memref<8x1xf32, #tpu.memory_space<vmem>>, vector<8x1xf32>,
    %c3_i32 = arith.constant 3 : i32
    %26 = arith.cmpi eq, %arg0, %c3_i32 : i32
    %27 = arith.extui %26 : i1 to i32
    %c0_i32_18 = arith.constant 0 : i32
    %28 = arith.cmpi ne, %27, %c0_i32_18 : i32
    scf.if %28 {
      %c0_19 = arith.constant 0 : index
      %c0_20 = arith.constant 0 : index
      %29 = vector.load %arg23[%c0_19, %c0_20] : memref<8x1xf32, #tpu.memory_space<vmem>>, vector<8x1xf32>
      %c0_21 = arith.constant 0 : index
      %c0_22 = arith.constant 0 : index
      %30 = vector.load %arg24[%c0_21, %c0_22] : memref<8x1xf32, #tpu.memory_space<vmem>>, vector<8x1xf32>
      %31 = math.log %30 : vector<8x1xf32>
      %32 = arith.addf %29, %31 : vector<8x1xf32>
      %c0_23 = arith.constant 0 : index
      %c0_24 = arith.constant 0 : index
      %33 = vector.load %arg20[%c0_23, %c0_24] : memref<8x1xf32, #tpu.memory_space<vmem>>, vector<8x1xf32>
      tpu.vector_store %arg20[%c0_23, %c0_24], %32 {strides = array<i32>} : memref<8x1xf32, #tpu.memory_space<vmem>>, vector<8x1xf32>,
    } else {
    }
    return
  }
  func.func @transform_0(%arg0: i32) -> (i32, i32) {
    %c0_i32 = arith.constant 0 : i32
    %c0_i32_0 = arith.constant 0 : i32
    %c0_i32_1 = arith.constant 0 : i32
    return %c0_i32, %c0_i32_0 : i32, i32
  }
  func.func @transform_1(%arg0: i32) -> (i32, i32) {
    %c0_i32 = arith.constant 0 : i32
    %c0_i32_0 = arith.constant 0 : i32
    %c0_i32_1 = arith.constant 0 : i32
    return %c0_i32, %c0_i32_0 : i32, i32
  }
  func.func @transform_2(%arg0: i32) -> (i32, i32) {
    %c0_i32 = arith.constant 0 : i32
    %c0_i32_0 = arith.constant 0 : i32
    %c0_i32_1 = arith.constant 0 : i32
    return %c0_i32, %c0_i32_0 : i32, i32
  }
  func.func @transform_3(%arg0: i32) -> (i32, i32) {
    %c0_i32 = arith.constant 0 : i32
    %c0_i32_0 = arith.constant 0 : i32
    %c0_i32_1 = arith.constant 0 : i32
    return %c0_i32, %c0_i32_0 : i32, i32
  }
  func.func @transform_4(%arg0: i32) -> (i32, i32) {
    %c0_i32 = arith.constant 0 : i32
    %c0_i32_0 = arith.constant 0 : i32
    %c0_i32_1 = arith.constant 0 : i32
    return %c0_i32, %c0_i32_0 : i32, i32
  }
  func.func @transform_5(%arg0: i32) -> (i32, i32) {
    %c0_i32 = arith.constant 0 : i32
    %c0_i32_0 = arith.constant 0 : i32
    %c0_i32_1 = arith.constant 0 : i32
    return %c0_i32, %c0_i32_0 : i32, i32
  }
  func.func @transform_6(%arg0: i32) -> (i32, i32) {
    %c0_i32 = arith.constant 0 : i32
    %c0_i32_0 = arith.constant 0 : i32
    %c0_i32_1 = arith.constant 0 : i32
    return %c0_i32, %c0_i32_0 : i32, i32
  }
  func.func @transform_7(%arg0: i32) -> (i32, i32) {
    %c0_i32 = arith.constant 0 : i32
    %c0_i32_0 = arith.constant 0 : i32
    %c0_i32_1 = arith.constant 0 : i32
    return %c0_i32, %c0_i32_0 : i32, i32
  }
  func.func @transform_8(%arg0: i32) -> (i32, i32) {
    %c0_i32 = arith.constant 0 : i32
    %c0_i32_0 = arith.constant 0 : i32
    %c0_i32_1 = arith.constant 0 : i32
    return %c0_i32, %c0_i32_0 : i32, i32
  }
  func.func @transform_9(%arg0: i32) -> (i32, i32) {
    %c0_i32 = arith.constant 0 : i32
    %c0_i32_0 = arith.constant 0 : i32
    %c0_i32_1 = arith.constant 0 : i32
    return %c0_i32, %c0_i32_0 : i32, i32
  }
  func.func @transform_10(%arg0: i32) -> (i32, i32) {
    %c0_i32 = arith.constant 0 : i32
    %c0_i32_0 = arith.constant 0 : i32
    %c0_i32_1 = arith.constant 0 : i32
    return %c0_i32, %c0_i32_0 : i32, i32
  }
  func.func @transform_11(%arg0: i32) -> (i32, i32) {
    %c0_i32 = arith.constant 0 : i32
    %c0_i32_0 = arith.constant 0 : i32
    %c0_i32_1 = arith.constant 0 : i32
    return %c0_i32, %c0_i32_0 : i32, i32
  }
  func.func @transform_12(%arg0: i32) -> (i32, i32) {
    %c0_i32 = arith.constant 0 : i32
    %c0_i32_0 = arith.constant 0 : i32
    %c0_i32_1 = arith.constant 0 : i32
    return %c0_i32, %c0_i32_0 : i32, i32
  }
  func.func @transform_13(%arg0: i32) -> (i32, i32) {
    %c0_i32 = arith.constant 0 : i32
    %c0_i32_0 = arith.constant 0 : i32
    %c0_i32_1 = arith.constant 0 : i32
    return %c0_i32, %c0_i32_0 : i32, i32
  }
  func.func @transform_14(%arg0: i32) -> (i32, i32) {
    %c0_i32 = arith.constant 0 : i32
    %c0_i32_0 = arith.constant 0 : i32
    %c0_i32_1 = arith.constant 0 : i32
    return %c0_i32, %c0_i32_0 : i32, i32
  }
  func.func @transform_15(%arg0: i32) -> (i32, i32) {
    %c0_i32 = arith.constant 0 : i32
    %c0_i32_0 = arith.constant 0 : i32
    %c0_i32_1 = arith.constant 0 : i32
    return %c0_i32, %c0_i32_0 : i32, i32
  }
  func.func @transform_16(%arg0: i32) -> (i32, i32) {
    %c0_i32 = arith.constant 0 : i32
    %c0_i32_0 = arith.constant 0 : i32
    return %c0_i32, %arg0 : i32, i32
  }
  func.func @transform_17(%arg0: i32) -> (i32, i32) {
    %c0_i32 = arith.constant 0 : i32
    %c0_i32_0 = arith.constant 0 : i32
    return %c0_i32, %arg0 : i32, i32
  }
  func.func @transform_18(%arg0: i32) -> (i32, i32) {
    %c0_i32 = arith.constant 0 : i32
    %c0_i32_0 = arith.constant 0 : i32
    return %c0_i32, %arg0 : i32, i32
  }
  func.func @transform_19(%arg0: i32) -> (i32, i32) {
    %c0_i32 = arith.constant 0 : i32
    %c0_i32_0 = arith.constant 0 : i32
    %c0_i32_1 = arith.constant 0 : i32
    return %c0_i32, %c0_i32_0 : i32, i32
  }
  func.func @transform_20(%arg0: i32) -> (i32, i32, i32) {
    %c0_i32 = arith.constant 0 : i32
    %c0_i32_0 = arith.constant 0 : i32
    %c0_i32_1 = arith.constant 0 : i32
    %c0_i32_2 = arith.constant 0 : i32
    return %c0_i32, %c0_i32_0, %c0_i32_1 : i32, i32, i32
  }
}

</mosaic_0001>

<llo_original>
// kernel: tpu_custom_call.1
$region0: #{tpu_custom_call.1}
  #allocation0 [shape = 'u32[]', space=smem, size = 0x4, offset = 0x4, fixed_abs, tag = 'smem constant byte address 0x4 - core index']
  #allocation1 [shape = 'u32[72,128]{1,0:T(1,128)}', space=vmem, size = 0x9000, scoped, tag = 'internal scratch']
  #allocation2 [shape = 'bf16[8,128]{1,0:T(8,128)(2,1)}', space=vmem, size = 0x800, scoped, tag = 'scratch operand']
  #allocation3 [shape = 'f32[8,1]{1,0:T(8,128)}', space=vmem, size = 0x1000, scoped, tag = 'scratch operand']
  #allocation4 [shape = 'f32[8,1]{1,0:T(8,128)}', space=vmem, size = 0x1000, scoped, tag = 'scratch operand']
  %s0 = inlined_call_operand.hbm [shape: bf16[8,128], index: 0, kind: input, shape index: {}]
  %s1 = inlined_call_operand.hbm [shape: bf16[8,128], index: 1, kind: input, shape index: {}]
  %s2 = inlined_call_operand.hbm [shape: bf16[128,128], index: 2, kind: input, shape index: {}]
  %s3 = inlined_call_operand.hbm [shape: f32[1,128], index: 3, kind: input, shape index: {}]
  %s4 = inlined_call_operand.hbm [shape: bf16[256,256], index: 4, kind: input, shape index: {}]
  %s5 = inlined_call_operand.hbm [shape: f32[1,256], index: 5, kind: input, shape index: {}]
  %s6 = inlined_call_operand.hbm [shape: bf16[128,128], index: 6, kind: input, shape index: {}]
  %s7 = inlined_call_operand.hbm [shape: bf16[128,128], index: 7, kind: input, shape index: {}]
  %s8 = inlined_call_operand.hbm [shape: f32[1,128], index: 8, kind: input, shape index: {}]
  %s9 = inlined_call_operand.hbm [shape: f32[1,128], index: 9, kind: input, shape index: {}]
  %s10 = inlined_call_operand.hbm [shape: bf16[256,256], index: 10, kind: input, shape index: {}]
  %s11 = inlined_call_operand.hbm [shape: f32[1,256], index: 11, kind: input, shape index: {}]
  %s12 = inlined_call_operand.hbm [shape: bf16[128,128], index: 12, kind: input, shape index: {}]
  %s13 = inlined_call_operand.hbm [shape: bf16[128,128], index: 13, kind: input, shape index: {}]
  %s14 = inlined_call_operand.hbm [shape: f32[1,128], index: 14, kind: input, shape index: {}]
  %s15 = inlined_call_operand.hbm [shape: f32[1,128], index: 15, kind: input, shape index: {}]
  %s16 = inlined_call_operand.hbm [shape: bf16[128,5120], index: 16, kind: input, shape index: {}]
  %s17 = inlined_call_operand.hbm [shape: f32[1,5120], index: 17, kind: input, shape index: {}]
  %s18 = inlined_call_operand.hbm [shape: f32[8,5120], index: 18, kind: output, shape index: {0}]
  %s19 = inlined_call_operand.vmem [shape: f32[8,1], index: 19, kind: output, shape index: {1}]
  %s20 = inlined_call_operand.hbm [shape: f32[2,8,128], index: 20, kind: output, shape index: {2}]
  %21 = xla_tuple %s18, %s19, %s20
  %s22 = sld [smem:[#allocation0]]
  $region201: #{tpu_custom_call.1} parent=0
    _
  %s24 = ssub.s32 1, %s22
  %s25 = scalar_select 0, %s24, %s22
  $region1: #{tpu_custom_call.1} parent=0
    #allocation5 [shape = 'u8[2048]{0}', space=vmem, size = 0x800, scoped, tag = 'input window, operand 0, single buffered']
    #allocation6 [shape = 's32[2]{0}', space=sflag, size = 0x8, scoped, tag = 'scoped memory for tpu_custom_call.1']
    #allocation7 [shape = 's32[2]{0}', space=sflag, size = 0x8, scoped, tag = 'scoped memory for tpu_custom_call.1']
    #allocation8 [shape = 'u8[2048]{0}', space=vmem, size = 0x800, scoped, tag = 'input window, operand 1, single buffered']
    #allocation9 [shape = 's32[1]{0}', space=sflag, size = 0x4, scoped, tag = 'scoped memory for tpu_custom_call.1']
    #allocation10 [shape = 'u8[32768]{0}', space=vmem, size = 0x8000, scoped, tag = 'input window, operand 2, single buffered']
    #allocation11 [shape = 'u8[512]{0}', space=vmem, size = 0x400, scoped, tag = 'input window, operand 3, single buffered']
    #allocation12 [shape = 's32[1]{0}', space=sflag, size = 0x4, scoped, tag = 'scoped memory for tpu_custom_call.1']
    #allocation13 [shape = 'u8[131072]{0}', space=vmem, size = 0x20000, scoped, tag = 'input window, operand 4, single buffered']
    #allocation14 [shape = 'u8[1024]{0}', space=vmem, size = 0x400, scoped, tag = 'input window, operand 5, single buffered']
    #allocation15 [shape = 's32[1]{0}', space=sflag, size = 0x4, scoped, tag = 'scoped memory for tpu_custom_call.1']
    #allocation16 [shape = 'u8[32768]{0}', space=vmem, size = 0x8000, scoped, tag = 'input window, operand 6, single buffered']
    #allocation17 [shape = 'u8[32768]{0}', space=vmem, size = 0x8000, scoped, tag = 'input window, operand 7, single buffered']
    #allocation18 [shape = 's32[1]{0}', space=sflag, size = 0x4, scoped, tag = 'scoped memory for tpu_custom_call.1']
    #allocation19 [shape = 'u8[512]{0}', space=vmem, size = 0x400, scoped, tag = 'input window, operand 8, single buffered']
    #allocation20 [shape = 'u8[512]{0}', space=vmem, size = 0x400, scoped, tag = 'input window, operand 9, single buffered']
    #allocation21 [shape = 's32[1]{0}', space=sflag, size = 0x4, scoped, tag = 'scoped memory for tpu_custom_call.1']
    #allocation22 [shape = 'u8[131072]{0}', space=vmem, size = 0x20000, scoped, tag = 'input window, operand 10, single buffered']
    #allocation23 [shape = 'u8[1024]{0}', space=vmem, size = 0x400, scoped, tag = 'input window, operand 11, single buffered']
    #allocation24 [shape = 's32[1]{0}', space=sflag, size = 0x4, scoped, tag = 'scoped memory for tpu_custom_call.1']
    #allocation25 [shape = 'u8[32768]{0}', space=vmem, size = 0x8000, scoped, tag = 'input window, operand 12, single buffered']
    #allocation26 [shape = 'u8[32768]{0}', space=vmem, size = 0x8000, scoped, tag = 'input window, operand 13, single buffered']
    #allocation27 [shape = 's32[1]{0}', space=sflag, size = 0x4, scoped, tag = 'scoped memory for tpu_custom_call.1']
    #allocation28 [shape = 'u8[512]{0}', space=vmem, size = 0x400, scoped, tag = 'input window, operand 14, single buffered']
    #allocation29 [shape = 'u8[512]{0}', space=vmem, size = 0x400, scoped, tag = 'input window, operand 15, single buffered']
    #allocation30 [shape = 's32[1]{0}', space=sflag, size = 0x4, scoped, tag = 'scoped memory for tpu_custom_call.1']
    #allocation31 [shape = 'u8[655360]{0}', space=vmem, size = 0xa0000, scoped, tag = 'input window, operand 16']
    #allocation32 [shape = 'u8[10240]{0}', space=vmem, size = 0x2800, scoped, tag = 'input window, operand 17']
    #allocation33 [shape = 'u8[81920]{0}', space=vmem, size = 0x14000, scoped, tag = 'output window, operand 0']
    #allocation34 [shape = 'u8[8192]{0}', space=vmem, size = 0x2000, scoped, tag = 'output window, operand 2, single buffered']
    #allocation35 [shape = 's32[1]{0}', space=sflag, size = 0x4, scoped, tag = 'scoped memory for tpu_custom_call.1']
    %26 = vsyncpa [#allocation6], 0
    %27 = vsyncpa [#allocation9], 0
    %28 = vsyncpa [#allocation12], 0
    %29 = vsyncpa [#allocation15], 0
    %30 = vsyncpa [#allocation18], 0
    %31 = vsyncpa [#allocation21], 0
    %32 = vsyncpa [#allocation24], 0
    %33 = vsyncpa [#allocation27], 0
    %34 = vsyncpa [#allocation30], 0
    %35 = vsyncpa [#allocation7], 0
    %s36 = scalar_lea.sflag [#allocation7], 1
    %37 = vsyncpa %s36, 0
    %38 = vsyncpa [#allocation35], 0
    loop: start=0, step=1, limit=6
    $region2: #{tpu_custom_call.1} parent=1 // loop_pre_header
      _
    $region3: #{tpu_custom_call.1} parent=1 // loop_header
      %s40 = sphi 0, %s44
      %p41 = scmp.ge.s32.totalorder %s40, 6
      %s48 = sphi 0, %s48
      %s50 = sphi 0, %s48
      %s51 = sphi 0, %s50
      %s65 = sphi 0, %s51
      %s69 = sphi 0, %s69
      %s71 = sphi 0, %s69
      %s72 = sphi 0, %s71
      %s86 = sphi 0, %s72
      %s90 = sphi 0, %s90
      %s92 = sphi 0, %s90
      %s93 = sphi 0, %s92
      %s107 = sphi 0, %s93
      %s111 = sphi 0, %s111
      %s113 = sphi 0, %s111
      %s114 = sphi 0, %s113
      %s128 = sphi 0, %s114
      %s132 = sphi 0, %s132
      %s134 = sphi 0, %s132
      %s135 = sphi 0, %s134
      %s149 = sphi 0, %s135
      %s153 = sphi 0, %s153
      %s155 = sphi 0, %s153
      %s156 = sphi 0, %s155
      %s170 = sphi 0, %s156
      %s174 = sphi 0, %s174
      %s176 = sphi 0, %s174
      %s177 = sphi 0, %s176
      %s191 = sphi 0, %s177
      %s195 = sphi 0, %s195
      %s197 = sphi 0, %s195
      %s198 = sphi 0, %s197
      %s212 = sphi 0, %s198
      %s216 = sphi 0, %s216
      %s218 = sphi 0, %s216
      %s219 = sphi 0, %s218
      %s233 = sphi 0, %s219
      %s237 = sphi 0, %s237
      %s239 = sphi 0, %s237
      %s240 = sphi 0, %s239
      %s254 = sphi 0, %s240
      %s258 = sphi 0, %s258
      %s260 = sphi 0, %s258
      %s261 = sphi 0, %s260
      %s275 = sphi 0, %s261
      %s279 = sphi 0, %s279
      %s281 = sphi 0, %s279
      %s282 = sphi 0, %s281
      %s296 = sphi 0, %s282
      %s300 = sphi 0, %s300
      %s302 = sphi 0, %s300
      %s303 = sphi 0, %s302
      %s317 = sphi 0, %s303
      %s321 = sphi 0, %s321
      %s323 = sphi 0, %s321
      %s324 = sphi 0, %s323
      %s338 = sphi 0, %s324
      %s342 = sphi 0, %s342
      %s344 = sphi 0, %s342
      %s345 = sphi 0, %s344
      %s359 = sphi 0, %s345
      %s363 = sphi 0, %s363
      %s365 = sphi 0, %s363
      %s366 = sphi 0, %s365
      %s380 = sphi 0, %s366
      %s386 = sphi 0, %s388
      %s389 = sphi 0, %s386
      %s390 = sphi 0, %s389
      %s406 = sphi 0, %s390
      %s412 = sphi 0, %s414
      %s415 = sphi 0, %s412
      %s416 = sphi 0, %s415
      %s432 = sphi 0, %s416
      %s438 = sphi 0, %s440
      %s441 = sphi 0, %s438
      %s442 = sphi 0, %s441
      %s458 = sphi 0, %s442
      %s462 = sphi 0, %s462
      %s464 = sphi 0, %s462
      %s465 = sphi 0, %s464
      %s479 = sphi 0, %s465
      %s483 = sphi 0, %s483
      %s485 = sphi 0, %s483
      %s486 = sphi 0, %s485
      %s500 = sphi 0, %s486
    $region4: #{tpu_custom_call.1} parent=1 // loop_header_branch
      %43 = sbr.rel (%p41) target = $region8
    $region5: #{tpu_custom_call.1} parent=1 // loop_body
      %s45 = ssub.s32 %s40, 1
      %s46 = ssub.s32 %s40, 2
      %s47 = sadd.s32 %s40, 1
      %s49 = sadd.s32 %s48, 1
      %p52 = scmp.eq.s32.totalorder %s40, 3
      %p53 = scmp.ne.s32.totalorder %s48, %s50
      %p54 = scmp.eq.s32.totalorder %s40, 0
      %p55 = por %p53, %p54
      %p56 = scmp.ne.s32.totalorder %s48, %s50
      %p57 = scmp.eq.s32.totalorder %s45, 3
      %p58 = por %p56, %p57
      %p59 = scmp.ne.s32.totalorder %s50, %s51
      %p60 = scmp.eq.s32.totalorder %s45, 0
      %p61 = por %p59, %p60
      %p62 = scmp.ne.s32.totalorder %s50, %s51
      %p63 = scmp.eq.s32.totalorder %s46, 3
      %p64 = por %p62, %p63
      %p66 = scmp.ne.s32.totalorder %s51, %s65
      %p67 = scmp.eq.s32.totalorder %s46, 0
      %p68 = por %p66, %p67
      %s70 = sadd.s32 %s69, 1
      %p73 = scmp.eq.s32.totalorder %s40, 3
      %p74 = scmp.ne.s32.totalorder %s69, %s71
      %p75 = scmp.eq.s32.totalorder %s40, 0
      %p76 = por %p74, %p75
      %p77 = scmp.ne.s32.totalorder %s69, %s71
      %p78 = scmp.eq.s32.totalorder %s45, 3
      %p79 = por %p77, %p78
      %p80 = scmp.ne.s32.totalorder %s71, %s72
      %p81 = scmp.eq.s32.totalorder %s45, 0
      %p82 = por %p80, %p81
      %p83 = scmp.ne.s32.totalorder %s71, %s72
      %p84 = scmp.eq.s32.totalorder %s46, 3
      %p85 = por %p83, %p84
      %p87 = scmp.ne.s32.totalorder %s72, %s86
      %p88 = scmp.eq.s32.totalorder %s46, 0
      %p89 = por %p87, %p88
      %s91 = sadd.s32 %s90, 1
      %p94 = scmp.eq.s32.totalorder %s40, 3
      %p95 = scmp.ne.s32.totalorder %s90, %s92
      %p96 = scmp.eq.s32.totalorder %s40, 0
      %p97 = por %p95, %p96
      %p98 = scmp.ne.s32.totalorder %s90, %s92
      %p99 = scmp.eq.s32.totalorder %s45, 3
      %p100 = por %p98, %p99
      %p101 = scmp.ne.s32.totalorder %s92, %s93
      %p102 = scmp.eq.s32.totalorder %s45, 0
      %p103 = por %p101, %p102
      %p104 = scmp.ne.s32.totalorder %s92, %s93
      %p105 = scmp.eq.s32.totalorder %s46, 3
      %p106 = por %p104, %p105
      %p108 = scmp.ne.s32.totalorder %s93, %s107
      %p109 = scmp.eq.s32.totalorder %s46, 0
      %p110 = por %p108, %p109
      %s112 = sadd.s32 %s111, 1
      %p115 = scmp.eq.s32.totalorder %s40, 3
      %p116 = scmp.ne.s32.totalorder %s111, %s113
      %p117 = scmp.eq.s32.totalorder %s40, 0
      %p118 = por %p116, %p117
      %p119 = scmp.ne.s32.totalorder %s111, %s113
      %p120 = scmp.eq.s32.totalorder %s45, 3
      %p121 = por %p119, %p120
      %p122 = scmp.ne.s32.totalorder %s113, %s114
      %p123 = scmp.eq.s32.totalorder %s45, 0
      %p124 = por %p122, %p123
      %p125 = scmp.ne.s32.totalorder %s113, %s114
      %p126 = scmp.eq.s32.totalorder %s46, 3
      %p127 = por %p125, %p126
      %p129 = scmp.ne.s32.totalorder %s114, %s128
      %p130 = scmp.eq.s32.totalorder %s46, 0
      %p131 = por %p129, %p130
      %s133 = sadd.s32 %s132, 1
      %p136 = scmp.eq.s32.totalorder %s40, 3
      %p137 = scmp.ne.s32.totalorder %s132, %s134
      %p138 = scmp.eq.s32.totalorder %s40, 0
      %p139 = por %p137, %p138
      %p140 = scmp.ne.s32.totalorder %s132, %s134
      %p141 = scmp.eq.s32.totalorder %s45, 3
      %p142 = por %p140, %p141
      %p143 = scmp.ne.s32.totalorder %s134, %s135
      %p144 = scmp.eq.s32.totalorder %s45, 0
      %p145 = por %p143, %p144
      %p146 = scmp.ne.s32.totalorder %s134, %s135
      %p147 = scmp.eq.s32.totalorder %s46, 3
      %p148 = por %p146, %p147
      %p150 = scmp.ne.s32.totalorder %s135, %s149
      %p151 = scmp.eq.s32.totalorder %s46, 0
      %p152 = por %p150, %p151
      %s154 = sadd.s32 %s153, 1
      %p157 = scmp.eq.s32.totalorder %s40, 3
      %p158 = scmp.ne.s32.totalorder %s153, %s155
      %p159 = scmp.eq.s32.totalorder %s40, 0
      %p160 = por %p158, %p159
      %p161 = scmp.ne.s32.totalorder %s153, %s155
      %p162 = scmp.eq.s32.totalorder %s45, 3
      %p163 = por %p161, %p162
      %p164 = scmp.ne.s32.totalorder %s155, %s156
      %p165 = scmp.eq.s32.totalorder %s45, 0
      %p166 = por %p164, %p165
      %p167 = scmp.ne.s32.totalorder %s155, %s156
      %p168 = scmp.eq.s32.totalorder %s46, 3
      %p169 = por %p167, %p168
      %p171 = scmp.ne.s32.totalorder %s156, %s170
      %p172 = scmp.eq.s32.totalorder %s46, 0
      %p173 = por %p171, %p172
      %s175 = sadd.s32 %s174, 1
      %p178 = scmp.eq.s32.totalorder %s40, 3
      %p179 = scmp.ne.s32.totalorder %s174, %s176
      %p180 = scmp.eq.s32.totalorder %s40, 0
      %p181 = por %p179, %p180
      %p182 = scmp.ne.s32.totalorder %s174, %s176
      %p183 = scmp.eq.s32.totalorder %s45, 3
      %p184 = por %p182, %p183
      %p185 = scmp.ne.s32.totalorder %s176, %s177
      %p186 = scmp.eq.s32.totalorder %s45, 0
      %p187 = por %p185, %p186
      %p188 = scmp.ne.s32.totalorder %s176, %s177
      %p189 = scmp.eq.s32.totalorder %s46, 3
      %p190 = por %p188, %p189
      %p192 = scmp.ne.s32.totalorder %s177, %s191
      %p193 = scmp.eq.s32.totalorder %s46, 0
      %p194 = por %p192, %p193
      %s196 = sadd.s32 %s195, 1
      %p199 = scmp.eq.s32.totalorder %s40, 3
      %p200 = scmp.ne.s32.totalorder %s195, %s197
      %p201 = scmp.eq.s32.totalorder %s40, 0
      %p202 = por %p200, %p201
      %p203 = scmp.ne.s32.totalorder %s195, %s197
      %p204 = scmp.eq.s32.totalorder %s45, 3
      %p205 = por %p203, %p204
      %p206 = scmp.ne.s32.totalorder %s197, %s198
      %p207 = scmp.eq.s32.totalorder %s45, 0
      %p208 = por %p206, %p207
      %p209 = scmp.ne.s32.totalorder %s197, %s198
      %p210 = scmp.eq.s32.totalorder %s46, 3
      %p211 = por %p209, %p210
      %p213 = scmp.ne.s32.totalorder %s198, %s212
      %p214 = scmp.eq.s32.totalorder %s46, 0
      %p215 = por %p213, %p214
      %s217 = sadd.s32 %s216, 1
      %p220 = scmp.eq.s32.totalorder %s40, 3
      %p221 = scmp.ne.s32.totalorder %s216, %s218
      %p222 = scmp.eq.s32.totalorder %s40, 0
      %p223 = por %p221, %p222
      %p224 = scmp.ne.s32.totalorder %s216, %s218
      %p225 = scmp.eq.s32.totalorder %s45, 3
      %p226 = por %p224, %p225
      %p227 = scmp.ne.s32.totalorder %s218, %s219
      %p228 = scmp.eq.s32.totalorder %s45, 0
      %p229 = por %p227, %p228
      %p230 = scmp.ne.s32.totalorder %s218, %s219
      %p231 = scmp.eq.s32.totalorder %s46, 3
      %p232 = por %p230, %p231
      %p234 = scmp.ne.s32.totalorder %s219, %s233
      %p235 = scmp.eq.s32.totalorder %s46, 0
      %p236 = por %p234, %p235
      %s238 = sadd.s32 %s237, 1
      %p241 = scmp.eq.s32.totalorder %s40, 3
      %p242 = scmp.ne.s32.totalorder %s237, %s239
      %p243 = scmp.eq.s32.totalorder %s40, 0
      %p244 = por %p242, %p243
      %p245 = scmp.ne.s32.totalorder %s237, %s239
      %p246 = scmp.eq.s32.totalorder %s45, 3
      %p247 = por %p245, %p246
      %p248 = scmp.ne.s32.totalorder %s239, %s240
      %p249 = scmp.eq.s32.totalorder %s45, 0
      %p250 = por %p248, %p249
      %p251 = scmp.ne.s32.totalorder %s239, %s240
      %p252 = scmp.eq.s32.totalorder %s46, 3
      %p253 = por %p251, %p252
      %p255 = scmp.ne.s32.totalorder %s240, %s254
      %p256 = scmp.eq.s32.totalorder %s46, 0
      %p257 = por %p255, %p256
      %s259 = sadd.s32 %s258, 1
      %p262 = scmp.eq.s32.totalorder %s40, 3
      %p263 = scmp.ne.s32.totalorder %s258, %s260
      %p264 = scmp.eq.s32.totalorder %s40, 0
      %p265 = por %p263, %p264
      %p266 = scmp.ne.s32.totalorder %s258, %s260
      %p267 = scmp.eq.s32.totalorder %s45, 3
      %p268 = por %p266, %p267
      %p269 = scmp.ne.s32.totalorder %s260, %s261
      %p270 = scmp.eq.s32.totalorder %s45, 0
      %p271 = por %p269, %p270
      %p272 = scmp.ne.s32.totalorder %s260, %s261
      %p273 = scmp.eq.s32.totalorder %s46, 3
      %p274 = por %p272, %p273
      %p276 = scmp.ne.s32.totalorder %s261, %s275
      %p277 = scmp.eq.s32.totalorder %s46, 0
      %p278 = por %p276, %p277
      %s280 = sadd.s32 %s279, 1
      %p283 = scmp.eq.s32.totalorder %s40, 3
      %p284 = scmp.ne.s32.totalorder %s279, %s281
      %p285 = scmp.eq.s32.totalorder %s40, 0
      %p286 = por %p284, %p285
      %p287 = scmp.ne.s32.totalorder %s279, %s281
      %p288 = scmp.eq.s32.totalorder %s45, 3
      %p289 = por %p287, %p288
      %p290 = scmp.ne.s32.totalorder %s281, %s282
      %p291 = scmp.eq.s32.totalorder %s45, 0
      %p292 = por %p290, %p291
      %p293 = scmp.ne.s32.totalorder %s281, %s282
      %p294 = scmp.eq.s32.totalorder %s46, 3
      %p295 = por %p293, %p294
      %p297 = scmp.ne.s32.totalorder %s282, %s296
      %p298 = scmp.eq.s32.totalorder %s46, 0
      %p299 = por %p297, %p298
      %s301 = sadd.s32 %s300, 1
      %p304 = scmp.eq.s32.totalorder %s40, 3
      %p305 = scmp.ne.s32.totalorder %s300, %s302
      %p306 = scmp.eq.s32.totalorder %s40, 0
      %p307 = por %p305, %p306
      %p308 = scmp.ne.s32.totalorder %s300, %s302
      %p309 = scmp.eq.s32.totalorder %s45, 3
      %p310 = por %p308, %p309
      %p311 = scmp.ne.s32.totalorder %s302, %s303
      %p312 = scmp.eq.s32.totalorder %s45, 0
      %p313 = por %p311, %p312
      %p314 = scmp.ne.s32.totalorder %s302, %s303
      %p315 = scmp.eq.s32.totalorder %s46, 3
      %p316 = por %p314, %p315
      %p318 = scmp.ne.s32.totalorder %s303, %s317
      %p319 = scmp.eq.s32.totalorder %s46, 0
      %p320 = por %p318, %p319
      %s322 = sadd.s32 %s321, 1
      %p325 = scmp.eq.s32.totalorder %s40, 3
      %p326 = scmp.ne.s32.totalorder %s321, %s323
      %p327 = scmp.eq.s32.totalorder %s40, 0
      %p328 = por %p326, %p327
      %p329 = scmp.ne.s32.totalorder %s321, %s323
      %p330 = scmp.eq.s32.totalorder %s45, 3
      %p331 = por %p329, %p330
      %p332 = scmp.ne.s32.totalorder %s323, %s324
      %p333 = scmp.eq.s32.totalorder %s45, 0
      %p334 = por %p332, %p333
      %p335 = scmp.ne.s32.totalorder %s323, %s324
      %p336 = scmp.eq.s32.totalorder %s46, 3
      %p337 = por %p335, %p336
      %p339 = scmp.ne.s32.totalorder %s324, %s338
      %p340 = scmp.eq.s32.totalorder %s46, 0
      %p341 = por %p339, %p340
      %s343 = sadd.s32 %s342, 1
      %p346 = scmp.eq.s32.totalorder %s40, 3
      %p347 = scmp.ne.s32.totalorder %s342, %s344
      %p348 = scmp.eq.s32.totalorder %s40, 0
      %p349 = por %p347, %p348
      %p350 = scmp.ne.s32.totalorder %s342, %s344
      %p351 = scmp.eq.s32.totalorder %s45, 3
      %p352 = por %p350, %p351
      %p353 = scmp.ne.s32.totalorder %s344, %s345
      %p354 = scmp.eq.s32.totalorder %s45, 0
      %p355 = por %p353, %p354
      %p356 = scmp.ne.s32.totalorder %s344, %s345
      %p357 = scmp.eq.s32.totalorder %s46, 3
      %p358 = por %p356, %p357
      %p360 = scmp.ne.s32.totalorder %s345, %s359
      %p361 = scmp.eq.s32.totalorder %s46, 0
      %p362 = por %p360, %p361
      %s364 = sadd.s32 %s363, 1
      %p367 = scmp.eq.s32.totalorder %s40, 3
      %p368 = scmp.ne.s32.totalorder %s363, %s365
      %p369 = scmp.eq.s32.totalorder %s40, 0
      %p370 = por %p368, %p369
      %p371 = scmp.ne.s32.totalorder %s363, %s365
      %p372 = scmp.eq.s32.totalorder %s45, 3
      %p373 = por %p371, %p372
      %p374 = scmp.ne.s32.totalorder %s365, %s366
      %p375 = scmp.eq.s32.totalorder %s45, 0
      %p376 = por %p374, %p375
      %p377 = scmp.ne.s32.totalorder %s365, %s366
      %p378 = scmp.eq.s32.totalorder %s46, 3
      %p379 = por %p377, %p378
      %p381 = scmp.ne.s32.totalorder %s366, %s380
      %p382 = scmp.eq.s32.totalorder %s46, 0
      %p383 = por %p381, %p382
      %s384 = ssub.s32 %s40, %s47
      %p385 = scmp.eq.s32.totalorder %s384, 0
      %s387 = sadd.s32 %s386, 1
      %s388 = scalar_select %p385, %s386, %s387
      %p391 = pneg %p385
      %p392 = scmp.eq.s32.totalorder %s40, 3
      %p393 = por %p391, %p392
      %p394 = scmp.ne.s32.totalorder %s386, %s389
      %p395 = scmp.eq.s32.totalorder %s40, 0
      %p396 = por %p394, %p395
      %p397 = scmp.ne.s32.totalorder %s386, %s389
      %p398 = scmp.eq.s32.totalorder %s45, 3
      %p399 = por %p397, %p398
      %p400 = scmp.ne.s32.totalorder %s389, %s390
      %p401 = scmp.eq.s32.totalorder %s45, 0
      %p402 = por %p400, %p401
      %p403 = scmp.ne.s32.totalorder %s389, %s390
      %p404 = scmp.eq.s32.totalorder %s46, 3
      %p405 = por %p403, %p404
      %p407 = scmp.ne.s32.totalorder %s390, %s406
      %p408 = scmp.eq.s32.totalorder %s46, 0
      %p409 = por %p407, %p408
      %s410 = ssub.s32 %s40, %s47
      %p411 = scmp.eq.s32.totalorder %s410, 0
      %s413 = sadd.s32 %s412, 1
      %s414 = scalar_select %p411, %s412, %s413
      %p417 = pneg %p411
      %p418 = scmp.eq.s32.totalorder %s40, 3
      %p419 = por %p417, %p418
      %p420 = scmp.ne.s32.totalorder %s412, %s415
      %p421 = scmp.eq.s32.totalorder %s40, 0
      %p422 = por %p420, %p421
      %p423 = scmp.ne.s32.totalorder %s412, %s415
      %p424 = scmp.eq.s32.totalorder %s45, 3
      %p425 = por %p423, %p424
      %p426 = scmp.ne.s32.totalorder %s415, %s416
      %p427 = scmp.eq.s32.totalorder %s45, 0
      %p428 = por %p426, %p427
      %p429 = scmp.ne.s32.totalorder %s415, %s416
      %p430 = scmp.eq.s32.totalorder %s46, 3
      %p431 = por %p429, %p430
      %p433 = scmp.ne.s32.totalorder %s416, %s432
      %p434 = scmp.eq.s32.totalorder %s46, 0
      %p435 = por %p433, %p434
      %s436 = ssub.s32 %s40, %s47
      %p437 = scmp.eq.s32.totalorder %s436, 0
      %s439 = sadd.s32 %s438, 1
      %s440 = scalar_select %p437, %s438, %s439
      %p443 = pneg %p437
      %p444 = scmp.eq.s32.totalorder %s40, 3
      %p445 = por %p443, %p444
      %p446 = scmp.ne.s32.totalorder %s438, %s441
      %p447 = scmp.eq.s32.totalorder %s40, 0
      %p448 = por %p446, %p447
      %p449 = scmp.ne.s32.totalorder %s438, %s441
      %p450 = scmp.eq.s32.totalorder %s45, 3
      %p451 = por %p449, %p450
      %p452 = scmp.ne.s32.totalorder %s441, %s442
      %p453 = scmp.eq.s32.totalorder %s45, 0
      %p454 = por %p452, %p453
      %p455 = scmp.ne.s32.totalorder %s441, %s442
      %p456 = scmp.eq.s32.totalorder %s46, 3
      %p457 = por %p455, %p456
      %p459 = scmp.ne.s32.totalorder %s442, %s458
      %p460 = scmp.eq.s32.totalorder %s46, 0
      %p461 = por %p459, %p460
      %s463 = sadd.s32 %s462, 1
      %p466 = scmp.eq.s32.totalorder %s40, 3
      %p467 = scmp.ne.s32.totalorder %s462, %s464
      %p468 = scmp.eq.s32.totalorder %s40, 0
      %p469 = por %p467, %p468
      %p470 = scmp.ne.s32.totalorder %s462, %s464
      %p471 = scmp.eq.s32.totalorder %s45, 3
      %p472 = por %p470, %p471
      %p473 = scmp.ne.s32.totalorder %s464, %s465
      %p474 = scmp.eq.s32.totalorder %s45, 0
      %p475 = por %p473, %p474
      %p476 = scmp.ne.s32.totalorder %s464, %s465
      %p477 = scmp.eq.s32.totalorder %s46, 3
      %p478 = por %p476, %p477
      %p480 = scmp.ne.s32.totalorder %s465, %s479
      %p481 = scmp.eq.s32.totalorder %s46, 0
      %p482 = por %p480, %p481
      %s484 = sadd.s32 %s483, 1
      %p487 = scmp.eq.s32.totalorder %s40, 3
      %p488 = scmp.ne.s32.totalorder %s483, %s485
      %p489 = scmp.eq.s32.totalorder %s40, 0
      %p490 = por %p488, %p489
      %p491 = scmp.ne.s32.totalorder %s483, %s485
      %p492 = scmp.eq.s32.totalorder %s45, 3
      %p493 = por %p491, %p492
      %p494 = scmp.ne.s32.totalorder %s485, %s486
      %p495 = scmp.eq.s32.totalorder %s45, 0
      %p496 = por %p494, %p495
      %p497 = scmp.ne.s32.totalorder %s485, %s486
      %p498 = scmp.eq.s32.totalorder %s46, 3
      %p499 = por %p497, %p498
      %p501 = scmp.ne.s32.totalorder %s486, %s500
      %p502 = scmp.eq.s32.totalorder %s46, 0
      %p503 = por %p501, %p502
      %p504 = scmp.le.s32.totalorder 1, %s40
      %p505 = scmp.lt.s32.totalorder %s40, 5
      %p506 = pnand %p504, %p505
      %p507 = pneg %p506
      // Predicated region
      $region9: #{tpu_custom_call.1} parent=5 // pred_check
        _
      $region10: #{tpu_custom_call.1} parent=5 // pred_check_branch
        %509 = sbr.rel (%p506) target = $region12
      $region11: #{tpu_custom_call.1} parent=5 // pred_region
        %s510 = ssub.s32 %s40, 1
        // Predicated region
        $region13: #{tpu_custom_call.1} parent=11 // pred_check
          %p511 = pneg %p61
        $region14: #{tpu_custom_call.1} parent=11 // pred_check_branch
          %513 = sbr.rel (%p511) target = $region16
        $region15: #{tpu_custom_call.1} parent=11 // pred_region
          %515 = vsyncadd [#allocation6], 0
          %s517 = sshll.u32 %s0, 4
          %s518 = int_to_ptr.hbm [resolvable:$true] %s517
          %s519 = sshll.u32 [#allocation5], 4
          %s520 = int_to_ptr.vmem [resolvable:$true] %s519
          %522 = dma.hbm_to_vmem [thread:$0]  %s518, 64, %s520, [#allocation6]
        $region16: #{tpu_custom_call.1} parent=11 // pred_fallthru
          _
        // Predicated region
        $region17: #{tpu_custom_call.1} parent=11 // pred_check
          %p523 = pneg %p82
        $region18: #{tpu_custom_call.1} parent=11 // pred_check_branch
          %525 = sbr.rel (%p523) target = $region20
        $region19: #{tpu_custom_call.1} parent=11 // pred_region
          %527 = vsyncadd [#allocation9], 0
          %s529 = sshll.u32 %s1, 4
          %s530 = int_to_ptr.hbm [resolvable:$true] %s529
          %s531 = sshll.u32 [#allocation8], 4
          %s532 = int_to_ptr.vmem [resolvable:$true] %s531
          %534 = dma.hbm_to_vmem [thread:$0]  %s530, 64, %s532, [#allocation9]
        $region20: #{tpu_custom_call.1} parent=11 // pred_fallthru
          _
        // Predicated region
        $region21: #{tpu_custom_call.1} parent=11 // pred_check
          %p535 = pneg %p103
        $region22: #{tpu_custom_call.1} parent=11 // pred_check_branch
          %537 = sbr.rel (%p535) target = $region24
        $region23: #{tpu_custom_call.1} parent=11 // pred_region
          %539 = vsyncadd [#allocation9], 0
          %s540 = sshll.u32 %s2, 4
          %s541 = int_to_ptr.hbm [resolvable:$true] %s540
          %s542 = sshll.u32 [#allocation10], 4
          %s543 = int_to_ptr.vmem [resolvable:$true] %s542
          %548 = dma.hbm_to_vmem [thread:$0]  %s541, 1024, %s543, [#allocation9], 64, 64, 4
        $region24: #{tpu_custom_call.1} parent=11 // pred_fallthru
          _
        // Predicated region
        $region25: #{tpu_custom_call.1} parent=11 // pred_check
          %p549 = pneg %p124
        $region26: #{tpu_custom_call.1} parent=11 // pred_check_branch
          %551 = sbr.rel (%p549) target = $region28
        $region27: #{tpu_custom_call.1} parent=11 // pred_region
          %553 = vsyncadd [#allocation12], 0
          %s555 = sshll.u32 %s3, 4
          %s556 = int_to_ptr.hbm [resolvable:$true] %s555
          %s557 = sshll.u32 [#allocation11], 4
          %s558 = int_to_ptr.vmem [resolvable:$true] %s557
          %560 = dma.hbm_to_vmem [thread:$0]  %s556, 16, %s558, [#allocation12]
        $region28: #{tpu_custom_call.1} parent=11 // pred_fallthru
          _
        // Predicated region
        $region29: #{tpu_custom_call.1} parent=11 // pred_check
          %p561 = pneg %p145
        $region30: #{tpu_custom_call.1} parent=11 // pred_check_branch
          %563 = sbr.rel (%p561) target = $region32
        $region31: #{tpu_custom_call.1} parent=11 // pred_region
          %565 = vsyncadd [#allocation12], 0
          %s566 = sshll.u32 %s4, 4
          %s567 = int_to_ptr.hbm [resolvable:$true] %s566
          %s568 = sshll.u32 [#allocation13], 4
          %s569 = int_to_ptr.vmem [resolvable:$true] %s568
          %574 = dma.hbm_to_vmem [thread:$0]  %s567, 4096, %s569, [#allocation12], 128, 128, 8
        $region32: #{tpu_custom_call.1} parent=11 // pred_fallthru
          _
        // Predicated region
        $region33: #{tpu_custom_call.1} parent=11 // pred_check
          %p575 = pneg %p166
        $region34: #{tpu_custom_call.1} parent=11 // pred_check_branch
          %577 = sbr.rel (%p575) target = $region36
        $region35: #{tpu_custom_call.1} parent=11 // pred_region
          %579 = vsyncadd [#allocation15], 0
          %s581 = sshll.u32 %s5, 4
          %s582 = int_to_ptr.hbm [resolvable:$true] %s581
          %s583 = sshll.u32 [#allocation14], 4
          %s584 = int_to_ptr.vmem [resolvable:$true] %s583
          %586 = dma.hbm_to_vmem [thread:$0]  %s582, 32, %s584, [#allocation15]
        $region36: #{tpu_custom_call.1} parent=11 // pred_fallthru
          _
        // Predicated region
        $region37: #{tpu_custom_call.1} parent=11 // pred_check
          %p587 = pneg %p187
        $region38: #{tpu_custom_call.1} parent=11 // pred_check_branch
          %589 = sbr.rel (%p587) target = $region40
        $region39: #{tpu_custom_call.1} parent=11 // pred_region
          %591 = vsyncadd [#allocation15], 0
          %s592 = sshll.u32 %s6, 4
          %s593 = int_to_ptr.hbm [resolvable:$true] %s592
          %s594 = sshll.u32 [#allocation16], 4
          %s595 = int_to_ptr.vmem [resolvable:$true] %s594
          %600 = dma.hbm_to_vmem [thread:$0]  %s593, 1024, %s595, [#allocation15], 64, 64, 4
        $region40: #{tpu_custom_call.1} parent=11 // pred_fallthru
          _
        // Predicated region
        $region41: #{tpu_custom_call.1} parent=11 // pred_check
          %p601 = pneg %p208
        $region42: #{tpu_custom_call.1} parent=11 // pred_check_branch
          %603 = sbr.rel (%p601) target = $region44
        $region43: #{tpu_custom_call.1} parent=11 // pred_region
          %605 = vsyncadd [#allocation18], 0
          %s606 = sshll.u32 %s7, 4
          %s607 = int_to_ptr.hbm [resolvable:$true] %s606
          %s608 = sshll.u32 [#allocation17], 4
          %s609 = int_to_ptr.vmem [resolvable:$true] %s608
          %614 = dma.hbm_to_vmem [thread:$0]  %s607, 1024, %s609, [#allocation18], 64, 64, 4
        $region44: #{tpu_custom_call.1} parent=11 // pred_fallthru
          _
        // Predicated region
        $region45: #{tpu_custom_call.1} parent=11 // pred_check
          %p615 = pneg %p229
        $region46: #{tpu_custom_call.1} parent=11 // pred_check_branch
          %617 = sbr.rel (%p615) target = $region48
        $region47: #{tpu_custom_call.1} parent=11 // pred_region
          %619 = vsyncadd [#allocation18], 0
          %s621 = sshll.u32 %s8, 4
          %s622 = int_to_ptr.hbm [resolvable:$true] %s621
          %s623 = sshll.u32 [#allocation19], 4
          %s624 = int_to_ptr.vmem [resolvable:$true] %s623
          %626 = dma.hbm_to_vmem [thread:$0]  %s622, 16, %s624, [#allocation18]
        $region48: #{tpu_custom_call.1} parent=11 // pred_fallthru
          _
        // Predicated region
        $region49: #{tpu_custom_call.1} parent=11 // pred_check
          %p627 = pneg %p250
        $region50: #{tpu_custom_call.1} parent=11 // pred_check_branch
          %629 = sbr.rel (%p627) target = $region52
        $region51: #{tpu_custom_call.1} parent=11 // pred_region
          %631 = vsyncadd [#allocation21], 0
          %s633 = sshll.u32 %s9, 4
          %s634 = int_to_ptr.hbm [resolvable:$true] %s633
          %s635 = sshll.u32 [#allocation20], 4
          %s636 = int_to_ptr.vmem [resolvable:$true] %s635
          %638 = dma.hbm_to_vmem [thread:$0]  %s634, 16, %s636, [#allocation21]
        $region52: #{tpu_custom_call.1} parent=11 // pred_fallthru
          _
        // Predicated region
        $region53: #{tpu_custom_call.1} parent=11 // pred_check
          %p639 = pneg %p271
        $region54: #{tpu_custom_call.1} parent=11 // pred_check_branch
          %641 = sbr.rel (%p639) target = $region56
        $region55: #{tpu_custom_call.1} parent=11 // pred_region
          %643 = vsyncadd [#allocation21], 0
          %s644 = sshll.u32 %s10, 4
          %s645 = int_to_ptr.hbm [resolvable:$true] %s644
          %s646 = sshll.u32 [#allocation22], 4
          %s647 = int_to_ptr.vmem [resolvable:$true] %s646
          %652 = dma.hbm_to_vmem [thread:$0]  %s645, 4096, %s647, [#allocation21], 128, 128, 8
        $region56: #{tpu_custom_call.1} parent=11 // pred_fallthru
          _
        // Predicated region
        $region57: #{tpu_custom_call.1} parent=11 // pred_check
          %p653 = pneg %p292
        $region58: #{tpu_custom_call.1} parent=11 // pred_check_branch
          %655 = sbr.rel (%p653) target = $region60
        $region59: #{tpu_custom_call.1} parent=11 // pred_region
          %657 = vsyncadd [#allocation24], 0
          %s659 = sshll.u32 %s11, 4
          %s660 = int_to_ptr.hbm [resolvable:$true] %s659
          %s661 = sshll.u32 [#allocation23], 4
          %s662 = int_to_ptr.vmem [resolvable:$true] %s661
          %664 = dma.hbm_to_vmem [thread:$0]  %s660, 32, %s662, [#allocation24]
        $region60: #{tpu_custom_call.1} parent=11 // pred_fallthru
          _
        // Predicated region
        $region61: #{tpu_custom_call.1} parent=11 // pred_check
          %p665 = pneg %p313
        $region62: #{tpu_custom_call.1} parent=11 // pred_check_branch
          %667 = sbr.rel (%p665) target = $region64
        $region63: #{tpu_custom_call.1} parent=11 // pred_region
          %669 = vsyncadd [#allocation24], 0
          %s670 = sshll.u32 %s12, 4
          %s671 = int_to_ptr.hbm [resolvable:$true] %s670
          %s672 = sshll.u32 [#allocation25], 4
          %s673 = int_to_ptr.vmem [resolvable:$true] %s672
          %678 = dma.hbm_to_vmem [thread:$0]  %s671, 1024, %s673, [#allocation24], 64, 64, 4
        $region64: #{tpu_custom_call.1} parent=11 // pred_fallthru
          _
        // Predicated region
        $region65: #{tpu_custom_call.1} parent=11 // pred_check
          %p679 = pneg %p334
        $region66: #{tpu_custom_call.1} parent=11 // pred_check_branch
          %681 = sbr.rel (%p679) target = $region68
        $region67: #{tpu_custom_call.1} parent=11 // pred_region
          %683 = vsyncadd [#allocation27], 0
          %s684 = sshll.u32 %s13, 4
          %s685 = int_to_ptr.hbm [resolvable:$true] %s684
          %s686 = sshll.u32 [#allocation26], 4
          %s687 = int_to_ptr.vmem [resolvable:$true] %s686
          %692 = dma.hbm_to_vmem [thread:$0]  %s685, 1024, %s687, [#allocation27], 64, 64, 4
        $region68: #{tpu_custom_call.1} parent=11 // pred_fallthru
          _
        // Predicated region
        $region69: #{tpu_custom_call.1} parent=11 // pred_check
          %p693 = pneg %p355
        $region70: #{tpu_custom_call.1} parent=11 // pred_check_branch
          %695 = sbr.rel (%p693) target = $region72
        $region71: #{tpu_custom_call.1} parent=11 // pred_region
          %697 = vsyncadd [#allocation27], 0
          %s699 = sshll.u32 %s14, 4
          %s700 = int_to_ptr.hbm [resolvable:$true] %s699
          %s701 = sshll.u32 [#allocation28], 4
          %s702 = int_to_ptr.vmem [resolvable:$true] %s701
          %704 = dma.hbm_to_vmem [thread:$0]  %s700, 16, %s702, [#allocation27]
        $region72: #{tpu_custom_call.1} parent=11 // pred_fallthru
          _
        // Predicated region
        $region73: #{tpu_custom_call.1} parent=11 // pred_check
          %p705 = pneg %p376
        $region74: #{tpu_custom_call.1} parent=11 // pred_check_branch
          %707 = sbr.rel (%p705) target = $region76
        $region75: #{tpu_custom_call.1} parent=11 // pred_region
          %709 = vsyncadd [#allocation30], 0
          %s711 = sshll.u32 %s15, 4
          %s712 = int_to_ptr.hbm [resolvable:$true] %s711
          %s713 = sshll.u32 [#allocation29], 4
          %s714 = int_to_ptr.vmem [resolvable:$true] %s713
          %716 = dma.hbm_to_vmem [thread:$0]  %s712, 16, %s714, [#allocation30]
        $region76: #{tpu_custom_call.1} parent=11 // pred_fallthru
          _
      $region12: #{tpu_custom_call.1} parent=5 // pred_fallthru
        _
      %p717 = scmp.lt.s32.totalorder %s40, 4
      // Predicated region
      $region77: #{tpu_custom_call.1} parent=5 // pred_check
        %p718 = pneg %p717
      $region78: #{tpu_custom_call.1} parent=5 // pred_check_branch
        %720 = sbr.rel (%p718) target = $region80
      $region79: #{tpu_custom_call.1} parent=5 // pred_region
        // Predicated region
        $region81: #{tpu_custom_call.1} parent=79 // pred_check
          %p721 = pneg %p396
        $region82: #{tpu_custom_call.1} parent=79 // pred_check_branch
          %723 = sbr.rel (%p721) target = $region84
        $region83: #{tpu_custom_call.1} parent=79 // pred_region
          %s724 = sand.u32 %s40, 1
          %s725 = scalar_lea.sflag [#allocation6], %s724
          %s726 = sand.u32 %s386, 1
          %s727 = smul.addr %s726, 640
          %s728 = scalar_lea.vmem [#allocation31], %s727
          %s729 = smul.u32 10, %s40
          %731 = vsyncadd %s725, 0
          %s732 = smul.addr %s729, 4
          %s733 = scalar_lea.hbm %s16, %s732
          %s734 = sshll.u32 %s733, 4
          %s735 = int_to_ptr.hbm [resolvable:$true] %s734
          %s736 = sshll.u32 %s728, 4
          %s737 = int_to_ptr.vmem [resolvable:$true] %s736
          %742 = dma.hbm_to_vmem [thread:$0]  %s735, 10240, %s737, %s725, 2560, 640, 40
        $region84: #{tpu_custom_call.1} parent=79 // pred_fallthru
          _
        // Predicated region
        $region85: #{tpu_custom_call.1} parent=79 // pred_check
          %p743 = pneg %p422
        $region86: #{tpu_custom_call.1} parent=79 // pred_check_branch
          %745 = sbr.rel (%p743) target = $region88
        $region87: #{tpu_custom_call.1} parent=79 // pred_region
          %s746 = sand.u32 %s40, 1
          %s747 = scalar_lea.sflag [#allocation6], %s746
          %s748 = sand.u32 %s412, 1
          %s749 = smul.addr %s748, 10
          %s750 = scalar_lea.vmem [#allocation32], %s749
          %s751 = smul.u32 10, %s40
          %753 = vsyncadd %s747, 0
          %s754 = scalar_lea.hbm %s17, %s751
          %s756 = sshll.u32 %s754, 4
          %s757 = int_to_ptr.hbm [resolvable:$true] %s756
          %s758 = sshll.u32 %s750, 4
          %s759 = int_to_ptr.vmem [resolvable:$true] %s758
          %761 = dma.hbm_to_vmem [thread:$0]  %s757, 160, %s759, %s747
        $region88: #{tpu_custom_call.1} parent=79 // pred_fallthru
          _
      $region80: #{tpu_custom_call.1} parent=5 // pred_fallthru
        _
      %p762 = scmp.le.s32.totalorder 1, %s40
      %p763 = scmp.lt.s32.totalorder %s40, 5
      %p764 = pnand %p762, %p763
      %p765 = pneg %p764
      // Predicated region
      $region89: #{tpu_custom_call.1} parent=5 // pred_check
        _
      $region90: #{tpu_custom_call.1} parent=5 // pred_check_branch
        %767 = sbr.rel (%p764) target = $region92
      $region91: #{tpu_custom_call.1} parent=5 // pred_region
        %s768 = ssub.s32 %s40, 1
        // Predicated region
        $region93: #{tpu_custom_call.1} parent=91 // pred_check
          %p769 = pneg %p61
        $region94: #{tpu_custom_call.1} parent=91 // pred_check_branch
          %771 = sbr.rel (%p769) target = $region96
        $region95: #{tpu_custom_call.1} parent=91 // pred_region
          %773 = dma.done [#allocation6], 64
        $region96: #{tpu_custom_call.1} parent=91 // pred_fallthru
          _
        // Predicated region
        $region97: #{tpu_custom_call.1} parent=91 // pred_check
          %p774 = pneg %p82
        $region98: #{tpu_custom_call.1} parent=91 // pred_check_branch
          %776 = sbr.rel (%p774) target = $region100
        $region99: #{tpu_custom_call.1} parent=91 // pred_region
          %778 = dma.done [#allocation9], 64
        $region100: #{tpu_custom_call.1} parent=91 // pred_fallthru
          _
        // Predicated region
        $region101: #{tpu_custom_call.1} parent=91 // pred_check
          %p779 = pneg %p103
        $region102: #{tpu_custom_call.1} parent=91 // pred_check_branch
          %781 = sbr.rel (%p779) target = $region104
        $region103: #{tpu_custom_call.1} parent=91 // pred_region
          %783 = dma.done [#allocation9], 1024
        $region104: #{tpu_custom_call.1} parent=91 // pred_fallthru
          _
        // Predicated region
        $region105: #{tpu_custom_call.1} parent=91 // pred_check
          %p784 = pneg %p124
        $region106: #{tpu_custom_call.1} parent=91 // pred_check_branch
          %786 = sbr.rel (%p784) target = $region108
        $region107: #{tpu_custom_call.1} parent=91 // pred_region
          %788 = dma.done [#allocation12], 16
        $region108: #{tpu_custom_call.1} parent=91 // pred_fallthru
          _
        // Predicated region
        $region109: #{tpu_custom_call.1} parent=91 // pred_check
          %p789 = pneg %p145
        $region110: #{tpu_custom_call.1} parent=91 // pred_check_branch
          %791 = sbr.rel (%p789) target = $region112
        $region111: #{tpu_custom_call.1} parent=91 // pred_region
          %793 = dma.done [#allocation12], 4096
        $region112: #{tpu_custom_call.1} parent=91 // pred_fallthru
          _
        // Predicated region
        $region113: #{tpu_custom_call.1} parent=91 // pred_check
          %p794 = pneg %p166
        $region114: #{tpu_custom_call.1} parent=91 // pred_check_branch
          %796 = sbr.rel (%p794) target = $region116
        $region115: #{tpu_custom_call.1} parent=91 // pred_region
          %798 = dma.done [#allocation15], 32
        $region116: #{tpu_custom_call.1} parent=91 // pred_fallthru
          _
        // Predicated region
        $region117: #{tpu_custom_call.1} parent=91 // pred_check
          %p799 = pneg %p187
        $region118: #{tpu_custom_call.1} parent=91 // pred_check_branch
          %801 = sbr.rel (%p799) target = $region120
        $region119: #{tpu_custom_call.1} parent=91 // pred_region
          %803 = dma.done [#allocation15], 1024
        $region120: #{tpu_custom_call.1} parent=91 // pred_fallthru
          _
        // Predicated region
        $region121: #{tpu_custom_call.1} parent=91 // pred_check
          %p804 = pneg %p208
        $region122: #{tpu_custom_call.1} parent=91 // pred_check_branch
          %806 = sbr.rel (%p804) target = $region124
        $region123: #{tpu_custom_call.1} parent=91 // pred_region
          %808 = dma.done [#allocation18], 1024
        $region124: #{tpu_custom_call.1} parent=91 // pred_fallthru
          _
        // Predicated region
        $region125: #{tpu_custom_call.1} parent=91 // pred_check
          %p809 = pneg %p229
        $region126: #{tpu_custom_call.1} parent=91 // pred_check_branch
          %811 = sbr.rel (%p809) target = $region128
        $region127: #{tpu_custom_call.1} parent=91 // pred_region
          %813 = dma.done [#allocation18], 16
        $region128: #{tpu_custom_call.1} parent=91 // pred_fallthru
          _
        // Predicated region
        $region129: #{tpu_custom_call.1} parent=91 // pred_check
          %p814 = pneg %p250
        $region130: #{tpu_custom_call.1} parent=91 // pred_check_branch
          %816 = sbr.rel (%p814) target = $region132
        $region131: #{tpu_custom_call.1} parent=91 // pred_region
          %818 = dma.done [#allocation21], 16
        $region132: #{tpu_custom_call.1} parent=91 // pred_fallthru
          _
        // Predicated region
        $region133: #{tpu_custom_call.1} parent=91 // pred_check
          %p819 = pneg %p271
        $region134: #{tpu_custom_call.1} parent=91 // pred_check_branch
          %821 = sbr.rel (%p819) target = $region136
        $region135: #{tpu_custom_call.1} parent=91 // pred_region
          %823 = dma.done [#allocation21], 4096
        $region136: #{tpu_custom_call.1} parent=91 // pred_fallthru
          _
        // Predicated region
        $region137: #{tpu_custom_call.1} parent=91 // pred_check
          %p824 = pneg %p292
        $region138: #{tpu_custom_call.1} parent=91 // pred_check_branch
          %826 = sbr.rel (%p824) target = $region140
        $region139: #{tpu_custom_call.1} parent=91 // pred_region
          %828 = dma.done [#allocation24], 32
        $region140: #{tpu_custom_call.1} parent=91 // pred_fallthru
          _
        // Predicated region
        $region141: #{tpu_custom_call.1} parent=91 // pred_check
          %p829 = pneg %p313
        $region142: #{tpu_custom_call.1} parent=91 // pred_check_branch
          %831 = sbr.rel (%p829) target = $region144
        $region143: #{tpu_custom_call.1} parent=91 // pred_region
          %833 = dma.done [#allocation24], 1024
        $region144: #{tpu_custom_call.1} parent=91 // pred_fallthru
          _
        // Predicated region
        $region145: #{tpu_custom_call.1} parent=91 // pred_check
          %p834 = pneg %p334
        $region146: #{tpu_custom_call.1} parent=91 // pred_check_branch
          %836 = sbr.rel (%p834) target = $region148
        $region147: #{tpu_custom_call.1} parent=91 // pred_region
          %838 = dma.done [#allocation27], 1024
        $region148: #{tpu_custom_call.1} parent=91 // pred_fallthru
          _
        // Predicated region
        $region149: #{tpu_custom_call.1} parent=91 // pred_check
          %p839 = pneg %p355
        $region150: #{tpu_custom_call.1} parent=91 // pred_check_branch
          %841 = sbr.rel (%p839) target = $region152
        $region151: #{tpu_custom_call.1} parent=91 // pred_region
          %843 = dma.done [#allocation27], 16
        $region152: #{tpu_custom_call.1} parent=91 // pred_fallthru
          _
        // Predicated region
        $region153: #{tpu_custom_call.1} parent=91 // pred_check
          %p844 = pneg %p376
        $region154: #{tpu_custom_call.1} parent=91 // pred_check_branch
          %846 = sbr.rel (%p844) target = $region156
        $region155: #{tpu_custom_call.1} parent=91 // pred_region
          %848 = dma.done [#allocation30], 16
        $region156: #{tpu_custom_call.1} parent=91 // pred_fallthru
          _
        %s849 = sand.u32 %s45, 1
        %s850 = scalar_lea.sflag [#allocation6], %s849
        %s851 = sand.u32 %s389, 1
        %s852 = smul.addr %s851, 640
        %s853 = scalar_lea.vmem [#allocation31], %s852
        // Predicated region
        $region157: #{tpu_custom_call.1} parent=91 // pred_check
          %p854 = pneg %p402
        $region158: #{tpu_custom_call.1} parent=91 // pred_check_branch
          %856 = sbr.rel (%p854) target = $region160
        $region159: #{tpu_custom_call.1} parent=91 // pred_region
          %858 = dma.done %s850, 10240
        $region160: #{tpu_custom_call.1} parent=91 // pred_fallthru
          _
        %s859 = sand.u32 %s45, 1
        %s860 = scalar_lea.sflag [#allocation6], %s859
        %s861 = sand.u32 %s415, 1
        %s862 = smul.addr %s861, 10
        %s863 = scalar_lea.vmem [#allocation32], %s862
        // Predicated region
        $region161: #{tpu_custom_call.1} parent=91 // pred_check
          %p864 = pneg %p428
        $region162: #{tpu_custom_call.1} parent=91 // pred_check_branch
          %866 = sbr.rel (%p864) target = $region164
        $region163: #{tpu_custom_call.1} parent=91 // pred_region
          %868 = dma.done %s860, 160
        $region164: #{tpu_custom_call.1} parent=91 // pred_fallthru
          _
        %p869 = pneg %p61
        %p870 = pneg %p58
        %p871 = pneg %p82
        %p872 = pneg %p79
        %p873 = pneg %p103
        %p874 = pneg %p100
        %p875 = pneg %p124
        %p876 = pneg %p121
        %p877 = pneg %p145
        %p878 = pneg %p142
        %p879 = pneg %p166
        %p880 = pneg %p163
        %p881 = pneg %p187
        %p882 = pneg %p184
        %p883 = pneg %p208
        %p884 = pneg %p205
        %p885 = pneg %p229
        %p886 = pneg %p226
        %p887 = pneg %p250
        %p888 = pneg %p247
        %p889 = pneg %p271
        %p890 = pneg %p268
        %p891 = pneg %p292
        %p892 = pneg %p289
        %p893 = pneg %p313
        %p894 = pneg %p310
        %p895 = pneg %p334
        %p896 = pneg %p331
        %p897 = pneg %p355
        %p898 = pneg %p352
        %p899 = pneg %p376
        %p900 = pneg %p373
        %s901 = sand.u32 %s45, 1
        %s902 = scalar_lea.sflag [#allocation6], %s901
        %s903 = sand.u32 %s389, 1
        %s904 = smul.addr %s903, 640
        %s905 = scalar_lea.vmem [#allocation31], %s904
        %p906 = pneg %p402
        %p907 = pneg %p399
        %s908 = sand.u32 %s45, 1
        %s909 = scalar_lea.sflag [#allocation6], %s908
        %s910 = sand.u32 %s415, 1
        %s911 = smul.addr %s910, 10
        %s912 = scalar_lea.vmem [#allocation32], %s911
        %p913 = pneg %p428
        %p914 = pneg %p425
        %p915 = pneg %p454
        %p916 = pneg %p451
        %s917 = sand.u32 %s441, 1
        %s918 = scalar_lea.sflag [#allocation7], %s917
        %s919 = sand.u32 %s441, 1
        %s920 = smul.addr %s919, 80
        %s921 = scalar_lea.vmem [#allocation33], %s920
        %p922 = pneg %p475
        %p923 = pneg %p472
        %p924 = pneg %p496
        %p925 = pneg %p493
        %s926 = smul.u32 10, %s45
        %s927 = smul.u32 10, %s45
        %s928 = smul.u32 10, %s45
        %p929 = scmp.eq.s32.totalorder %s45, 0
        // Predicated region
        $region165: #{tpu_custom_call.1} parent=91 // pred_check
          %p930 = pneg %p929
        $region166: #{tpu_custom_call.1} parent=91 // pred_check_branch
          %932 = sbr.rel (%p930) target = $region168
        $region167: #{tpu_custom_call.1} parent=91 // pred_region
          %v933 = vld [vmem:[#allocation8] sm:$0xf]
          %v934 = vld [vmem:[#allocation10] sm:$0xf]
          %v935 = vld [vmem:[#allocation10 + $0x4] sm:$0xf]
          %v936 = vld [vmem:[#allocation10 + $0x8] sm:$0xf]
          %v937 = vld [vmem:[#allocation10 + $0xc] sm:$0xf]
          %v938 = vld [vmem:[#allocation10 + $0x10] sm:$0xf]
          %v939 = vld [vmem:[#allocation10 + $0x14] sm:$0xf]
          %v940 = vld [vmem:[#allocation10 + $0x18] sm:$0xf]
          %v941 = vld [vmem:[#allocation10 + $0x1c] sm:$0xf]
          %v942 = vld [vmem:[#allocation10 + $0x20] sm:$0xf]
          %v943 = vld [vmem:[#allocation10 + $0x24] sm:$0xf]
          %v944 = vld [vmem:[#allocation10 + $0x28] sm:$0xf]
          %v945 = vld [vmem:[#allocation10 + $0x2c] sm:$0xf]
          %v946 = vld [vmem:[#allocation10 + $0x30] sm:$0xf]
          %v947 = vld [vmem:[#allocation10 + $0x34] sm:$0xf]
          %v948 = vld [vmem:[#allocation10 + $0x38] sm:$0xf]
          %v949 = vld [vmem:[#allocation10 + $0x3c] sm:$0xf]
          %v950 = vld [vmem:[#allocation11] sm:$0x1]
          %v952 = vperm.slane %v950, 0
          %v970 = vunpack.c.l.b16 %v934
          %v971 = vunpack.c.l.b16 %v935
          %v972 = vunpack.c.l.b16 %v936
          %v973 = vunpack.c.l.b16 %v937
          %v974 = vunpack.c.l.b16 %v938
          %v975 = vunpack.c.l.b16 %v939
          %v976 = vunpack.c.l.b16 %v940
          %v977 = vunpack.c.l.b16 %v941
          %v978 = vunpack.c.l.b16 %v942
          %v979 = vunpack.c.l.b16 %v943
          %v980 = vunpack.c.l.b16 %v944
          %v981 = vunpack.c.l.b16 %v945
          %v982 = vunpack.c.l.b16 %v946
          %v983 = vunpack.c.l.b16 %v947
          %v984 = vunpack.c.l.b16 %v948
          %v985 = vunpack.c.l.b16 %v949
          %v986 = vpack.c.b16 %v971, %v970
          %v987 = vpack.c.b16 %v973, %v972
          %v988 = vpack.c.b16 %v975, %v974
          %v989 = vpack.c.b16 %v977, %v976
          %v990 = vpack.c.b16 %v979, %v978
          %v991 = vpack.c.b16 %v981, %v980
          %v992 = vpack.c.b16 %v983, %v982
          %v993 = vpack.c.b16 %v985, %v984
          %1002 = vmatpush.bf16.msra.mxu0 %v993
          %1003 = vmatpush.bf16.msra.mxu0 %v992
          %1004 = vmatpush.bf16.msra.mxu0 %v991
          %1005 = vmatpush.bf16.msra.mxu0 %v990
          %1006 = vmatpush.bf16.msra.mxu0 %v989
          %1007 = vmatpush.bf16.msra.mxu0 %v988
          %1008 = vmatpush.bf16.msra.mxu0 %v987
          %1009 = vmatpush.bf16.msra.mxu0 %v986
          %1010 = vmatmul.bf16.gmra.mxu0 %v933
          %v1011 = vpop.f32.mrf.mxu0
          %v1012 = vadd.f32 %v952, %v1011
          %v1013 = vpop.f32.mrf.mxu0
          %1014 = vdwg.mxu0
          %vm1015 = vcmp.gt.f32.partialorder %v1012, 0.0
          %v1016 = vmin.f32 %v1012, 0.0
          %v1017 = vmul.f32 %v1016, 1.442695
          %v1018 = vpow.pop %v1017
          %v1019 = vsub.f32 %v1018, 1.0
          %v1020 = vsel %vm1015, %v1012, %v1019
          %v1021 = vld [vmem:[#allocation5] sm:$0xf]
          %v1022 = vpack.c.bf16 %v1020, %v1020
          %v1023 = vld [vmem:[#allocation13] sm:$0xff]
          %v1024 = vld [vmem:[#allocation13 + $0x8] sm:$0xff]
          %v1025 = vld [vmem:[#allocation13 + $0x10] sm:$0xff]
          %v1026 = vld [vmem:[#allocation13 + $0x18] sm:$0xff]
          %v1027 = vld [vmem:[#allocation13 + $0x20] sm:$0xff]
          %v1028 = vld [vmem:[#allocation13 + $0x28] sm:$0xff]
          %v1029 = vld [vmem:[#allocation13 + $0x30] sm:$0xff]
          %v1030 = vld [vmem:[#allocation13 + $0x38] sm:$0xff]
          %v1031 = vld [vmem:[#allocation13 + $0x40] sm:$0xff]
          %v1032 = vld [vmem:[#allocation13 + $0x48] sm:$0xff]
          %v1033 = vld [vmem:[#allocation13 + $0x50] sm:$0xff]
          %v1034 = vld [vmem:[#allocation13 + $0x58] sm:$0xff]
          %v1035 = vld [vmem:[#allocation13 + $0x60] sm:$0xff]
          %v1036 = vld [vmem:[#allocation13 + $0x68] sm:$0xff]
          %v1037 = vld [vmem:[#allocation13 + $0x70] sm:$0xff]
          %v1038 = vld [vmem:[#allocation13 + $0x78] sm:$0xff]
          %v1039 = vld [vmem:[#allocation13 + $0x80] sm:$0xff]
          %v1040 = vld [vmem:[#allocation13 + $0x88] sm:$0xff]
          %v1041 = vld [vmem:[#allocation13 + $0x90] sm:$0xff]
          %v1042 = vld [vmem:[#allocation13 + $0x98] sm:$0xff]
          %v1043 = vld [vmem:[#allocation13 + $0xa0] sm:$0xff]
          %v1044 = vld [vmem:[#allocation13 + $0xa8] sm:$0xff]
          %v1045 = vld [vmem:[#allocation13 + $0xb0] sm:$0xff]
          %v1046 = vld [vmem:[#allocation13 + $0xb8] sm:$0xff]
          %v1047 = vld [vmem:[#allocation13 + $0xc0] sm:$0xff]
          %v1048 = vld [vmem:[#allocation13 + $0xc8] sm:$0xff]
          %v1049 = vld [vmem:[#allocation13 + $0xd0] sm:$0xff]
          %v1050 = vld [vmem:[#allocation13 + $0xd8] sm:$0xff]
          %v1051 = vld [vmem:[#allocation13 + $0xe0] sm:$0xff]
          %v1052 = vld [vmem:[#allocation13 + $0xe8] sm:$0xff]
          %v1053 = vld [vmem:[#allocation13 + $0xf0] sm:$0xff]
          %v1054 = vld [vmem:[#allocation13 + $0xf8] sm:$0xff]
          %v1055 = vld [vmem:[#allocation14] sm:$0x3]
          %v1057 = vperm.slane %v1055, 0
          %v1058 = vperm.slane %v1055, 1
          %v1093 = vunpack.c.l.b16 %v1023
          %v1094 = vunpack.c.h.b16 %v1023
          %v1095 = vunpack.c.l.b16 %v1024
          %v1096 = vunpack.c.h.b16 %v1024
          %v1097 = vunpack.c.l.b16 %v1025
          %v1098 = vunpack.c.h.b16 %v1025
          %v1099 = vunpack.c.l.b16 %v1026
          %v1100 = vunpack.c.h.b16 %v1026
          %v1101 = vunpack.c.l.b16 %v1027
          %v1102 = vunpack.c.h.b16 %v1027
          %v1103 = vunpack.c.l.b16 %v1028
          %v1104 = vunpack.c.h.b16 %v1028
          %v1105 = vunpack.c.l.b16 %v1029
          %v1106 = vunpack.c.h.b16 %v1029
          %v1107 = vunpack.c.l.b16 %v1030
          %v1108 = vunpack.c.h.b16 %v1030
          %v1109 = vunpack.c.l.b16 %v1031
          %v1110 = vunpack.c.h.b16 %v1031
          %v1111 = vunpack.c.l.b16 %v1032
          %v1112 = vunpack.c.h.b16 %v1032
          %v1113 = vunpack.c.l.b16 %v1033
          %v1114 = vunpack.c.h.b16 %v1033
          %v1115 = vunpack.c.l.b16 %v1034
          %v1116 = vunpack.c.h.b16 %v1034
          %v1117 = vunpack.c.l.b16 %v1035
          %v1118 = vunpack.c.h.b16 %v1035
          %v1119 = vunpack.c.l.b16 %v1036
          %v1120 = vunpack.c.h.b16 %v1036
          %v1121 = vunpack.c.l.b16 %v1037
          %v1122 = vunpack.c.h.b16 %v1037
          %v1123 = vunpack.c.l.b16 %v1038
          %v1124 = vunpack.c.h.b16 %v1038
          %v1125 = vunpack.c.l.b16 %v1039
          %v1126 = vunpack.c.h.b16 %v1039
          %v1127 = vunpack.c.l.b16 %v1040
          %v1128 = vunpack.c.h.b16 %v1040
          %v1129 = vunpack.c.l.b16 %v1041
          %v1130 = vunpack.c.h.b16 %v1041
          %v1131 = vunpack.c.l.b16 %v1042
          %v1132 = vunpack.c.h.b16 %v1042
          %v1133 = vunpack.c.l.b16 %v1043
          %v1134 = vunpack.c.h.b16 %v1043
          %v1135 = vunpack.c.l.b16 %v1044
          %v1136 = vunpack.c.h.b16 %v1044
          %v1137 = vunpack.c.l.b16 %v1045
          %v1138 = vunpack.c.h.b16 %v1045
          %v1139 = vunpack.c.l.b16 %v1046
          %v1140 = vunpack.c.h.b16 %v1046
          %v1141 = vunpack.c.l.b16 %v1047
          %v1142 = vunpack.c.h.b16 %v1047
          %v1143 = vunpack.c.l.b16 %v1048
          %v1144 = vunpack.c.h.b16 %v1048
          %v1145 = vunpack.c.l.b16 %v1049
          %v1146 = vunpack.c.h.b16 %v1049
          %v1147 = vunpack.c.l.b16 %v1050
          %v1148 = vunpack.c.h.b16 %v1050
          %v1149 = vunpack.c.l.b16 %v1051
          %v1150 = vunpack.c.h.b16 %v1051
          %v1151 = vunpack.c.l.b16 %v1052
          %v1152 = vunpack.c.h.b16 %v1052
          %v1153 = vunpack.c.l.b16 %v1053
          %v1154 = vunpack.c.h.b16 %v1053
          %v1155 = vunpack.c.l.b16 %v1054
          %v1156 = vunpack.c.h.b16 %v1054
          %v1157 = vpack.c.b16 %v1095, %v1093
          %v1158 = vpack.c.b16 %v1096, %v1094
          %v1159 = vpack.c.b16 %v1099, %v1097
          %v1160 = vpack.c.b16 %v1100, %v1098
          %v1161 = vpack.c.b16 %v1103, %v1101
          %v1162 = vpack.c.b16 %v1104, %v1102
          %v1163 = vpack.c.b16 %v1107, %v1105
          %v1164 = vpack.c.b16 %v1108, %v1106
          %v1165 = vpack.c.b16 %v1111, %v1109
          %v1166 = vpack.c.b16 %v1112, %v1110
          %v1167 = vpack.c.b16 %v1115, %v1113
          %v1168 = vpack.c.b16 %v1116, %v1114
          %v1169 = vpack.c.b16 %v1119, %v1117
          %v1170 = vpack.c.b16 %v1120, %v1118
          %v1171 = vpack.c.b16 %v1123, %v1121
          %v1172 = vpack.c.b16 %v1124, %v1122
          %v1173 = vpack.c.b16 %v1127, %v1125
          %v1174 = vpack.c.b16 %v1128, %v1126
          %v1175 = vpack.c.b16 %v1131, %v1129
          %v1176 = vpack.c.b16 %v1132, %v1130
          %v1177 = vpack.c.b16 %v1135, %v1133
          %v1178 = vpack.c.b16 %v1136, %v1134
          %v1179 = vpack.c.b16 %v1139, %v1137
          %v1180 = vpack.c.b16 %v1140, %v1138
          %v1181 = vpack.c.b16 %v1143, %v1141
          %v1182 = vpack.c.b16 %v1144, %v1142
          %v1183 = vpack.c.b16 %v1147, %v1145
          %v1184 = vpack.c.b16 %v1148, %v1146
          %v1185 = vpack.c.b16 %v1151, %v1149
          %v1186 = vpack.c.b16 %v1152, %v1150
          %v1187 = vpack.c.b16 %v1155, %v1153
          %v1188 = vpack.c.b16 %v1156, %v1154
          %1221 = vmatpush.bf16.msra.mxu0 %v1171
          %1222 = vmatpush.bf16.msra.mxu0 %v1169
          %1223 = vmatpush.bf16.msra.mxu0 %v1167
          %1224 = vmatpush.bf16.msra.mxu0 %v1165
          %1225 = vmatpush.bf16.msra.mxu0 %v1163
          %1226 = vmatpush.bf16.msra.mxu0 %v1161
          %1227 = vmatpush.bf16.msra.mxu0 %v1159
          %1228 = vmatpush.bf16.msra.mxu0 %v1157
          %1229 = vmatmul.bf16.gmra.mxu0 %v1021
          %v1230 = vpop.f32.mrf.mxu0
          %v1231 = vadd.f32 %v1057, %v1230
          %v1232 = vpop.f32.mrf.mxu0
          %1233 = vdwg.mxu0
          %1234 = vmatpush.bf16.msra.mxu0 %v1187
          %1235 = vmatpush.bf16.msra.mxu0 %v1185
          %1236 = vmatpush.bf16.msra.mxu0 %v1183
          %1237 = vmatpush.bf16.msra.mxu0 %v1181
          %1238 = vmatpush.bf16.msra.mxu0 %v1179
          %1239 = vmatpush.bf16.msra.mxu0 %v1177
          %1240 = vmatpush.bf16.msra.mxu0 %v1175
          %1241 = vmatpush.bf16.msra.mxu0 %v1173
          %1242 = vmatmul.bf16.gmra.mxu0 %v1022
          %v1243 = vpop.f32.mrf.mxu0
          %v1244 = vadd.f32 %v1231, %v1243
          %v1245 = vpop.f32.mrf.mxu0
          %1246 = vdwg.mxu0
          %1247 = vmatpush.bf16.msra.mxu0 %v1172
          %1248 = vmatpush.bf16.msra.mxu0 %v1170
          %1249 = vmatpush.bf16.msra.mxu0 %v1168
          %1250 = vmatpush.bf16.msra.mxu0 %v1166
          %1251 = vmatpush.bf16.msra.mxu0 %v1164
          %1252 = vmatpush.bf16.msra.mxu0 %v1162
          %1253 = vmatpush.bf16.msra.mxu0 %v1160
          %1254 = vmatpush.bf16.msra.mxu0 %v1158
          %1255 = vmatmul.bf16.gmra.mxu0 %v1021
          %v1256 = vpop.f32.mrf.mxu0
          %v1257 = vadd.f32 %v1058, %v1256
          %v1258 = vpop.f32.mrf.mxu0
          %1259 = vdwg.mxu0
          %1260 = vmatpush.bf16.msra.mxu0 %v1188
          %1261 = vmatpush.bf16.msra.mxu0 %v1186
          %1262 = vmatpush.bf16.msra.mxu0 %v1184
          %1263 = vmatpush.bf16.msra.mxu0 %v1182
          %1264 = vmatpush.bf16.msra.mxu0 %v1180
          %1265 = vmatpush.bf16.msra.mxu0 %v1178
          %1266 = vmatpush.bf16.msra.mxu0 %v1176
          %1267 = vmatpush.bf16.msra.mxu0 %v1174
          %1268 = vmatmul.bf16.gmra.mxu0 %v1022
          %v1269 = vpop.f32.mrf.mxu0
          %v1270 = vadd.f32 %v1257, %v1269
          %v1271 = vpop.f32.mrf.mxu0
          %1272 = vdwg.mxu0
          %v1273 = vxor.u32 %v1244, 2147483648
          %v1274 = vmul.f32 %v1273, 1.442695
          %v1275 = vpow.pop %v1274
          %v1276 = vadd.f32 %v1275, 1.0
          %v1277 = vrcp.pop %v1276
          %v1278 = vmul.f32 %v1276, %v1277
          %v1279 = vsub.f32 1.0, %v1278
          %v1280 = vmul.f32 %v1277, %v1279
          %v1281 = vadd.f32 %v1277, %v1280
          %vm1282 = vweird.f32 %v1276
          %vm1283 = vweird.f32 %v1277
          %vm1284 = vmor %vm1282, %vm1283
          %v1285 = vsel %vm1284, %v1277, %v1281
          %v1286 = vand.u32 2147483647, %v1276
          %vm1287 = vcmp.eq.f32.partialorder %v1286, 8.507059e+37
          %v1288 = vand.u32 %v1276, 2147483648
          %v1289 = vor.u32 1.1754944e-38, %v1288
          %v1290 = vsel %vm1287, %v1289, %v1285
          %v1291 = vmul.f32 1.0, %v1290
          %v1292 = vxor.u32 %v1270, 2147483648
          %v1293 = vmul.f32 %v1292, 1.442695
          %v1294 = vpow.pop %v1293
          %v1295 = vadd.f32 %v1294, 1.0
          %v1296 = vrcp.pop %v1295
          %v1297 = vmul.f32 %v1295, %v1296
          %v1298 = vsub.f32 1.0, %v1297
          %v1299 = vmul.f32 %v1296, %v1298
          %v1300 = vadd.f32 %v1296, %v1299
          %vm1301 = vweird.f32 %v1295
          %vm1302 = vweird.f32 %v1296
          %vm1303 = vmor %vm1301, %vm1302
          %v1304 = vsel %vm1303, %v1296, %v1300
          %v1305 = vand.u32 2147483647, %v1295
          %vm1306 = vcmp.eq.f32.partialorder %v1305, 8.507059e+37
          %v1307 = vand.u32 %v1295, 2147483648
          %v1308 = vor.u32 1.1754944e-38, %v1307
          %v1309 = vsel %vm1306, %v1308, %v1304
          %v1310 = vmul.f32 1.0, %v1309
          %v1311 = vld [vmem:[#allocation16] sm:$0xf]
          %v1312 = vld [vmem:[#allocation16 + $0x4] sm:$0xf]
          %v1313 = vld [vmem:[#allocation16 + $0x8] sm:$0xf]
          %v1314 = vld [vmem:[#allocation16 + $0xc] sm:$0xf]
          %v1315 = vld [vmem:[#allocation16 + $0x10] sm:$0xf]
          %v1316 = vld [vmem:[#allocation16 + $0x14] sm:$0xf]
          %v1317 = vld [vmem:[#allocation16 + $0x18] sm:$0xf]
          %v1318 = vld [vmem:[#allocation16 + $0x1c] sm:$0xf]
          %v1319 = vld [vmem:[#allocation16 + $0x20] sm:$0xf]
          %v1320 = vld [vmem:[#allocation16 + $0x24] sm:$0xf]
          %v1321 = vld [vmem:[#allocation16 + $0x28] sm:$0xf]
          %v1322 = vld [vmem:[#allocation16 + $0x2c] sm:$0xf]
          %v1323 = vld [vmem:[#allocation16 + $0x30] sm:$0xf]
          %v1324 = vld [vmem:[#allocation16 + $0x34] sm:$0xf]
          %v1325 = vld [vmem:[#allocation16 + $0x38] sm:$0xf]
          %v1326 = vld [vmem:[#allocation16 + $0x3c] sm:$0xf]
          %v1327 = vld [vmem:[#allocation19] sm:$0x1]
          %v1329 = vperm.slane %v1327, 0
          %v1347 = vunpack.c.l.b16 %v1311
          %v1348 = vunpack.c.l.b16 %v1312
          %v1349 = vunpack.c.l.b16 %v1313
          %v1350 = vunpack.c.l.b16 %v1314
          %v1351 = vunpack.c.l.b16 %v1315
          %v1352 = vunpack.c.l.b16 %v1316
          %v1353 = vunpack.c.l.b16 %v1317
          %v1354 = vunpack.c.l.b16 %v1318
          %v1355 = vunpack.c.l.b16 %v1319
          %v1356 = vunpack.c.l.b16 %v1320
          %v1357 = vunpack.c.l.b16 %v1321
          %v1358 = vunpack.c.l.b16 %v1322
          %v1359 = vunpack.c.l.b16 %v1323
          %v1360 = vunpack.c.l.b16 %v1324
          %v1361 = vunpack.c.l.b16 %v1325
          %v1362 = vunpack.c.l.b16 %v1326
          %v1363 = vpack.c.b16 %v1348, %v1347
          %v1364 = vpack.c.b16 %v1350, %v1349
          %v1365 = vpack.c.b16 %v1352, %v1351
          %v1366 = vpack.c.b16 %v1354, %v1353
          %v1367 = vpack.c.b16 %v1356, %v1355
          %v1368 = vpack.c.b16 %v1358, %v1357
          %v1369 = vpack.c.b16 %v1360, %v1359
          %v1370 = vpack.c.b16 %v1362, %v1361
          %1379 = vmatpush.bf16.msra.mxu0 %v1370
          %1380 = vmatpush.bf16.msra.mxu0 %v1369
          %1381 = vmatpush.bf16.msra.mxu0 %v1368
          %1382 = vmatpush.bf16.msra.mxu0 %v1367
          %1383 = vmatpush.bf16.msra.mxu0 %v1366
          %1384 = vmatpush.bf16.msra.mxu0 %v1365
          %1385 = vmatpush.bf16.msra.mxu0 %v1364
          %1386 = vmatpush.bf16.msra.mxu0 %v1363
          %1387 = vmatmul.bf16.gmra.mxu0 %v1021
          %v1388 = vpop.f32.mrf.mxu0
          %v1389 = vadd.f32 %v1329, %v1388
          %v1390 = vpop.f32.mrf.mxu0
          %1391 = vdwg.mxu0
          %v1392 = vld [vmem:[#allocation17] sm:$0xf]
          %v1393 = vld [vmem:[#allocation17 + $0x4] sm:$0xf]
          %v1394 = vld [vmem:[#allocation17 + $0x8] sm:$0xf]
          %v1395 = vld [vmem:[#allocation17 + $0xc] sm:$0xf]
          %v1396 = vld [vmem:[#allocation17 + $0x10] sm:$0xf]
          %v1397 = vld [vmem:[#allocation17 + $0x14] sm:$0xf]
          %v1398 = vld [vmem:[#allocation17 + $0x18] sm:$0xf]
          %v1399 = vld [vmem:[#allocation17 + $0x1c] sm:$0xf]
          %v1400 = vld [vmem:[#allocation17 + $0x20] sm:$0xf]
          %v1401 = vld [vmem:[#allocation17 + $0x24] sm:$0xf]
          %v1402 = vld [vmem:[#allocation17 + $0x28] sm:$0xf]
          %v1403 = vld [vmem:[#allocation17 + $0x2c] sm:$0xf]
          %v1404 = vld [vmem:[#allocation17 + $0x30] sm:$0xf]
          %v1405 = vld [vmem:[#allocation17 + $0x34] sm:$0xf]
          %v1406 = vld [vmem:[#allocation17 + $0x38] sm:$0xf]
          %v1407 = vld [vmem:[#allocation17 + $0x3c] sm:$0xf]
          %v1408 = vld [vmem:[#allocation20] sm:$0x1]
          %v1410 = vperm.slane %v1408, 0
          %v1428 = vunpack.c.l.b16 %v1392
          %v1429 = vunpack.c.l.b16 %v1393
          %v1430 = vunpack.c.l.b16 %v1394
          %v1431 = vunpack.c.l.b16 %v1395
          %v1432 = vunpack.c.l.b16 %v1396
          %v1433 = vunpack.c.l.b16 %v1397
          %v1434 = vunpack.c.l.b16 %v1398
          %v1435 = vunpack.c.l.b16 %v1399
          %v1436 = vunpack.c.l.b16 %v1400
          %v1437 = vunpack.c.l.b16 %v1401
          %v1438 = vunpack.c.l.b16 %v1402
          %v1439 = vunpack.c.l.b16 %v1403
          %v1440 = vunpack.c.l.b16 %v1404
          %v1441 = vunpack.c.l.b16 %v1405
          %v1442 = vunpack.c.l.b16 %v1406
          %v1443 = vunpack.c.l.b16 %v1407
          %v1444 = vpack.c.b16 %v1429, %v1428
          %v1445 = vpack.c.b16 %v1431, %v1430
          %v1446 = vpack.c.b16 %v1433, %v1432
          %v1447 = vpack.c.b16 %v1435, %v1434
          %v1448 = vpack.c.b16 %v1437, %v1436
          %v1449 = vpack.c.b16 %v1439, %v1438
          %v1450 = vpack.c.b16 %v1441, %v1440
          %v1451 = vpack.c.b16 %v1443, %v1442
          %1460 = vmatpush.bf16.msra.mxu0 %v1451
          %1461 = vmatpush.bf16.msra.mxu0 %v1450
          %1462 = vmatpush.bf16.msra.mxu0 %v1449
          %1463 = vmatpush.bf16.msra.mxu0 %v1448
          %1464 = vmatpush.bf16.msra.mxu0 %v1447
          %1465 = vmatpush.bf16.msra.mxu0 %v1446
          %1466 = vmatpush.bf16.msra.mxu0 %v1445
          %1467 = vmatpush.bf16.msra.mxu0 %v1444
          %1468 = vmatmul.bf16.gmra.mxu0 %v1022
          %v1469 = vpop.f32.mrf.mxu0
          %v1470 = vadd.f32 %v1410, %v1469
          %v1471 = vpop.f32.mrf.mxu0
          %1472 = vdwg.mxu0
          %v1473 = vmul.f32 %v1291, %v1470
          %v1474 = vadd.f32 %v1389, %v1473
          %v1475 = vtanh.pop %v1474
          %v1476 = vsub.f32 1.0, %v1310
          %v1477 = vmul.f32 %v1476, %v1475
          %v1478 = vmul.f32 %v1310, %v1020
          %v1479 = vadd.f32 %v1477, %v1478
          %1480 = vst [vmem:[#allocation34] sm:$0xff] %v1479
          %v1481 = vpack.c.bf16 %v1479, %v1479
          %v1482 = vld [vmem:[#allocation22] sm:$0xff]
          %v1483 = vld [vmem:[#allocation22 + $0x8] sm:$0xff]
          %v1484 = vld [vmem:[#allocation22 + $0x10] sm:$0xff]
          %v1485 = vld [vmem:[#allocation22 + $0x18] sm:$0xff]
          %v1486 = vld [vmem:[#allocation22 + $0x20] sm:$0xff]
          %v1487 = vld [vmem:[#allocation22 + $0x28] sm:$0xff]
          %v1488 = vld [vmem:[#allocation22 + $0x30] sm:$0xff]
          %v1489 = vld [vmem:[#allocation22 + $0x38] sm:$0xff]
          %v1490 = vld [vmem:[#allocation22 + $0x40] sm:$0xff]
          %v1491 = vld [vmem:[#allocation22 + $0x48] sm:$0xff]
          %v1492 = vld [vmem:[#allocation22 + $0x50] sm:$0xff]
          %v1493 = vld [vmem:[#allocation22 + $0x58] sm:$0xff]
          %v1494 = vld [vmem:[#allocation22 + $0x60] sm:$0xff]
          %v1495 = vld [vmem:[#allocation22 + $0x68] sm:$0xff]
          %v1496 = vld [vmem:[#allocation22 + $0x70] sm:$0xff]
          %v1497 = vld [vmem:[#allocation22 + $0x78] sm:$0xff]
          %v1498 = vld [vmem:[#allocation22 + $0x80] sm:$0xff]
          %v1499 = vld [vmem:[#allocation22 + $0x88] sm:$0xff]
          %v1500 = vld [vmem:[#allocation22 + $0x90] sm:$0xff]
          %v1501 = vld [vmem:[#allocation22 + $0x98] sm:$0xff]
          %v1502 = vld [vmem:[#allocation22 + $0xa0] sm:$0xff]
          %v1503 = vld [vmem:[#allocation22 + $0xa8] sm:$0xff]
          %v1504 = vld [vmem:[#allocation22 + $0xb0] sm:$0xff]
          %v1505 = vld [vmem:[#allocation22 + $0xb8] sm:$0xff]
          %v1506 = vld [vmem:[#allocation22 + $0xc0] sm:$0xff]
          %v1507 = vld [vmem:[#allocation22 + $0xc8] sm:$0xff]
          %v1508 = vld [vmem:[#allocation22 + $0xd0] sm:$0xff]
          %v1509 = vld [vmem:[#allocation22 + $0xd8] sm:$0xff]
          %v1510 = vld [vmem:[#allocation22 + $0xe0] sm:$0xff]
          %v1511 = vld [vmem:[#allocation22 + $0xe8] sm:$0xff]
          %v1512 = vld [vmem:[#allocation22 + $0xf0] sm:$0xff]
          %v1513 = vld [vmem:[#allocation22 + $0xf8] sm:$0xff]
          %v1514 = vld [vmem:[#allocation23] sm:$0x3]
          %v1516 = vperm.slane %v1514, 0
          %v1517 = vperm.slane %v1514, 1
          %v1552 = vunpack.c.l.b16 %v1482
          %v1553 = vunpack.c.h.b16 %v1482
          %v1554 = vunpack.c.l.b16 %v1483
          %v1555 = vunpack.c.h.b16 %v1483
          %v1556 = vunpack.c.l.b16 %v1484
          %v1557 = vunpack.c.h.b16 %v1484
          %v1558 = vunpack.c.l.b16 %v1485
          %v1559 = vunpack.c.h.b16 %v1485
          %v1560 = vunpack.c.l.b16 %v1486
          %v1561 = vunpack.c.h.b16 %v1486
          %v1562 = vunpack.c.l.b16 %v1487
          %v1563 = vunpack.c.h.b16 %v1487
          %v1564 = vunpack.c.l.b16 %v1488
          %v1565 = vunpack.c.h.b16 %v1488
          %v1566 = vunpack.c.l.b16 %v1489
          %v1567 = vunpack.c.h.b16 %v1489
          %v1568 = vunpack.c.l.b16 %v1490
          %v1569 = vunpack.c.h.b16 %v1490
          %v1570 = vunpack.c.l.b16 %v1491
          %v1571 = vunpack.c.h.b16 %v1491
          %v1572 = vunpack.c.l.b16 %v1492
          %v1573 = vunpack.c.h.b16 %v1492
          %v1574 = vunpack.c.l.b16 %v1493
          %v1575 = vunpack.c.h.b16 %v1493
          %v1576 = vunpack.c.l.b16 %v1494
          %v1577 = vunpack.c.h.b16 %v1494
          %v1578 = vunpack.c.l.b16 %v1495
          %v1579 = vunpack.c.h.b16 %v1495
          %v1580 = vunpack.c.l.b16 %v1496
          %v1581 = vunpack.c.h.b16 %v1496
          %v1582 = vunpack.c.l.b16 %v1497
          %v1583 = vunpack.c.h.b16 %v1497
          %v1584 = vunpack.c.l.b16 %v1498
          %v1585 = vunpack.c.h.b16 %v1498
          %v1586 = vunpack.c.l.b16 %v1499
          %v1587 = vunpack.c.h.b16 %v1499
          %v1588 = vunpack.c.l.b16 %v1500
          %v1589 = vunpack.c.h.b16 %v1500
          %v1590 = vunpack.c.l.b16 %v1501
          %v1591 = vunpack.c.h.b16 %v1501
          %v1592 = vunpack.c.l.b16 %v1502
          %v1593 = vunpack.c.h.b16 %v1502
          %v1594 = vunpack.c.l.b16 %v1503
          %v1595 = vunpack.c.h.b16 %v1503
          %v1596 = vunpack.c.l.b16 %v1504
          %v1597 = vunpack.c.h.b16 %v1504
          %v1598 = vunpack.c.l.b16 %v1505
          %v1599 = vunpack.c.h.b16 %v1505
          %v1600 = vunpack.c.l.b16 %v1506
          %v1601 = vunpack.c.h.b16 %v1506
          %v1602 = vunpack.c.l.b16 %v1507
          %v1603 = vunpack.c.h.b16 %v1507
          %v1604 = vunpack.c.l.b16 %v1508
          %v1605 = vunpack.c.h.b16 %v1508
          %v1606 = vunpack.c.l.b16 %v1509
          %v1607 = vunpack.c.h.b16 %v1509
          %v1608 = vunpack.c.l.b16 %v1510
          %v1609 = vunpack.c.h.b16 %v1510
          %v1610 = vunpack.c.l.b16 %v1511
          %v1611 = vunpack.c.h.b16 %v1511
          %v1612 = vunpack.c.l.b16 %v1512
          %v1613 = vunpack.c.h.b16 %v1512
          %v1614 = vunpack.c.l.b16 %v1513
          %v1615 = vunpack.c.h.b16 %v1513
          %v1616 = vpack.c.b16 %v1554, %v1552
          %v1617 = vpack.c.b16 %v1555, %v1553
          %v1618 = vpack.c.b16 %v1558, %v1556
          %v1619 = vpack.c.b16 %v1559, %v1557
          %v1620 = vpack.c.b16 %v1562, %v1560
          %v1621 = vpack.c.b16 %v1563, %v1561
          %v1622 = vpack.c.b16 %v1566, %v1564
          %v1623 = vpack.c.b16 %v1567, %v1565
          %v1624 = vpack.c.b16 %v1570, %v1568
          %v1625 = vpack.c.b16 %v1571, %v1569
          %v1626 = vpack.c.b16 %v1574, %v1572
          %v1627 = vpack.c.b16 %v1575, %v1573
          %v1628 = vpack.c.b16 %v1578, %v1576
          %v1629 = vpack.c.b16 %v1579, %v1577
          %v1630 = vpack.c.b16 %v1582, %v1580
          %v1631 = vpack.c.b16 %v1583, %v1581
          %v1632 = vpack.c.b16 %v1586, %v1584
          %v1633 = vpack.c.b16 %v1587, %v1585
          %v1634 = vpack.c.b16 %v1590, %v1588
          %v1635 = vpack.c.b16 %v1591, %v1589
          %v1636 = vpack.c.b16 %v1594, %v1592
          %v1637 = vpack.c.b16 %v1595, %v1593
          %v1638 = vpack.c.b16 %v1598, %v1596
          %v1639 = vpack.c.b16 %v1599, %v1597
          %v1640 = vpack.c.b16 %v1602, %v1600
          %v1641 = vpack.c.b16 %v1603, %v1601
          %v1642 = vpack.c.b16 %v1606, %v1604
          %v1643 = vpack.c.b16 %v1607, %v1605
          %v1644 = vpack.c.b16 %v1610, %v1608
          %v1645 = vpack.c.b16 %v1611, %v1609
          %v1646 = vpack.c.b16 %v1614, %v1612
          %v1647 = vpack.c.b16 %v1615, %v1613
          %1680 = vmatpush.bf16.msra.mxu0 %v1630
          %1681 = vmatpush.bf16.msra.mxu0 %v1628
          %1682 = vmatpush.bf16.msra.mxu0 %v1626
          %1683 = vmatpush.bf16.msra.mxu0 %v1624
          %1684 = vmatpush.bf16.msra.mxu0 %v1622
          %1685 = vmatpush.bf16.msra.mxu0 %v1620
          %1686 = vmatpush.bf16.msra.mxu0 %v1618
          %1687 = vmatpush.bf16.msra.mxu0 %v1616
          %1688 = vmatmul.bf16.gmra.mxu0 %v1481
          %v1689 = vpop.f32.mrf.mxu0
          %v1690 = vadd.f32 %v1516, %v1689
          %v1691 = vpop.f32.mrf.mxu0
          %1692 = vdwg.mxu0
          %1693 = vmatpush.bf16.msra.mxu0 %v1646
          %1694 = vmatpush.bf16.msra.mxu0 %v1644
          %1695 = vmatpush.bf16.msra.mxu0 %v1642
          %1696 = vmatpush.bf16.msra.mxu0 %v1640
          %1697 = vmatpush.bf16.msra.mxu0 %v1638
          %1698 = vmatpush.bf16.msra.mxu0 %v1636
          %1699 = vmatpush.bf16.msra.mxu0 %v1634
          %1700 = vmatpush.bf16.msra.mxu0 %v1632
          %1701 = vmatmul.bf16.gmra.mxu0 %v1022
          %v1702 = vpop.f32.mrf.mxu0
          %v1703 = vadd.f32 %v1690, %v1702
          %v1704 = vpop.f32.mrf.mxu0
          %1705 = vdwg.mxu0
          %1706 = vmatpush.bf16.msra.mxu0 %v1631
          %1707 = vmatpush.bf16.msra.mxu0 %v1629
          %1708 = vmatpush.bf16.msra.mxu0 %v1627
          %1709 = vmatpush.bf16.msra.mxu0 %v1625
          %1710 = vmatpush.bf16.msra.mxu0 %v1623
          %1711 = vmatpush.bf16.msra.mxu0 %v1621
          %1712 = vmatpush.bf16.msra.mxu0 %v1619
          %1713 = vmatpush.bf16.msra.mxu0 %v1617
          %1714 = vmatmul.bf16.gmra.mxu0 %v1481
          %v1715 = vpop.f32.mrf.mxu0
          %v1716 = vadd.f32 %v1517, %v1715
          %v1717 = vpop.f32.mrf.mxu0
          %1718 = vdwg.mxu0
          %1719 = vmatpush.bf16.msra.mxu0 %v1647
          %1720 = vmatpush.bf16.msra.mxu0 %v1645
          %1721 = vmatpush.bf16.msra.mxu0 %v1643
          %1722 = vmatpush.bf16.msra.mxu0 %v1641
          %1723 = vmatpush.bf16.msra.mxu0 %v1639
          %1724 = vmatpush.bf16.msra.mxu0 %v1637
          %1725 = vmatpush.bf16.msra.mxu0 %v1635
          %1726 = vmatpush.bf16.msra.mxu0 %v1633
          %1727 = vmatmul.bf16.gmra.mxu0 %v1022
          %v1728 = vpop.f32.mrf.mxu0
          %v1729 = vadd.f32 %v1716, %v1728
          %v1730 = vpop.f32.mrf.mxu0
          %1731 = vdwg.mxu0
          %v1732 = vxor.u32 %v1703, 2147483648
          %v1733 = vmul.f32 %v1732, 1.442695
          %v1734 = vpow.pop %v1733
          %v1735 = vadd.f32 %v1734, 1.0
          %v1736 = vrcp.pop %v1735
          %v1737 = vmul.f32 %v1735, %v1736
          %v1738 = vsub.f32 1.0, %v1737
          %v1739 = vmul.f32 %v1736, %v1738
          %v1740 = vadd.f32 %v1736, %v1739
          %vm1741 = vweird.f32 %v1735
          %vm1742 = vweird.f32 %v1736
          %vm1743 = vmor %vm1741, %vm1742
          %v1744 = vsel %vm1743, %v1736, %v1740
          %v1745 = vand.u32 2147483647, %v1735
          %vm1746 = vcmp.eq.f32.partialorder %v1745, 8.507059e+37
          %v1747 = vand.u32 %v1735, 2147483648
          %v1748 = vor.u32 1.1754944e-38, %v1747
          %v1749 = vsel %vm1746, %v1748, %v1744
          %v1750 = vmul.f32 1.0, %v1749
          %v1751 = vxor.u32 %v1729, 2147483648
          %v1752 = vmul.f32 %v1751, 1.442695
          %v1753 = vpow.pop %v1752
          %v1754 = vadd.f32 %v1753, 1.0
          %v1755 = vrcp.pop %v1754
          %v1756 = vmul.f32 %v1754, %v1755
          %v1757 = vsub.f32 1.0, %v1756
          %v1758 = vmul.f32 %v1755, %v1757
          %v1759 = vadd.f32 %v1755, %v1758
          %vm1760 = vweird.f32 %v1754
          %vm1761 = vweird.f32 %v1755
          %vm1762 = vmor %vm1760, %vm1761
          %v1763 = vsel %vm1762, %v1755, %v1759
          %v1764 = vand.u32 2147483647, %v1754
          %vm1765 = vcmp.eq.f32.partialorder %v1764, 8.507059e+37
          %v1766 = vand.u32 %v1754, 2147483648
          %v1767 = vor.u32 1.1754944e-38, %v1766
          %v1768 = vsel %vm1765, %v1767, %v1763
          %v1769 = vmul.f32 1.0, %v1768
          %v1770 = vld [vmem:[#allocation25] sm:$0xf]
          %v1771 = vld [vmem:[#allocation25 + $0x4] sm:$0xf]
          %v1772 = vld [vmem:[#allocation25 + $0x8] sm:$0xf]
          %v1773 = vld [vmem:[#allocation25 + $0xc] sm:$0xf]
          %v1774 = vld [vmem:[#allocation25 + $0x10] sm:$0xf]
          %v1775 = vld [vmem:[#allocation25 + $0x14] sm:$0xf]
          %v1776 = vld [vmem:[#allocation25 + $0x18] sm:$0xf]
          %v1777 = vld [vmem:[#allocation25 + $0x1c] sm:$0xf]
          %v1778 = vld [vmem:[#allocation25 + $0x20] sm:$0xf]
          %v1779 = vld [vmem:[#allocation25 + $0x24] sm:$0xf]
          %v1780 = vld [vmem:[#allocation25 + $0x28] sm:$0xf]
          %v1781 = vld [vmem:[#allocation25 + $0x2c] sm:$0xf]
          %v1782 = vld [vmem:[#allocation25 + $0x30] sm:$0xf]
          %v1783 = vld [vmem:[#allocation25 + $0x34] sm:$0xf]
          %v1784 = vld [vmem:[#allocation25 + $0x38] sm:$0xf]
          %v1785 = vld [vmem:[#allocation25 + $0x3c] sm:$0xf]
          %v1786 = vld [vmem:[#allocation28] sm:$0x1]
          %v1788 = vperm.slane %v1786, 0
          %v1806 = vunpack.c.l.b16 %v1770
          %v1807 = vunpack.c.l.b16 %v1771
          %v1808 = vunpack.c.l.b16 %v1772
          %v1809 = vunpack.c.l.b16 %v1773
          %v1810 = vunpack.c.l.b16 %v1774
          %v1811 = vunpack.c.l.b16 %v1775
          %v1812 = vunpack.c.l.b16 %v1776
          %v1813 = vunpack.c.l.b16 %v1777
          %v1814 = vunpack.c.l.b16 %v1778
          %v1815 = vunpack.c.l.b16 %v1779
          %v1816 = vunpack.c.l.b16 %v1780
          %v1817 = vunpack.c.l.b16 %v1781
          %v1818 = vunpack.c.l.b16 %v1782
          %v1819 = vunpack.c.l.b16 %v1783
          %v1820 = vunpack.c.l.b16 %v1784
          %v1821 = vunpack.c.l.b16 %v1785
          %v1822 = vpack.c.b16 %v1807, %v1806
          %v1823 = vpack.c.b16 %v1809, %v1808
          %v1824 = vpack.c.b16 %v1811, %v1810
          %v1825 = vpack.c.b16 %v1813, %v1812
          %v1826 = vpack.c.b16 %v1815, %v1814
          %v1827 = vpack.c.b16 %v1817, %v1816
          %v1828 = vpack.c.b16 %v1819, %v1818
          %v1829 = vpack.c.b16 %v1821, %v1820
          %1838 = vmatpush.bf16.msra.mxu0 %v1829
          %1839 = vmatpush.bf16.msra.mxu0 %v1828
          %1840 = vmatpush.bf16.msra.mxu0 %v1827
          %1841 = vmatpush.bf16.msra.mxu0 %v1826
          %1842 = vmatpush.bf16.msra.mxu0 %v1825
          %1843 = vmatpush.bf16.msra.mxu0 %v1824
          %1844 = vmatpush.bf16.msra.mxu0 %v1823
          %1845 = vmatpush.bf16.msra.mxu0 %v1822
          %1846 = vmatmul.bf16.gmra.mxu0 %v1481
          %v1847 = vpop.f32.mrf.mxu0
          %v1848 = vadd.f32 %v1788, %v1847
          %v1849 = vpop.f32.mrf.mxu0
          %1850 = vdwg.mxu0
          %v1851 = vld [vmem:[#allocation26] sm:$0xf]
          %v1852 = vld [vmem:[#allocation26 + $0x4] sm:$0xf]
          %v1853 = vld [vmem:[#allocation26 + $0x8] sm:$0xf]
          %v1854 = vld [vmem:[#allocation26 + $0xc] sm:$0xf]
          %v1855 = vld [vmem:[#allocation26 + $0x10] sm:$0xf]
          %v1856 = vld [vmem:[#allocation26 + $0x14] sm:$0xf]
          %v1857 = vld [vmem:[#allocation26 + $0x18] sm:$0xf]
          %v1858 = vld [vmem:[#allocation26 + $0x1c] sm:$0xf]
          %v1859 = vld [vmem:[#allocation26 + $0x20] sm:$0xf]
          %v1860 = vld [vmem:[#allocation26 + $0x24] sm:$0xf]
          %v1861 = vld [vmem:[#allocation26 + $0x28] sm:$0xf]
          %v1862 = vld [vmem:[#allocation26 + $0x2c] sm:$0xf]
          %v1863 = vld [vmem:[#allocation26 + $0x30] sm:$0xf]
          %v1864 = vld [vmem:[#allocation26 + $0x34] sm:$0xf]
          %v1865 = vld [vmem:[#allocation26 + $0x38] sm:$0xf]
          %v1866 = vld [vmem:[#allocation26 + $0x3c] sm:$0xf]
          %v1867 = vld [vmem:[#allocation29] sm:$0x1]
          %v1869 = vperm.slane %v1867, 0
          %v1887 = vunpack.c.l.b16 %v1851
          %v1888 = vunpack.c.l.b16 %v1852
          %v1889 = vunpack.c.l.b16 %v1853
          %v1890 = vunpack.c.l.b16 %v1854
          %v1891 = vunpack.c.l.b16 %v1855
          %v1892 = vunpack.c.l.b16 %v1856
          %v1893 = vunpack.c.l.b16 %v1857
          %v1894 = vunpack.c.l.b16 %v1858
          %v1895 = vunpack.c.l.b16 %v1859
          %v1896 = vunpack.c.l.b16 %v1860
          %v1897 = vunpack.c.l.b16 %v1861
          %v1898 = vunpack.c.l.b16 %v1862
          %v1899 = vunpack.c.l.b16 %v1863
          %v1900 = vunpack.c.l.b16 %v1864
          %v1901 = vunpack.c.l.b16 %v1865
          %v1902 = vunpack.c.l.b16 %v1866
          %v1903 = vpack.c.b16 %v1888, %v1887
          %v1904 = vpack.c.b16 %v1890, %v1889
          %v1905 = vpack.c.b16 %v1892, %v1891
          %v1906 = vpack.c.b16 %v1894, %v1893
          %v1907 = vpack.c.b16 %v1896, %v1895
          %v1908 = vpack.c.b16 %v1898, %v1897
          %v1909 = vpack.c.b16 %v1900, %v1899
          %v1910 = vpack.c.b16 %v1902, %v1901
          %1919 = vmatpush.bf16.msra.mxu0 %v1910
          %1920 = vmatpush.bf16.msra.mxu0 %v1909
          %1921 = vmatpush.bf16.msra.mxu0 %v1908
          %1922 = vmatpush.bf16.msra.mxu0 %v1907
          %1923 = vmatpush.bf16.msra.mxu0 %v1906
          %1924 = vmatpush.bf16.msra.mxu0 %v1905
          %1925 = vmatpush.bf16.msra.mxu0 %v1904
          %1926 = vmatpush.bf16.msra.mxu0 %v1903
          %1927 = vmatmul.bf16.gmra.mxu0 %v1022
          %v1928 = vpop.f32.mrf.mxu0
          %v1929 = vadd.f32 %v1869, %v1928
          %v1930 = vpop.f32.mrf.mxu0
          %1931 = vdwg.mxu0
          %v1932 = vmul.f32 %v1750, %v1929
          %v1933 = vadd.f32 %v1848, %v1932
          %v1934 = vtanh.pop %v1933
          %v1935 = vsub.f32 1.0, %v1769
          %v1936 = vmul.f32 %v1935, %v1934
          %v1937 = vmul.f32 %v1769, %v1020
          %v1938 = vadd.f32 %v1936, %v1937
          %s1939 = scalar_lea.vmem [#allocation34], 8
          %1940 = vst [vmem:[%s1939] sm:$0xff] %v1938
          %v1941 = vpack.c.bf16 %v1938, %v1938
          %1942 = vst [vmem:[#allocation2] sm:$0xf] %v1941
          %vm1943 = vcmask 7168
          %1944 = vst.msk [vmem:[#allocation3] sm:$0xff] %vm1943, -3e+38
          %1945 = vst.msk [vmem:[#allocation4] sm:$0xff] %vm1943, 0.0
        $region168: #{tpu_custom_call.1} parent=91 // pred_fallthru
          _
        %v1946 = vld [vmem:[#allocation2] sm:$0xf]
        %v1947 = vld [vmem:[%s853] sm:$0xff]
        %v1948 = vld [vmem:[%s853 + $0x8] sm:$0xff]
        %v1949 = vld [vmem:[%s853 + $0x10] sm:$0xff]
        %v1950 = vld [vmem:[%s853 + $0x18] sm:$0xff]
        %v1951 = vld [vmem:[%s853 + $0x20] sm:$0xff]
        %v1952 = vld [vmem:[%s853 + $0x28] sm:$0xff]
        %v1953 = vld [vmem:[%s853 + $0x30] sm:$0xff]
        %v1954 = vld [vmem:[%s853 + $0x38] sm:$0xff]
        %v1955 = vld [vmem:[%s853 + $0x40] sm:$0xff]
        %v1956 = vld [vmem:[%s853 + $0x48] sm:$0xff]
        %v1957 = vld [vmem:[%s853 + $0x50] sm:$0xff]
        %v1958 = vld [vmem:[%s853 + $0x58] sm:$0xff]
        %v1959 = vld [vmem:[%s853 + $0x60] sm:$0xff]
        %v1960 = vld [vmem:[%s853 + $0x68] sm:$0xff]
        %v1961 = vld [vmem:[%s853 + $0x70] sm:$0xff]
        %v1962 = vld [vmem:[%s853 + $0x78] sm:$0xff]
        %v1963 = vld [vmem:[%s853 + $0x80] sm:$0xff]
        %v1964 = vld [vmem:[%s853 + $0x88] sm:$0xff]
        %v1965 = vld [vmem:[%s853 + $0x90] sm:$0xff]
        %v1966 = vld [vmem:[%s853 + $0x98] sm:$0xff]
        %v1967 = vld [vmem:[%s853 + $0xa0] sm:$0xff]
        %v1968 = vld [vmem:[%s853 + $0xa8] sm:$0xff]
        %v1969 = vld [vmem:[%s853 + $0xb0] sm:$0xff]
        %v1970 = vld [vmem:[%s853 + $0xb8] sm:$0xff]
        %v1971 = vld [vmem:[%s853 + $0xc0] sm:$0xff]
        %v1972 = vld [vmem:[%s853 + $0xc8] sm:$0xff]
        %v1973 = vld [vmem:[%s853 + $0xd0] sm:$0xff]
        %v1974 = vld [vmem:[%s853 + $0xd8] sm:$0xff]
        %v1975 = vld [vmem:[%s853 + $0xe0] sm:$0xff]
        %v1976 = vld [vmem:[%s853 + $0xe8] sm:$0xff]
        %v1977 = vld [vmem:[%s853 + $0xf0] sm:$0xff]
        %v1978 = vld [vmem:[%s853 + $0xf8] sm:$0xff]
        %v1979 = vld [vmem:[%s853 + $0x100] sm:$0xff]
        %v1980 = vld [vmem:[%s853 + $0x108] sm:$0xff]
        %v1981 = vld [vmem:[%s853 + $0x110] sm:$0xff]
        %v1982 = vld [vmem:[%s853 + $0x118] sm:$0xff]
        %v1983 = vld [vmem:[%s853 + $0x120] sm:$0xff]
        %v1984 = vld [vmem:[%s853 + $0x128] sm:$0xff]
        %v1985 = vld [vmem:[%s853 + $0x130] sm:$0xff]
        %v1986 = vld [vmem:[%s853 + $0x138] sm:$0xff]
        %v1987 = vld [vmem:[%s853 + $0x140] sm:$0xff]
        %v1988 = vld [vmem:[%s853 + $0x148] sm:$0xff]
        %v1989 = vld [vmem:[%s853 + $0x150] sm:$0xff]
        %v1990 = vld [vmem:[%s853 + $0x158] sm:$0xff]
        %v1991 = vld [vmem:[%s853 + $0x160] sm:$0xff]
        %v1992 = vld [vmem:[%s853 + $0x168] sm:$0xff]
        %v1993 = vld [vmem:[%s853 + $0x170] sm:$0xff]
        %v1994 = vld [vmem:[%s853 + $0x178] sm:$0xff]
        %v1995 = vld [vmem:[%s853 + $0x180] sm:$0xff]
        %v1996 = vld [vmem:[%s853 + $0x188] sm:$0xff]
        %v1997 = vld [vmem:[%s853 + $0x190] sm:$0xff]
        %v1998 = vld [vmem:[%s853 + $0x198] sm:$0xff]
        %v1999 = vld [vmem:[%s853 + $0x1a0] sm:$0xff]
        %v2000 = vld [vmem:[%s853 + $0x1a8] sm:$0xff]
        %v2001 = vld [vmem:[%s853 + $0x1b0] sm:$0xff]
        %v2002 = vld [vmem:[%s853 + $0x1b8] sm:$0xff]
        %v2003 = vld [vmem:[%s853 + $0x1c0] sm:$0xff]
        %v2004 = vld [vmem:[%s853 + $0x1c8] sm:$0xff]
        %v2005 = vld [vmem:[%s853 + $0x1d0] sm:$0xff]
        %v2006 = vld [vmem:[%s853 + $0x1d8] sm:$0xff]
        %v2007 = vld [vmem:[%s853 + $0x1e0] sm:$0xff]
        %v2008 = vld [vmem:[%s853 + $0x1e8] sm:$0xff]
        %v2009 = vld [vmem:[%s853 + $0x1f0] sm:$0xff]
        %v2010 = vld [vmem:[%s853 + $0x1f8] sm:$0xff]
        %v2011 = vld [vmem:[%s853 + $0x200] sm:$0xff]
        %v2012 = vld [vmem:[%s853 + $0x208] sm:$0xff]
        %v2013 = vld [vmem:[%s853 + $0x210] sm:$0xff]
        %v2014 = vld [vmem:[%s853 + $0x218] sm:$0xff]
        %v2015 = vld [vmem:[%s853 + $0x220] sm:$0xff]
        %v2016 = vld [vmem:[%s853 + $0x228] sm:$0xff]
        %v2017 = vld [vmem:[%s853 + $0x230] sm:$0xff]
        %v2018 = vld [vmem:[%s853 + $0x238] sm:$0xff]
        %v2019 = vld [vmem:[%s853 + $0x240] sm:$0xff]
        %v2020 = vld [vmem:[%s853 + $0x248] sm:$0xff]
        %v2021 = vld [vmem:[%s853 + $0x250] sm:$0xff]
        %v2022 = vld [vmem:[%s853 + $0x258] sm:$0xff]
        %v2023 = vld [vmem:[%s853 + $0x260] sm:$0xff]
        %v2024 = vld [vmem:[%s853 + $0x268] sm:$0xff]
        %v2025 = vld [vmem:[%s853 + $0x270] sm:$0xff]
        %v2026 = vld [vmem:[%s853 + $0x278] sm:$0xff]
        %v2027 = vld [vmem:[%s863] sm:$0xff]
        %v2028 = vld [vmem:[%s863 + $0x8] sm:$0x3]
        %v2031 = vperm.slane %v2027, 0
        %v2032 = vperm.slane %v2027, 1
        %v2033 = vperm.slane %v2027, 2
        %v2034 = vperm.slane %v2027, 3
        %v2035 = vperm.slane %v2027, 4
        %v2036 = vperm.slane %v2027, 5
        %v2037 = vperm.slane %v2027, 6
        %v2038 = vperm.slane %v2027, 7
        %v2039 = vperm.slane %v2028, 0
        %v2040 = vperm.slane %v2028, 1
        %v2131 = vunpack.c.l.b16 %v1947
        %v2132 = vunpack.c.h.b16 %v1947
        %v2133 = vunpack.c.l.b16 %v1948
        %v2134 = vunpack.c.h.b16 %v1948
        %v2135 = vunpack.c.l.b16 %v1949
        %v2136 = vunpack.c.h.b16 %v1949
        %v2137 = vunpack.c.l.b16 %v1950
        %v2138 = vunpack.c.h.b16 %v1950
        %v2139 = vunpack.c.l.b16 %v1951
        %v2140 = vunpack.c.h.b16 %v1951
        %v2141 = vunpack.c.l.b16 %v1952
        %v2142 = vunpack.c.h.b16 %v1952
        %v2143 = vunpack.c.l.b16 %v1953
        %v2144 = vunpack.c.h.b16 %v1953
        %v2145 = vunpack.c.l.b16 %v1954
        %v2146 = vunpack.c.h.b16 %v1954
        %v2147 = vunpack.c.l.b16 %v1955
        %v2148 = vunpack.c.h.b16 %v1955
        %v2149 = vunpack.c.l.b16 %v1956
        %v2150 = vunpack.c.h.b16 %v1956
        %v2151 = vunpack.c.l.b16 %v1957
        %v2152 = vunpack.c.h.b16 %v1957
        %v2153 = vunpack.c.l.b16 %v1958
        %v2154 = vunpack.c.h.b16 %v1958
        %v2155 = vunpack.c.l.b16 %v1959
        %v2156 = vunpack.c.h.b16 %v1959
        %v2157 = vunpack.c.l.b16 %v1960
        %v2158 = vunpack.c.h.b16 %v1960
        %v2159 = vunpack.c.l.b16 %v1961
        %v2160 = vunpack.c.h.b16 %v1961
        %v2161 = vunpack.c.l.b16 %v1962
        %v2162 = vunpack.c.h.b16 %v1962
        %v2163 = vunpack.c.l.b16 %v1963
        %v2164 = vunpack.c.h.b16 %v1963
        %v2165 = vunpack.c.l.b16 %v1964
        %v2166 = vunpack.c.h.b16 %v1964
        %v2167 = vunpack.c.l.b16 %v1965
        %v2168 = vunpack.c.h.b16 %v1965
        %v2169 = vunpack.c.l.b16 %v1966
        %v2170 = vunpack.c.h.b16 %v1966
        %v2171 = vunpack.c.l.b16 %v1967
        %v2172 = vunpack.c.h.b16 %v1967
        %v2173 = vunpack.c.l.b16 %v1968
        %v2174 = vunpack.c.h.b16 %v1968
        %v2175 = vunpack.c.l.b16 %v1969
        %v2176 = vunpack.c.h.b16 %v1969
        %v2177 = vunpack.c.l.b16 %v1970
        %v2178 = vunpack.c.h.b16 %v1970
        %v2179 = vunpack.c.l.b16 %v1971
        %v2180 = vunpack.c.h.b16 %v1971
        %v2181 = vunpack.c.l.b16 %v1972
        %v2182 = vunpack.c.h.b16 %v1972
        %v2183 = vunpack.c.l.b16 %v1973
        %v2184 = vunpack.c.h.b16 %v1973
        %v2185 = vunpack.c.l.b16 %v1974
        %v2186 = vunpack.c.h.b16 %v1974
        %v2187 = vunpack.c.l.b16 %v1975
        %v2188 = vunpack.c.h.b16 %v1975
        %v2189 = vunpack.c.l.b16 %v1976
        %v2190 = vunpack.c.h.b16 %v1976
        %v2191 = vunpack.c.l.b16 %v1977
        %v2192 = vunpack.c.h.b16 %v1977
        %v2193 = vunpack.c.l.b16 %v1978
        %v2194 = vunpack.c.h.b16 %v1978
        %v2195 = vunpack.c.l.b16 %v1979
        %v2196 = vunpack.c.h.b16 %v1979
        %v2197 = vunpack.c.l.b16 %v1980
        %v2198 = vunpack.c.h.b16 %v1980
        %v2199 = vunpack.c.l.b16 %v1981
        %v2200 = vunpack.c.h.b16 %v1981
        %v2201 = vunpack.c.l.b16 %v1982
        %v2202 = vunpack.c.h.b16 %v1982
        %v2203 = vunpack.c.l.b16 %v1983
        %v2204 = vunpack.c.h.b16 %v1983
        %v2205 = vunpack.c.l.b16 %v1984
        %v2206 = vunpack.c.h.b16 %v1984
        %v2207 = vunpack.c.l.b16 %v1985
        %v2208 = vunpack.c.h.b16 %v1985
        %v2209 = vunpack.c.l.b16 %v1986
        %v2210 = vunpack.c.h.b16 %v1986
        %v2211 = vunpack.c.l.b16 %v1987
        %v2212 = vunpack.c.h.b16 %v1987
        %v2213 = vunpack.c.l.b16 %v1988
        %v2214 = vunpack.c.h.b16 %v1988
        %v2215 = vunpack.c.l.b16 %v1989
        %v2216 = vunpack.c.h.b16 %v1989
        %v2217 = vunpack.c.l.b16 %v1990
        %v2218 = vunpack.c.h.b16 %v1990
        %v2219 = vunpack.c.l.b16 %v1991
        %v2220 = vunpack.c.h.b16 %v1991
        %v2221 = vunpack.c.l.b16 %v1992
        %v2222 = vunpack.c.h.b16 %v1992
        %v2223 = vunpack.c.l.b16 %v1993
        %v2224 = vunpack.c.h.b16 %v1993
        %v2225 = vunpack.c.l.b16 %v1994
        %v2226 = vunpack.c.h.b16 %v1994
        %v2227 = vunpack.c.l.b16 %v1995
        %v2228 = vunpack.c.h.b16 %v1995
        %v2229 = vunpack.c.l.b16 %v1996
        %v2230 = vunpack.c.h.b16 %v1996
        %v2231 = vunpack.c.l.b16 %v1997
        %v2232 = vunpack.c.h.b16 %v1997
        %v2233 = vunpack.c.l.b16 %v1998
        %v2234 = vunpack.c.h.b16 %v1998
        %v2235 = vunpack.c.l.b16 %v1999
        %v2236 = vunpack.c.h.b16 %v1999
        %v2237 = vunpack.c.l.b16 %v2000
        %v2238 = vunpack.c.h.b16 %v2000
        %v2239 = vunpack.c.l.b16 %v2001
        %v2240 = vunpack.c.h.b16 %v2001
        %v2241 = vunpack.c.l.b16 %v2002
        %v2242 = vunpack.c.h.b16 %v2002
        %v2243 = vunpack.c.l.b16 %v2003
        %v2244 = vunpack.c.h.b16 %v2003
        %v2245 = vunpack.c.l.b16 %v2004
        %v2246 = vunpack.c.h.b16 %v2004
        %v2247 = vunpack.c.l.b16 %v2005
        %v2248 = vunpack.c.h.b16 %v2005
        %v2249 = vunpack.c.l.b16 %v2006
        %v2250 = vunpack.c.h.b16 %v2006
        %v2251 = vunpack.c.l.b16 %v2007
        %v2252 = vunpack.c.h.b16 %v2007
        %v2253 = vunpack.c.l.b16 %v2008
        %v2254 = vunpack.c.h.b16 %v2008
        %v2255 = vunpack.c.l.b16 %v2009
        %v2256 = vunpack.c.h.b16 %v2009
        %v2257 = vunpack.c.l.b16 %v2010
        %v2258 = vunpack.c.h.b16 %v2010
        %v2259 = vunpack.c.l.b16 %v2011
        %v2260 = vunpack.c.h.b16 %v2011
        %v2261 = vunpack.c.l.b16 %v2012
        %v2262 = vunpack.c.h.b16 %v2012
        %v2263 = vunpack.c.l.b16 %v2013
        %v2264 = vunpack.c.h.b16 %v2013
        %v2265 = vunpack.c.l.b16 %v2014
        %v2266 = vunpack.c.h.b16 %v2014
        %v2267 = vunpack.c.l.b16 %v2015
        %v2268 = vunpack.c.h.b16 %v2015
        %v2269 = vunpack.c.l.b16 %v2016
        %v2270 = vunpack.c.h.b16 %v2016
        %v2271 = vunpack.c.l.b16 %v2017
        %v2272 = vunpack.c.h.b16 %v2017
        %v2273 = vunpack.c.l.b16 %v2018
        %v2274 = vunpack.c.h.b16 %v2018
        %v2275 = vunpack.c.l.b16 %v2019
        %v2276 = vunpack.c.h.b16 %v2019
        %v2277 = vunpack.c.l.b16 %v2020
        %v2278 = vunpack.c.h.b16 %v2020
        %v2279 = vunpack.c.l.b16 %v2021
        %v2280 = vunpack.c.h.b16 %v2021
        %v2281 = vunpack.c.l.b16 %v2022
        %v2282 = vunpack.c.h.b16 %v2022
        %v2283 = vunpack.c.l.b16 %v2023
        %v2284 = vunpack.c.h.b16 %v2023
        %v2285 = vunpack.c.l.b16 %v2024
        %v2286 = vunpack.c.h.b16 %v2024
        %v2287 = vunpack.c.l.b16 %v2025
        %v2288 = vunpack.c.h.b16 %v2025
        %v2289 = vunpack.c.l.b16 %v2026
        %v2290 = vunpack.c.h.b16 %v2026
        %v2291 = vpack.c.b16 %v2141, %v2131
        %v2292 = vpack.c.b16 %v2142, %v2132
        %v2293 = vpack.c.b16 %v2143, %v2133
        %v2294 = vpack.c.b16 %v2144, %v2134
        %v2295 = vpack.c.b16 %v2145, %v2135
        %v2296 = vpack.c.b16 %v2146, %v2136
        %v2297 = vpack.c.b16 %v2147, %v2137
        %v2298 = vpack.c.b16 %v2148, %v2138
        %v2299 = vpack.c.b16 %v2149, %v2139
        %v2300 = vpack.c.b16 %v2150, %v2140
        %v2301 = vpack.c.b16 %v2161, %v2151
        %v2302 = vpack.c.b16 %v2162, %v2152
        %v2303 = vpack.c.b16 %v2163, %v2153
        %v2304 = vpack.c.b16 %v2164, %v2154
        %v2305 = vpack.c.b16 %v2165, %v2155
        %v2306 = vpack.c.b16 %v2166, %v2156
        %v2307 = vpack.c.b16 %v2167, %v2157
        %v2308 = vpack.c.b16 %v2168, %v2158
        %v2309 = vpack.c.b16 %v2169, %v2159
        %v2310 = vpack.c.b16 %v2170, %v2160
        %v2311 = vpack.c.b16 %v2181, %v2171
        %v2312 = vpack.c.b16 %v2182, %v2172
        %v2313 = vpack.c.b16 %v2183, %v2173
        %v2314 = vpack.c.b16 %v2184, %v2174
        %v2315 = vpack.c.b16 %v2185, %v2175
        %v2316 = vpack.c.b16 %v2186, %v2176
        %v2317 = vpack.c.b16 %v2187, %v2177
        %v2318 = vpack.c.b16 %v2188, %v2178
        %v2319 = vpack.c.b16 %v2189, %v2179
        %v2320 = vpack.c.b16 %v2190, %v2180
        %v2321 = vpack.c.b16 %v2201, %v2191
        %v2322 = vpack.c.b16 %v2202, %v2192
        %v2323 = vpack.c.b16 %v2203, %v2193
        %v2324 = vpack.c.b16 %v2204, %v2194
        %v2325 = vpack.c.b16 %v2205, %v2195
        %v2326 = vpack.c.b16 %v2206, %v2196
        %v2327 = vpack.c.b16 %v2207, %v2197
        %v2328 = vpack.c.b16 %v2208, %v2198
        %v2329 = vpack.c.b16 %v2209, %v2199
        %v2330 = vpack.c.b16 %v2210, %v2200
        %v2331 = vpack.c.b16 %v2221, %v2211
        %v2332 = vpack.c.b16 %v2222, %v2212
        %v2333 = vpack.c.b16 %v2223, %v2213
        %v2334 = vpack.c.b16 %v2224, %v2214
        %v2335 = vpack.c.b16 %v2225, %v2215
        %v2336 = vpack.c.b16 %v2226, %v2216
        %v2337 = vpack.c.b16 %v2227, %v2217
        %v2338 = vpack.c.b16 %v2228, %v2218
        %v2339 = vpack.c.b16 %v2229, %v2219
        %v2340 = vpack.c.b16 %v2230, %v2220
        %v2341 = vpack.c.b16 %v2241, %v2231
        %v2342 = vpack.c.b16 %v2242, %v2232
        %v2343 = vpack.c.b16 %v2243, %v2233
        %v2344 = vpack.c.b16 %v2244, %v2234
        %v2345 = vpack.c.b16 %v2245, %v2235
        %v2346 = vpack.c.b16 %v2246, %v2236
        %v2347 = vpack.c.b16 %v2247, %v2237
        %v2348 = vpack.c.b16 %v2248, %v2238
        %v2349 = vpack.c.b16 %v2249, %v2239
        %v2350 = vpack.c.b16 %v2250, %v2240
        %v2351 = vpack.c.b16 %v2261, %v2251
        %v2352 = vpack.c.b16 %v2262, %v2252
        %v2353 = vpack.c.b16 %v2263, %v2253
        %v2354 = vpack.c.b16 %v2264, %v2254
        %v2355 = vpack.c.b16 %v2265, %v2255
        %v2356 = vpack.c.b16 %v2266, %v2256
        %v2357 = vpack.c.b16 %v2267, %v2257
        %v2358 = vpack.c.b16 %v2268, %v2258
        %v2359 = vpack.c.b16 %v2269, %v2259
        %v2360 = vpack.c.b16 %v2270, %v2260
        %v2361 = vpack.c.b16 %v2281, %v2271
        %v2362 = vpack.c.b16 %v2282, %v2272
        %v2363 = vpack.c.b16 %v2283, %v2273
        %v2364 = vpack.c.b16 %v2284, %v2274
        %v2365 = vpack.c.b16 %v2285, %v2275
        %v2366 = vpack.c.b16 %v2286, %v2276
        %v2367 = vpack.c.b16 %v2287, %v2277
        %v2368 = vpack.c.b16 %v2288, %v2278
        %v2369 = vpack.c.b16 %v2289, %v2279
        %v2370 = vpack.c.b16 %v2290, %v2280
        %2451 = vmatpush.bf16.msra.mxu0 %v2361
        %2452 = vmatpush.bf16.msra.mxu0 %v2351
        %2453 = vmatpush.bf16.msra.mxu0 %v2341
        %2454 = vmatpush.bf16.msra.mxu0 %v2331
        %2455 = vmatpush.bf16.msra.mxu0 %v2321
        %2456 = vmatpush.bf16.msra.mxu0 %v2311
        %2457 = vmatpush.bf16.msra.mxu0 %v2301
        %2458 = vmatpush.bf16.msra.mxu0 %v2291
        %2459 = vmatmul.bf16.gmra.mxu0 %v1946
        %v2460 = vpop.f32.mrf.mxu0
        %v2461 = vadd.f32 %v2031, %v2460
        %v2462 = vpop.f32.mrf.mxu0
        %2463 = vdwg.mxu0
        %2464 = vmatpush.bf16.msra.mxu0 %v2362
        %2465 = vmatpush.bf16.msra.mxu0 %v2352
        %2466 = vmatpush.bf16.msra.mxu0 %v2342
        %2467 = vmatpush.bf16.msra.mxu0 %v2332
        %2468 = vmatpush.bf16.msra.mxu0 %v2322
        %2469 = vmatpush.bf16.msra.mxu0 %v2312
        %2470 = vmatpush.bf16.msra.mxu0 %v2302
        %2471 = vmatpush.bf16.msra.mxu0 %v2292
        %2472 = vmatmul.bf16.gmra.mxu0 %v1946
        %v2473 = vpop.f32.mrf.mxu0
        %v2474 = vadd.f32 %v2032, %v2473
        %v2475 = vpop.f32.mrf.mxu0
        %2476 = vdwg.mxu0
        %2477 = vmatpush.bf16.msra.mxu0 %v2363
        %2478 = vmatpush.bf16.msra.mxu0 %v2353
        %2479 = vmatpush.bf16.msra.mxu0 %v2343
        %2480 = vmatpush.bf16.msra.mxu0 %v2333
        %2481 = vmatpush.bf16.msra.mxu0 %v2323
        %2482 = vmatpush.bf16.msra.mxu0 %v2313
        %2483 = vmatpush.bf16.msra.mxu0 %v2303
        %2484 = vmatpush.bf16.msra.mxu0 %v2293
        %2485 = vmatmul.bf16.gmra.mxu0 %v1946
        %v2486 = vpop.f32.mrf.mxu0
        %v2487 = vadd.f32 %v2033, %v2486
        %v2488 = vpop.f32.mrf.mxu0
        %2489 = vdwg.mxu0
        %2490 = vmatpush.bf16.msra.mxu0 %v2364
        %2491 = vmatpush.bf16.msra.mxu0 %v2354
        %2492 = vmatpush.bf16.msra.mxu0 %v2344
        %2493 = vmatpush.bf16.msra.mxu0 %v2334
        %2494 = vmatpush.bf16.msra.mxu0 %v2324
        %2495 = vmatpush.bf16.msra.mxu0 %v2314
        %2496 = vmatpush.bf16.msra.mxu0 %v2304
        %2497 = vmatpush.bf16.msra.mxu0 %v2294
        %2498 = vmatmul.bf16.gmra.mxu0 %v1946
        %v2499 = vpop.f32.mrf.mxu0
        %v2500 = vadd.f32 %v2034, %v2499
        %v2501 = vpop.f32.mrf.mxu0
        %2502 = vdwg.mxu0
        %2503 = vmatpush.bf16.msra.mxu0 %v2365
        %2504 = vmatpush.bf16.msra.mxu0 %v2355
        %2505 = vmatpush.bf16.msra.mxu0 %v2345
        %2506 = vmatpush.bf16.msra.mxu0 %v2335
        %2507 = vmatpush.bf16.msra.mxu0 %v2325
        %2508 = vmatpush.bf16.msra.mxu0 %v2315
        %2509 = vmatpush.bf16.msra.mxu0 %v2305
        %2510 = vmatpush.bf16.msra.mxu0 %v2295
        %2511 = vmatmul.bf16.gmra.mxu0 %v1946
        %v2512 = vpop.f32.mrf.mxu0
        %v2513 = vadd.f32 %v2035, %v2512
        %v2514 = vpop.f32.mrf.mxu0
        %2515 = vdwg.mxu0
        %2516 = vmatpush.bf16.msra.mxu0 %v2366
        %2517 = vmatpush.bf16.msra.mxu0 %v2356
        %2518 = vmatpush.bf16.msra.mxu0 %v2346
        %2519 = vmatpush.bf16.msra.mxu0 %v2336
        %2520 = vmatpush.bf16.msra.mxu0 %v2326
        %2521 = vmatpush.bf16.msra.mxu0 %v2316
        %2522 = vmatpush.bf16.msra.mxu0 %v2306
        %2523 = vmatpush.bf16.msra.mxu0 %v2296
        %2524 = vmatmul.bf16.gmra.mxu0 %v1946
        %v2525 = vpop.f32.mrf.mxu0
        %v2526 = vadd.f32 %v2036, %v2525
        %v2527 = vpop.f32.mrf.mxu0
        %2528 = vdwg.mxu0
        %2529 = vmatpush.bf16.msra.mxu0 %v2367
        %2530 = vmatpush.bf16.msra.mxu0 %v2357
        %2531 = vmatpush.bf16.msra.mxu0 %v2347
        %2532 = vmatpush.bf16.msra.mxu0 %v2337
        %2533 = vmatpush.bf16.msra.mxu0 %v2327
        %2534 = vmatpush.bf16.msra.mxu0 %v2317
        %2535 = vmatpush.bf16.msra.mxu0 %v2307
        %2536 = vmatpush.bf16.msra.mxu0 %v2297
        %2537 = vmatmul.bf16.gmra.mxu0 %v1946
        %v2538 = vpop.f32.mrf.mxu0
        %v2539 = vadd.f32 %v2037, %v2538
        %v2540 = vpop.f32.mrf.mxu0
        %2541 = vdwg.mxu0
        %2542 = vmatpush.bf16.msra.mxu0 %v2368
        %2543 = vmatpush.bf16.msra.mxu0 %v2358
        %2544 = vmatpush.bf16.msra.mxu0 %v2348
        %2545 = vmatpush.bf16.msra.mxu0 %v2338
        %2546 = vmatpush.bf16.msra.mxu0 %v2328
        %2547 = vmatpush.bf16.msra.mxu0 %v2318
        %2548 = vmatpush.bf16.msra.mxu0 %v2308
        %2549 = vmatpush.bf16.msra.mxu0 %v2298
        %2550 = vmatmul.bf16.gmra.mxu0 %v1946
        %v2551 = vpop.f32.mrf.mxu0
        %v2552 = vadd.f32 %v2038, %v2551
        %v2553 = vpop.f32.mrf.mxu0
        %2554 = vdwg.mxu0
        %2555 = vmatpush.bf16.msra.mxu0 %v2369
        %2556 = vmatpush.bf16.msra.mxu0 %v2359
        %2557 = vmatpush.bf16.msra.mxu0 %v2349
        %2558 = vmatpush.bf16.msra.mxu0 %v2339
        %2559 = vmatpush.bf16.msra.mxu0 %v2329
        %2560 = vmatpush.bf16.msra.mxu0 %v2319
        %2561 = vmatpush.bf16.msra.mxu0 %v2309
        %2562 = vmatpush.bf16.msra.mxu0 %v2299
        %2563 = vmatmul.bf16.gmra.mxu0 %v1946
        %v2564 = vpop.f32.mrf.mxu0
        %v2565 = vadd.f32 %v2039, %v2564
        %v2566 = vpop.f32.mrf.mxu0
        %2567 = vdwg.mxu0
        %2568 = vmatpush.bf16.msra.mxu0 %v2370
        %2569 = vmatpush.bf16.msra.mxu0 %v2360
        %2570 = vmatpush.bf16.msra.mxu0 %v2350
        %2571 = vmatpush.bf16.msra.mxu0 %v2340
        %2572 = vmatpush.bf16.msra.mxu0 %v2330
        %2573 = vmatpush.bf16.msra.mxu0 %v2320
        %2574 = vmatpush.bf16.msra.mxu0 %v2310
        %2575 = vmatpush.bf16.msra.mxu0 %v2300
        %2576 = vmatmul.bf16.gmra.mxu0 %v1946
        %v2577 = vpop.f32.mrf.mxu0
        %v2578 = vadd.f32 %v2040, %v2577
        %v2579 = vpop.f32.mrf.mxu0
        %2580 = vdwg.mxu0
        %2581 = vst [vmem:[%s921] sm:$0xff] %v2461
        %2582 = vst [vmem:[%s921 + $0x8] sm:$0xff] %v2474
        %2583 = vst [vmem:[%s921 + $0x10] sm:$0xff] %v2487
        %2584 = vst [vmem:[%s921 + $0x18] sm:$0xff] %v2500
        %2585 = vst [vmem:[%s921 + $0x20] sm:$0xff] %v2513
        %2586 = vst [vmem:[%s921 + $0x28] sm:$0xff] %v2526
        %2587 = vst [vmem:[%s921 + $0x30] sm:$0xff] %v2539
        %2588 = vst [vmem:[%s921 + $0x38] sm:$0xff] %v2552
        %2589 = vst [vmem:[%s921 + $0x40] sm:$0xff] %v2565
        %2590 = vst [vmem:[%s921 + $0x48] sm:$0xff] %v2578
        %v2591 = vld [vmem:[#allocation3] sm:$0xff]
        %v2592 = vmax.f32 %v2461, %v2513
        %v2593 = vmax.f32 %v2474, %v2526
        %v2594 = vmax.f32 %v2487, %v2539
        %v2595 = vmax.f32 %v2500, %v2552
        %v2596 = vmax.f32 %v2592, %v2565
        %v2597 = vmax.f32 %v2593, %v2578
        %v2598 = vmax.f32 %v2596, %v2597
        %v2599 = vmax.f32 %v2594, %v2595
        %v2600 = vmax.f32 %v2598, %v2599
        %2601 = vmax.xlane.f32.xlu0 %v2600
        %v2602 = vpop.xlane.xlu0 %2601
        %v2603 = vmax.f32 %v2591, %v2602
        %v2604 = vld [vmem:[#allocation4] sm:$0xff]
        %v2605 = vsub.f32 %v2591, %v2603
        %v2606 = vmul.f32 %v2605, 1.442695
        %v2607 = vpow.pop %v2606
        %v2608 = vmul.f32 %v2604, %v2607
        %2610 = vset.pattern.permute.xlu0 0
        %2611 = vperm.xlu0 %2610, %v2603
        %v2612 = vpop.permute.xlu0 %2611
        %v2614 = vsub.f32 %v2461, %v2612
        %v2615 = vsub.f32 %v2474, %v2612
        %v2616 = vsub.f32 %v2487, %v2612
        %v2617 = vsub.f32 %v2500, %v2612
        %v2618 = vsub.f32 %v2513, %v2612
        %v2619 = vsub.f32 %v2526, %v2612
        %v2620 = vsub.f32 %v2539, %v2612
        %v2621 = vsub.f32 %v2552, %v2612
        %v2622 = vsub.f32 %v2565, %v2612
        %v2623 = vsub.f32 %v2578, %v2612
        %v2624 = vmul.f32 %v2614, 1.442695
        %v2625 = vpow.pop %v2624
        %v2626 = vmul.f32 %v2615, 1.442695
        %v2627 = vpow.pop %v2626
        %v2628 = vmul.f32 %v2616, 1.442695
        %v2629 = vpow.pop %v2628
        %v2630 = vmul.f32 %v2617, 1.442695
        %v2631 = vpow.pop %v2630
        %v2632 = vmul.f32 %v2618, 1.442695
        %v2633 = vpow.pop %v2632
        %v2634 = vmul.f32 %v2619, 1.442695
        %v2635 = vpow.pop %v2634
        %v2636 = vmul.f32 %v2620, 1.442695
        %v2637 = vpow.pop %v2636
        %v2638 = vmul.f32 %v2621, 1.442695
        %v2639 = vpow.pop %v2638
        %v2640 = vmul.f32 %v2622, 1.442695
        %v2641 = vpow.pop %v2640
        %v2642 = vmul.f32 %v2623, 1.442695
        %v2643 = vpow.pop %v2642
        %v2644 = vadd.f32 %v2625, %v2627
        %v2645 = vadd.f32 %v2644, %v2629
        %v2646 = vadd.f32 %v2645, %v2631
        %v2647 = vadd.f32 %v2646, %v2633
        %v2648 = vadd.f32 %v2647, %v2635
        %v2649 = vadd.f32 %v2648, %v2637
        %v2650 = vadd.f32 %v2649, %v2639
        %v2651 = vadd.f32 %v2650, %v2641
        %v2652 = vadd.f32 %v2651, %v2643
        %2653 = vadd.xlane.f32.xlu0 %v2652
        %v2654 = vpop.xlane.xlu0 %2653
        %v2655 = vadd.f32 %v2608, %v2654
        %vm2656 = vcmask 7168
        %2657 = vst.msk [vmem:[#allocation4] sm:$0xff] %vm2656, %v2655
        %2658 = vst.msk [vmem:[#allocation3] sm:$0xff] %vm2656, %v2603
        %p2659 = scmp.eq.s32.totalorder %s45, 3
        // Predicated region
        $region169: #{tpu_custom_call.1} parent=91 // pred_check
          %p2660 = pneg %p2659
        $region170: #{tpu_custom_call.1} parent=91 // pred_check_branch
          %2662 = sbr.rel (%p2660) target = $region172
        $region171: #{tpu_custom_call.1} parent=91 // pred_region
          %v2663 = vld [vmem:[#allocation3] sm:$0xff]
          %v2664 = vld [vmem:[#allocation4] sm:$0xff]
          %v2665 = vlog2.pop %v2664
          %v2666 = vmul.f32 %v2665, 0.6931472
          %v2667 = vadd.f32 %v2663, %v2666
          %2668 = vst.msk [vmem:[%s19] sm:$0xff] %vm2656, %v2667
        $region172: #{tpu_custom_call.1} parent=91 // pred_fallthru
          _
        %s2669 = sand.u32 %s441, 1
        %s2670 = scalar_lea.sflag [#allocation7], %s2669
        %s2671 = sand.u32 %s441, 1
        %s2672 = smul.addr %s2671, 80
        %s2673 = scalar_lea.vmem [#allocation33], %s2672
        // Predicated region
        $region173: #{tpu_custom_call.1} parent=91 // pred_check
          %p2674 = pneg %p451
        $region174: #{tpu_custom_call.1} parent=91 // pred_check_branch
          %2676 = sbr.rel (%p2674) target = $region176
        $region175: #{tpu_custom_call.1} parent=91 // pred_region
          %s2677 = smul.u32 10, %s45
          %2679 = vsyncadd %s2670, 0
          %s2680 = smul.addr %s2677, 8
          %s2681 = scalar_lea.hbm %s18, %s2680
          %s2683 = sshll.u32 %s2673, 4
          %s2684 = int_to_ptr.vmem [resolvable:$true] %s2683
          %s2685 = sshll.u32 %s2681, 4
          %s2686 = int_to_ptr.hbm [resolvable:$true] %s2685
          %2688 = dma.vmem_to_hbm [thread:$0]  %s2684, 1280, %s2686, %s2670
        $region176: #{tpu_custom_call.1} parent=91 // pred_fallthru
          _
        // Predicated region
        $region177: #{tpu_custom_call.1} parent=91 // pred_check
          %p2689 = pneg %p472
        $region178: #{tpu_custom_call.1} parent=91 // pred_check_branch
          %2691 = sbr.rel (%p2689) target = $region180
        $region179: #{tpu_custom_call.1} parent=91 // pred_region
          _
        $region180: #{tpu_custom_call.1} parent=91 // pred_fallthru
          _
        // Predicated region
        $region181: #{tpu_custom_call.1} parent=91 // pred_check
          %p2692 = pneg %p493
        $region182: #{tpu_custom_call.1} parent=91 // pred_check_branch
          %2694 = sbr.rel (%p2692) target = $region184
        $region183: #{tpu_custom_call.1} parent=91 // pred_region
          %2696 = vsyncadd [#allocation35], 0
          %s2697 = sshll.u32 [#allocation34], 4
          %s2698 = int_to_ptr.vmem [resolvable:$true] %s2697
          %s2699 = sshll.u32 %s20, 4
          %s2700 = int_to_ptr.hbm [resolvable:$true] %s2699
          %2705 = dma.vmem_to_hbm [thread:$0]  %s2698, 256, %s2700, [#allocation35], 128, 128, 8
        $region184: #{tpu_custom_call.1} parent=91 // pred_fallthru
          _
        // Predicated region
        $region185: #{tpu_custom_call.1} parent=91 // pred_check
          %p2706 = pneg %p472
        $region186: #{tpu_custom_call.1} parent=91 // pred_check_branch
          %2708 = sbr.rel (%p2706) target = $region188
        $region187: #{tpu_custom_call.1} parent=91 // pred_region
          _
        $region188: #{tpu_custom_call.1} parent=91 // pred_fallthru
          _
        // Predicated region
        $region189: #{tpu_custom_call.1} parent=91 // pred_check
          %p2709 = pneg %p493
        $region190: #{tpu_custom_call.1} parent=91 // pred_check_branch
          %2711 = sbr.rel (%p2709) target = $region192
        $region191: #{tpu_custom_call.1} parent=91 // pred_region
          %2713 = dma.done [#allocation35], 256
        $region192: #{tpu_custom_call.1} parent=91 // pred_fallthru
          _
      $region92: #{tpu_custom_call.1} parent=5 // pred_fallthru
        _
      %p2714 = scmp.le.s32.totalorder 2, %s40
      // Predicated region
      $region193: #{tpu_custom_call.1} parent=5 // pred_check
        %p2715 = pneg %p2714
      $region194: #{tpu_custom_call.1} parent=5 // pred_check_branch
        %2717 = sbr.rel (%p2715) target = $region196
      $region195: #{tpu_custom_call.1} parent=5 // pred_region
        %s2718 = ssub.s32 %s40, 2
        // Predicated region
        $region197: #{tpu_custom_call.1} parent=195 // pred_check
          %p2719 = pneg %p457
        $region198: #{tpu_custom_call.1} parent=195 // pred_check_branch
          %2721 = sbr.rel (%p2719) target = $region200
        $region199: #{tpu_custom_call.1} parent=195 // pred_region
          %s2722 = sand.u32 %s442, 1
          %s2723 = scalar_lea.sflag [#allocation7], %s2722
          %s2724 = sand.u32 %s442, 1
          %s2725 = smul.addr %s2724, 80
          %s2726 = scalar_lea.vmem [#allocation33], %s2725
          %2728 = dma.done %s2723, 1280
        $region200: #{tpu_custom_call.1} parent=195 // pred_fallthru
          _
      $region196: #{tpu_custom_call.1} parent=5 // pred_fallthru
        _
    $region6: #{tpu_custom_call.1} parent=1 // loop_footer
      %s44 = sadd.s32 1, %s40
    $region7: #{tpu_custom_call.1} parent=1 // loop_footer_branch
      %39 = sbr.rel target = $region3
    $region8: #{tpu_custom_call.1} parent=1 // loop_exit
      _
    %2729 = vsyncpa [#allocation6], 1
    %s2730 = scalar_lea.sflag [#allocation6], 1
    %2731 = vsyncpa %s2730, 1
    %2732 = vsyncpa [#allocation9], 1
    %2733 = vsyncpa [#allocation12], 1
    %2734 = vsyncpa [#allocation15], 1
    %2735 = vsyncpa [#allocation18], 1
    %2736 = vsyncpa [#allocation21], 1
    %2737 = vsyncpa [#allocation24], 1
    %2738 = vsyncpa [#allocation27], 1
    %2739 = vsyncpa [#allocation30], 1
    %2740 = vsyncpa [#allocation7], 1
    %s2741 = scalar_lea.sflag [#allocation7], 1
    %2742 = vsyncpa %s2741, 1
    %2743 = vsyncpa [#allocation35], 1

</llo_original>
